<compile_context>
chip_gen: v7x
topology: tpu7x:2x2x1
jax: 0.10.0
libtpu: 0.0.40
codegen_flags: <defaults>
</compile_context>

<pallas_src>
import functools

import numpy as np
import jax
import jax.numpy as jnp
from jax.experimental import pallas as pl
from jax.experimental.pallas import tpu as pltpu


def _layer_norm(v, w, b, eps=1e-5):
    mu = jnp.mean(v, axis=-1, keepdims=True)
    var = jnp.mean((v - mu) ** 2, axis=-1, keepdims=True)
    return (v - mu) * jax.lax.rsqrt(var + eps) * w + b


def transformer_policy_kernel(
    x_ref, pe_ref, win_ref, bin_ref,
    wqkv_ref, bqkv_ref, wo_ref, bo_ref,
    ln1w_ref, ln1b_ref, w1_ref, b1_ref, w2_ref, b2_ref, ln2w_ref, ln2b_ref,
    wfc_ref, bfc_ref, lnfcw_ref, lnfcb_ref, wout_ref, bout_ref,
    out_ref, *, nhead: int,
):
    f32 = jnp.float32
    B, S, F = x_ref.shape
    D = win_ref.shape[1]
    hd = D // nhead
    scale = 1.0 / float(np.sqrt(hd))
    L = wqkv_ref.shape[0]
    BS = B * S

    x = x_ref[...].astype(f32).reshape(BS, F)          # (B*S, F) flat rows

    # --- input projection + positional encoding (dropout == identity) ---
    h = jnp.dot(x, win_ref[...], preferred_element_type=f32) + bin_ref[...]
    # Faithful to the module: pe[:x.size(0)] has shape (B, 1, D) for a
    # batch-first input, so PE is indexed by *batch* and broadcast over seq.
    pe_rows = jnp.broadcast_to(pe_ref[...], (B, S, D)).reshape(BS, D)  # hoisted once
    h = h + pe_rows                                     # residual stream stays (B*S, D)

    # --- post-LN transformer encoder layers ---
    for l in range(L):
        # hoist per-layer parameter reads (read each ref slice exactly once)
        wqkv_l, bqkv_l = wqkv_ref[l], bqkv_ref[l]
        wo_l, bo_l = wo_ref[l], bo_ref[l]
        ln1w_l, ln1b_l = ln1w_ref[l], ln1b_ref[l]
        w1_l, b1_l = w1_ref[l], b1_ref[l]
        w2_l, b2_l = w2_ref[l], b2_ref[l]
        ln2w_l, ln2b_l = ln2w_ref[l], ln2b_ref[l]

        # ---- multi-head self-attention: all heads batched into one einsum pair
        qkv = jnp.dot(h, wqkv_l, preferred_element_type=f32) + bqkv_l   # (BS, 3D)

        def split_heads(base):
            # (BS, D) slab at column `base` -> (nhead*B, S, hd), index order (head, b, s).
            # Built from last-dim static slices + leading-dim concat + leading
            # reshape only (reliably supported layout ops).
            return jnp.concatenate(
                [qkv[:, base + i * hd: base + (i + 1) * hd] for i in range(nhead)],
                axis=0,
            ).reshape(nhead * B, S, hd)

        qh = split_heads(0 * D)
        kh = split_heads(1 * D)
        vh = split_heads(2 * D)

        s = jnp.einsum('gqd,gkd->gqk', qh, kh,
                       preferred_element_type=f32) * scale              # (nhead*B, S, S)
        s = s - jnp.max(s, axis=-1, keepdims=True)
        p = jnp.exp(s)
        p = p * pl.reciprocal(jnp.sum(p, axis=-1, keepdims=True), approx=True)
        o = jnp.einsum('gqk,gkd->gqd', p, vh,
                       preferred_element_type=f32)                      # (nhead*B, S, hd)

        # merge heads back: (nhead*B, S, hd) -> (BS, D) with columns [h0|h1|...|h{n-1}]
        o2 = o.reshape(nhead * BS, hd)
        attn = jnp.concatenate(
            [o2[i * BS:(i + 1) * BS, :] for i in range(nhead)], axis=-1)  # (BS, D)

        attn = jnp.dot(attn, wo_l, preferred_element_type=f32) + bo_l
        h = _layer_norm(h + attn, ln1w_l, ln1b_l)

        # ---- feed-forward (relu)
        ff = jnp.dot(h, w1_l, preferred_element_type=f32) + b1_l
        ff = jnp.maximum(ff, 0.0)
        ff = jnp.dot(ff, w2_l, preferred_element_type=f32) + b2_l
        h = _layer_norm(h + ff, ln2w_l, ln2b_l)

    # --- mean pooling over the sequence (mask=None path) ---
    pooled = jnp.mean(h.reshape(B, S, D), axis=1)       # (B, D)

    # --- fc head: Linear -> LayerNorm -> (dropout) then relu, then output ---
    fc = jnp.dot(pooled, wfc_ref[...], preferred_element_type=f32) + bfc_ref[...]
    fc = _layer_norm(fc, lnfcw_ref[...], lnfcb_ref[...])
    fc = jnp.maximum(fc, 0.0)                           # self._get_activation() == relu
    out = jnp.dot(fc, wout_ref[...], preferred_element_type=f32) + bout_ref[...]
    out_ref[...] = out.astype(out_ref.dtype)


_PARAM_ORDER = [
    'pe', 'win', 'bin', 'wqkv', 'bqkv', 'wo', 'bo',
    'ln1w', 'ln1b', 'w1', 'b1', 'w2', 'b2', 'ln2w', 'ln2b',
    'wfc', 'bfc', 'lnfcw', 'lnfcb', 'wout', 'bout',
]


def init_params(key, *, input_dim, d_model, nhead, num_layers,
                dim_feedforward, fc_dim, output_dim, batch, max_len=5000):
    # NOTE: wqkv packs the in_proj weight transposed to (D, 3D) with q|k|v
    # contiguous in that order and heads contiguous inside each block -- this
    # must match any conversion from torch's nn.MultiheadAttention in_proj.
    assert d_model % nhead == 0
    keys = iter(jax.random.split(key, 32))

    def lin(fan_in, shape):
        bound = 1.0 / np.sqrt(fan_in)
        return jax.random.uniform(next(keys), shape, jnp.float32, -bound, bound)

    D, FF, L = d_model, dim_feedforward, num_layers
    p = {}
    p['win'] = lin(input_dim, (input_dim, D))
    p['bin'] = lin(input_dim, (1, D))
    p['wqkv'] = lin(D, (L, D, 3 * D))
    p['bqkv'] = lin(D, (L, 1, 3 * D))
    p['wo'] = lin(D, (L, D, D))
    p['bo'] = lin(D, (L, 1, D))
    p['ln1w'] = jnp.ones((L, 1, D), jnp.float32)
    p['ln1b'] = jnp.zeros((L, 1, D), jnp.float32)
    p['w1'] = lin(D, (L, D, FF))
    p['b1'] = lin(D, (L, 1, FF))
    p['w2'] = lin(FF, (L, FF, D))
    p['b2'] = lin(FF, (L, 1, D))
    p['ln2w'] = jnp.ones((L, 1, D), jnp.float32)
    p['ln2b'] = jnp.zeros((L, 1, D), jnp.float32)
    p['wfc'] = lin(D, (D, fc_dim))
    p['bfc'] = lin(D, (1, fc_dim))
    p['lnfcw'] = jnp.ones((1, fc_dim), jnp.float32)
    p['lnfcb'] = jnp.zeros((1, fc_dim), jnp.float32)
    p['wout'] = lin(fc_dim, (fc_dim, output_dim))
    p['bout'] = lin(fc_dim, (1, output_dim))

    # Positional-encoding buffer (sin/cos), sliced exactly like the module:
    # pe has shape (max_len, 1, D); the forward adds pe[:x.size(0)] = pe[:B].
    position = np.arange(max_len, dtype=np.float32)[:, None]
    div_term = np.exp(np.arange(0, D, 2, dtype=np.float32)
                      * (-np.log(10000.0) / D))
    pe = np.zeros((max_len, D), np.float32)
    pe[:, 0::2] = np.sin(position * div_term)
    pe[:, 1::2] = np.cos(position * div_term)
    p['pe'] = jnp.asarray(pe[:batch][:, None, :])      # (batch, 1, D)
    return p


def transformer_policy_forward(x, params, *, nhead):
    inputs = [x] + [params[k] for k in _PARAM_ORDER]
    B, S, input_dim = x.shape
    D = params['win'].shape[1]
    L, _, FF = params['w1'].shape
    fc_dim = params['wfc'].shape[1]
    out_dim = params['wout'].shape[1]
    BS, hd = B * S, D // nhead

    # Advisory cost estimate so XLA schedules surrounding ops sensibly.
    flops_per_layer = (2 * BS * D * 3 * D           # qkv projection
                       + 4 * B * nhead * S * S * hd  # scores + attn*V
                       + 2 * BS * D * D              # output projection
                       + 4 * BS * D * FF)            # FFN
    flops = (2 * BS * input_dim * D + L * flops_per_layer
             + 2 * B * D * fc_dim + 2 * B * fc_dim * out_dim)
    transcendentals = L * (B * nhead * S * S + B * nhead * S + 2 * BS) + B
    bytes_accessed = (sum(int(np.prod(a.shape)) * a.dtype.itemsize for a in inputs)
                      + B * out_dim * 4)

    kernel = functools.partial(transformer_policy_kernel, nhead=nhead)
    return pl.pallas_call(
        kernel,
        out_shape=jax.ShapeDtypeStruct((B, out_dim), jnp.float32),
        in_specs=[pl.BlockSpec(memory_space=pltpu.MemorySpace.VMEM)] * len(inputs),
        out_specs=pl.BlockSpec(memory_space=pltpu.MemorySpace.VMEM),
        cost_estimate=pl.CostEstimate(flops=flops,
                                      transcendentals=transcendentals,
                                      bytes_accessed=bytes_accessed),
    )(*inputs)


if __name__ == "__main__":
    # Small shapes consistent with the module's forward:
    # x: (batch, seq, input_dim)
    B, S = 2, 8
    input_dim, output_dim = 16, 4
    d_model, nhead, num_layers, dim_feedforward, fc_dim = 32, 4, 2, 64, 32

    key = jax.random.PRNGKey(0)
    kx, kp = jax.random.split(key)
    x = jax.random.normal(kx, (B, S, input_dim), dtype=jnp.float32)
    params = init_params(
        kp, input_dim=input_dim, d_model=d_model, nhead=nhead,
        num_layers=num_layers, dim_feedforward=dim_feedforward,
        fc_dim=fc_dim, output_dim=output_dim, batch=B)

    out = transformer_policy_forward(x, params, nhead=nhead)
    out = jax.block_until_ready(out)
    assert out.shape == (B, output_dim) and out.dtype == jnp.float32
    assert bool(jnp.all(jnp.isfinite(out)))
    print("KERNEL_OK")
</pallas_src>

<mosaic_0001>
module attributes {stable_mosaic.version = 11 : i64} {
  func.func @transformer_policy_kernel(%arg0: memref<2x8x16xf32, #tpu.memory_space<vmem>>, %arg1: memref<2x1x32xf32, #tpu.memory_space<vmem>>, %arg2: memref<16x32xf32, #tpu.memory_space<vmem>>, %arg3: memref<1x32xf32, #tpu.memory_space<vmem>>, %arg4: memref<2x32x96xf32, #tpu.memory_space<vmem>>, %arg5: memref<2x1x96xf32, #tpu.memory_space<vmem>>, %arg6: memref<2x32x32xf32, #tpu.memory_space<vmem>>, %arg7: memref<2x1x32xf32, #tpu.memory_space<vmem>>, %arg8: memref<2x1x32xf32, #tpu.memory_space<vmem>>, %arg9: memref<2x1x32xf32, #tpu.memory_space<vmem>>, %arg10: memref<2x32x64xf32, #tpu.memory_space<vmem>>, %arg11: memref<2x1x64xf32, #tpu.memory_space<vmem>>, %arg12: memref<2x64x32xf32, #tpu.memory_space<vmem>>, %arg13: memref<2x1x32xf32, #tpu.memory_space<vmem>>, %arg14: memref<2x1x32xf32, #tpu.memory_space<vmem>>, %arg15: memref<2x1x32xf32, #tpu.memory_space<vmem>>, %arg16: memref<32x32xf32, #tpu.memory_space<vmem>>, %arg17: memref<1x32xf32, #tpu.memory_space<vmem>>, %arg18: memref<1x32xf32, #tpu.memory_space<vmem>>, %arg19: memref<1x32xf32, #tpu.memory_space<vmem>>, %arg20: memref<32x4xf32, #tpu.memory_space<vmem>>, %arg21: memref<1x4xf32, #tpu.memory_space<vmem>>, %arg22: memref<2x4xf32, #tpu.memory_space<vmem>>) attributes {dimension_semantics = [], scalar_prefetch = 0 : i64, scratch_operands = 0 : i64, tpu.core_type = #tpu.core_type<tc>} {
    %c0 = arith.constant 0 : index
    %c0_0 = arith.constant 0 : index
    %c0_1 = arith.constant 0 : index
    %0 = vector.load %arg0[%c0, %c0_0, %c0_1] : memref<2x8x16xf32, #tpu.memory_space<vmem>>, vector<2x8x16xf32>
    %1 = vector.shape_cast %0 : vector<2x8x16xf32> to vector<16x16xf32>
    %c0_2 = arith.constant 0 : index
    %c0_3 = arith.constant 0 : index
    %2 = vector.load %arg2[%c0_2, %c0_3] : memref<16x32xf32, #tpu.memory_space<vmem>>, vector<16x32xf32>
    %cst = arith.constant dense<0.000000e+00> : vector<16x32xf32>
    %3 = tpu.matmul %1, %2, %cst {dimension_numbers = #tpu.dot_dimension_numbers<[1], [0], [0], [1], [0, 0, 1, 1], [], []>} : vector<16x16xf32>, vector<16x32xf32>, vector<16x32xf32> -> vector<16x32xf32>
    %c0_4 = arith.constant 0 : index
    %c0_5 = arith.constant 0 : index
    %4 = vector.load %arg3[%c0_4, %c0_5] : memref<1x32xf32, #tpu.memory_space<vmem>>, vector<1x32xf32>
    %5 = vector.broadcast %4 : vector<1x32xf32> to vector<16x32xf32>
    %6 = arith.addf %3, %5 : vector<16x32xf32>
    %c0_6 = arith.constant 0 : index
    %c0_7 = arith.constant 0 : index
    %c0_8 = arith.constant 0 : index
    %7 = vector.load %arg1[%c0_6, %c0_7, %c0_8] : memref<2x1x32xf32, #tpu.memory_space<vmem>>, vector<2x1x32xf32>
    %8 = vector.shape_cast %7 : vector<2x1x32xf32> to vector<2x1x32xf32>
    %9 = vector.broadcast %8 : vector<2x1x32xf32> to vector<2x8x32xf32>
    %10 = vector.shape_cast %9 : vector<2x8x32xf32> to vector<16x32xf32>
    %11 = arith.addf %6, %10 : vector<16x32xf32>
    %c0_9 = arith.constant 0 : index
    %c0_10 = arith.constant 0 : index
    %c0_11 = arith.constant 0 : index
    %12 = vector.load %arg4[%c0_9, %c0_10, %c0_11] : memref<2x32x96xf32, #tpu.memory_space<vmem>>, vector<1x32x96xf32>
    %13 = vector.shape_cast %12 : vector<1x32x96xf32> to vector<32x96xf32>
    %c0_12 = arith.constant 0 : index
    %c0_13 = arith.constant 0 : index
    %c0_14 = arith.constant 0 : index
    %14 = vector.load %arg5[%c0_12, %c0_13, %c0_14] : memref<2x1x96xf32, #tpu.memory_space<vmem>>, vector<1x1x96xf32>
    %15 = vector.shape_cast %14 : vector<1x1x96xf32> to vector<1x96xf32>
    %c0_15 = arith.constant 0 : index
    %c0_16 = arith.constant 0 : index
    %c0_17 = arith.constant 0 : index
    %16 = vector.load %arg6[%c0_15, %c0_16, %c0_17] : memref<2x32x32xf32, #tpu.memory_space<vmem>>, vector<1x32x32xf32>
    %17 = vector.shape_cast %16 : vector<1x32x32xf32> to vector<32x32xf32>
    %c0_18 = arith.constant 0 : index
    %c0_19 = arith.constant 0 : index
    %c0_20 = arith.constant 0 : index
    %18 = vector.load %arg7[%c0_18, %c0_19, %c0_20] : memref<2x1x32xf32, #tpu.memory_space<vmem>>, vector<1x1x32xf32>
    %19 = vector.shape_cast %18 : vector<1x1x32xf32> to vector<1x32xf32>
    %c0_21 = arith.constant 0 : index
    %c0_22 = arith.constant 0 : index
    %c0_23 = arith.constant 0 : index
    %20 = vector.load %arg8[%c0_21, %c0_22, %c0_23] : memref<2x1x32xf32, #tpu.memory_space<vmem>>, vector<1x1x32xf32>
    %21 = vector.shape_cast %20 : vector<1x1x32xf32> to vector<1x32xf32>
    %c0_24 = arith.constant 0 : index
    %c0_25 = arith.constant 0 : index
    %c0_26 = arith.constant 0 : index
    %22 = vector.load %arg9[%c0_24, %c0_25, %c0_26] : memref<2x1x32xf32, #tpu.memory_space<vmem>>, vector<1x1x32xf32>
    %23 = vector.shape_cast %22 : vector<1x1x32xf32> to vector<1x32xf32>
    %c0_27 = arith.constant 0 : index
    %c0_28 = arith.constant 0 : index
    %c0_29 = arith.constant 0 : index
    %24 = vector.load %arg10[%c0_27, %c0_28, %c0_29] : memref<2x32x64xf32, #tpu.memory_space<vmem>>, vector<1x32x64xf32>
    %25 = vector.shape_cast %24 : vector<1x32x64xf32> to vector<32x64xf32>
    %c0_30 = arith.constant 0 : index
    %c0_31 = arith.constant 0 : index
    %c0_32 = arith.constant 0 : index
    %26 = vector.load %arg11[%c0_30, %c0_31, %c0_32] : memref<2x1x64xf32, #tpu.memory_space<vmem>>, vector<1x1x64xf32>
    %27 = vector.shape_cast %26 : vector<1x1x64xf32> to vector<1x64xf32>
    %c0_33 = arith.constant 0 : index
    %c0_34 = arith.constant 0 : index
    %c0_35 = arith.constant 0 : index
    %28 = vector.load %arg12[%c0_33, %c0_34, %c0_35] : memref<2x64x32xf32, #tpu.memory_space<vmem>>, vector<1x64x32xf32>
    %29 = vector.shape_cast %28 : vector<1x64x32xf32> to vector<64x32xf32>
    %c0_36 = arith.constant 0 : index
    %c0_37 = arith.constant 0 : index
    %c0_38 = arith.constant 0 : index
    %30 = vector.load %arg13[%c0_36, %c0_37, %c0_38] : memref<2x1x32xf32, #tpu.memory_space<vmem>>, vector<1x1x32xf32>
    %31 = vector.shape_cast %30 : vector<1x1x32xf32> to vector<1x32xf32>
    %c0_39 = arith.constant 0 : index
    %c0_40 = arith.constant 0 : index
    %c0_41 = arith.constant 0 : index
    %32 = vector.load %arg14[%c0_39, %c0_40, %c0_41] : memref<2x1x32xf32, #tpu.memory_space<vmem>>, vector<1x1x32xf32>
    %33 = vector.shape_cast %32 : vector<1x1x32xf32> to vector<1x32xf32>
    %c0_42 = arith.constant 0 : index
    %c0_43 = arith.constant 0 : index
    %c0_44 = arith.constant 0 : index
    %34 = vector.load %arg15[%c0_42, %c0_43, %c0_44] : memref<2x1x32xf32, #tpu.memory_space<vmem>>, vector<1x1x32xf32>
    %35 = vector.shape_cast %34 : vector<1x1x32xf32> to vector<1x32xf32>
    %cst_45 = arith.constant dense<0.000000e+00> : vector<16x96xf32>
    %36 = tpu.matmul %11, %13, %cst_45 {dimension_numbers = #tpu.dot_dimension_numbers<[1], [0], [0], [1], [0, 0, 1, 1], [], []>} : vector<16x32xf32>, vector<32x96xf32>, vector<16x96xf32> -> vector<16x96xf32>
    %37 = vector.broadcast %15 : vector<1x96xf32> to vector<16x96xf32>
    %38 = arith.addf %36, %37 : vector<16x96xf32>
    %39 = vector.extract_strided_slice %38 {offsets = [0, 0], sizes = [16, 8], strides = [1, 1]} : vector<16x96xf32> to vector<16x8xf32>
    %40 = vector.extract_strided_slice %38 {offsets = [0, 8], sizes = [16, 8], strides = [1, 1]} : vector<16x96xf32> to vector<16x8xf32>
    %41 = vector.extract_strided_slice %38 {offsets = [0, 16], sizes = [16, 8], strides = [1, 1]} : vector<16x96xf32> to vector<16x8xf32>
    %42 = vector.extract_strided_slice %38 {offsets = [0, 24], sizes = [16, 8], strides = [1, 1]} : vector<16x96xf32> to vector<16x8xf32>
    %43 = tpu.concatenate %39, %40, %41, %42 in 0 : vector<16x8xf32>, vector<16x8xf32>, vector<16x8xf32>, vector<16x8xf32> -> vector<64x8xf32>
    %44 = vector.shape_cast %43 : vector<64x8xf32> to vector<8x8x8xf32>
    %45 = vector.extract_strided_slice %38 {offsets = [0, 32], sizes = [16, 8], strides = [1, 1]} : vector<16x96xf32> to vector<16x8xf32>
    %46 = vector.extract_strided_slice %38 {offsets = [0, 40], sizes = [16, 8], strides = [1, 1]} : vector<16x96xf32> to vector<16x8xf32>
    %47 = vector.extract_strided_slice %38 {offsets = [0, 48], sizes = [16, 8], strides = [1, 1]} : vector<16x96xf32> to vector<16x8xf32>
    %48 = vector.extract_strided_slice %38 {offsets = [0, 56], sizes = [16, 8], strides = [1, 1]} : vector<16x96xf32> to vector<16x8xf32>
    %49 = tpu.concatenate %45, %46, %47, %48 in 0 : vector<16x8xf32>, vector<16x8xf32>, vector<16x8xf32>, vector<16x8xf32> -> vector<64x8xf32>
    %50 = vector.shape_cast %49 : vector<64x8xf32> to vector<8x8x8xf32>
    %51 = vector.extract_strided_slice %38 {offsets = [0, 64], sizes = [16, 8], strides = [1, 1]} : vector<16x96xf32> to vector<16x8xf32>
    %52 = vector.extract_strided_slice %38 {offsets = [0, 72], sizes = [16, 8], strides = [1, 1]} : vector<16x96xf32> to vector<16x8xf32>
    %53 = vector.extract_strided_slice %38 {offsets = [0, 80], sizes = [16, 8], strides = [1, 1]} : vector<16x96xf32> to vector<16x8xf32>
    %54 = vector.extract_strided_slice %38 {offsets = [0, 88], sizes = [16, 8], strides = [1, 1]} : vector<16x96xf32> to vector<16x8xf32>
    %55 = tpu.concatenate %51, %52, %53, %54 in 0 : vector<16x8xf32>, vector<16x8xf32>, vector<16x8xf32>, vector<16x8xf32> -> vector<64x8xf32>
    %56 = vector.shape_cast %55 : vector<64x8xf32> to vector<8x8x8xf32>
    "tpu.trace_start"() <{level = 10 : i32, message = "gqd,gkd->gqk"}> : () -> ()
    %cst_46 = arith.constant dense<0.000000e+00> : vector<8x8x8xf32>
    %57 = tpu.matmul %44, %50, %cst_46 {dimension_numbers = #tpu.dot_dimension_numbers<[2], [2], [1], [1], [0, 0, 0, 1, 1, 1], [0], [0]>} : vector<8x8x8xf32>, vector<8x8x8xf32>, vector<8x8x8xf32> -> vector<8x8x8xf32>
    "tpu.trace_stop"() : () -> ()
    %cst_47 = arith.constant 0.353553385 : f32
    %58 = vector.broadcast %cst_47 : f32 to vector<8x8x8xf32>
    %59 = arith.mulf %57, %58 : vector<8x8x8xf32>
    %cst_48 = arith.constant dense<0xFF800000> : vector<8x8xf32>
    %60 = vector.multi_reduction <maximumf>, %59, %cst_48 [2] : vector<8x8x8xf32> to vector<8x8xf32>
    %61 = vector.shape_cast %60 : vector<8x8xf32> to vector<8x8x1xf32>
    %62 = vector.broadcast %61 : vector<8x8x1xf32> to vector<8x8x8xf32>
    %63 = arith.subf %59, %62 : vector<8x8x8xf32>
    %64 = math.exp %63 : vector<8x8x8xf32>
    %cst_49 = arith.constant dense<0.000000e+00> : vector<8x8xf32>
    %65 = vector.multi_reduction <add>, %64, %cst_49 [2] : vector<8x8x8xf32> to vector<8x8xf32>
    %66 = vector.shape_cast %65 : vector<8x8xf32> to vector<8x8x1xf32>
    %67 = tpu.reciprocal %66 {approx = true} : vector<8x8x1xf32> -> vector<8x8x1xf32>
    %68 = vector.broadcast %67 : vector<8x8x1xf32> to vector<8x8x8xf32>
    %69 = arith.mulf %64, %68 : vector<8x8x8xf32>
    "tpu.trace_start"() <{level = 10 : i32, message = "gqk,gkd->gqd"}> : () -> ()
    %cst_50 = arith.constant dense<0.000000e+00> : vector<8x8x8xf32>
    %70 = tpu.matmul %69, %56, %cst_50 {dimension_numbers = #tpu.dot_dimension_numbers<[2], [1], [1], [2], [0, 0, 0, 1, 1, 2], [0], [0]>} : vector<8x8x8xf32>, vector<8x8x8xf32>, vector<8x8x8xf32> -> vector<8x8x8xf32>
    "tpu.trace_stop"() : () -> ()
    %71 = vector.shape_cast %70 : vector<8x8x8xf32> to vector<64x8xf32>
    %72 = vector.extract_strided_slice %71 {offsets = [0, 0], sizes = [16, 8], strides = [1, 1]} : vector<64x8xf32> to vector<16x8xf32>
    %73 = vector.extract_strided_slice %71 {offsets = [16, 0], sizes = [16, 8], strides = [1, 1]} : vector<64x8xf32> to vector<16x8xf32>
    %74 = vector.extract_strided_slice %71 {offsets = [32, 0], sizes = [16, 8], strides = [1, 1]} : vector<64x8xf32> to vector<16x8xf32>
    %75 = vector.extract_strided_slice %71 {offsets = [48, 0], sizes = [16, 8], strides = [1, 1]} : vector<64x8xf32> to vector<16x8xf32>
    %76 = tpu.concatenate %72, %73, %74, %75 in 1 : vector<16x8xf32>, vector<16x8xf32>, vector<16x8xf32>, vector<16x8xf32> -> vector<16x32xf32>
    %cst_51 = arith.constant dense<0.000000e+00> : vector<16x32xf32>
    %77 = tpu.matmul %76, %17, %cst_51 {dimension_numbers = #tpu.dot_dimension_numbers<[1], [0], [0], [1], [0, 0, 1, 1], [], []>} : vector<16x32xf32>, vector<32x32xf32>, vector<16x32xf32> -> vector<16x32xf32>
    %78 = vector.broadcast %19 : vector<1x32xf32> to vector<16x32xf32>
    %79 = arith.addf %77, %78 : vector<16x32xf32>
    %80 = arith.addf %11, %79 : vector<16x32xf32>
    %cst_52 = arith.constant dense<0.000000e+00> : vector<16xf32>
    %81 = vector.multi_reduction <add>, %80, %cst_52 [1] : vector<16x32xf32> to vector<16xf32>
    %82 = vector.shape_cast %81 : vector<16xf32> to vector<16x1xf32>
    %cst_53 = arith.constant 3.200000e+01 : f32
    %83 = vector.broadcast %cst_53 : f32 to vector<16x1xf32>
    %84 = arith.divf %82, %83 : vector<16x1xf32>
    %85 = vector.broadcast %84 : vector<16x1xf32> to vector<16x32xf32>
    %86 = arith.subf %80, %85 : vector<16x32xf32>
    %87 = arith.mulf %86, %86 : vector<16x32xf32>
    %cst_54 = arith.constant dense<0.000000e+00> : vector<16xf32>
    %88 = vector.multi_reduction <add>, %87, %cst_54 [1] : vector<16x32xf32> to vector<16xf32>
    %89 = vector.shape_cast %88 : vector<16xf32> to vector<16x1xf32>
    %cst_55 = arith.constant 3.200000e+01 : f32
    %90 = vector.broadcast %cst_55 : f32 to vector<16x1xf32>
    %91 = arith.divf %89, %90 : vector<16x1xf32>
    %92 = vector.broadcast %84 : vector<16x1xf32> to vector<16x32xf32>
    %93 = arith.subf %80, %92 : vector<16x32xf32>
    %cst_56 = arith.constant 9.99999974E-6 : f32
    %94 = vector.broadcast %cst_56 : f32 to vector<16x1xf32>
    %95 = arith.addf %91, %94 : vector<16x1xf32>
    %96 = math.rsqrt %95 : vector<16x1xf32>
    %97 = vector.broadcast %96 : vector<16x1xf32> to vector<16x32xf32>
    %98 = arith.mulf %93, %97 : vector<16x32xf32>
    %99 = vector.broadcast %21 : vector<1x32xf32> to vector<16x32xf32>
    %100 = arith.mulf %98, %99 : vector<16x32xf32>
    %101 = vector.broadcast %23 : vector<1x32xf32> to vector<16x32xf32>
    %102 = arith.addf %100, %101 : vector<16x32xf32>
    %cst_57 = arith.constant dense<0.000000e+00> : vector<16x64xf32>
    %103 = tpu.matmul %102, %25, %cst_57 {dimension_numbers = #tpu.dot_dimension_numbers<[1], [0], [0], [1], [0, 0, 1, 1], [], []>} : vector<16x32xf32>, vector<32x64xf32>, vector<16x64xf32> -> vector<16x64xf32>
    %104 = vector.broadcast %27 : vector<1x64xf32> to vector<16x64xf32>
    %105 = arith.addf %103, %104 : vector<16x64xf32>
    %cst_58 = arith.constant 0.000000e+00 : f32
    %106 = vector.broadcast %cst_58 : f32 to vector<16x64xf32>
    %107 = arith.maximumf %105, %106 : vector<16x64xf32>
    %cst_59 = arith.constant dense<0.000000e+00> : vector<16x32xf32>
    %108 = tpu.matmul %107, %29, %cst_59 {dimension_numbers = #tpu.dot_dimension_numbers<[1], [0], [0], [1], [0, 0, 1, 1], [], []>} : vector<16x64xf32>, vector<64x32xf32>, vector<16x32xf32> -> vector<16x32xf32>
    %109 = vector.broadcast %31 : vector<1x32xf32> to vector<16x32xf32>
    %110 = arith.addf %108, %109 : vector<16x32xf32>
    %111 = arith.addf %102, %110 : vector<16x32xf32>
    %cst_60 = arith.constant dense<0.000000e+00> : vector<16xf32>
    %112 = vector.multi_reduction <add>, %111, %cst_60 [1] : vector<16x32xf32> to vector<16xf32>
    %113 = vector.shape_cast %112 : vector<16xf32> to vector<16x1xf32>
    %cst_61 = arith.constant 3.200000e+01 : f32
    %114 = vector.broadcast %cst_61 : f32 to vector<16x1xf32>
    %115 = arith.divf %113, %114 : vector<16x1xf32>
    %116 = vector.broadcast %115 : vector<16x1xf32> to vector<16x32xf32>
    %117 = arith.subf %111, %116 : vector<16x32xf32>
    %118 = arith.mulf %117, %117 : vector<16x32xf32>
    %cst_62 = arith.constant dense<0.000000e+00> : vector<16xf32>
    %119 = vector.multi_reduction <add>, %118, %cst_62 [1] : vector<16x32xf32> to vector<16xf32>
    %120 = vector.shape_cast %119 : vector<16xf32> to vector<16x1xf32>
    %cst_63 = arith.constant 3.200000e+01 : f32
    %121 = vector.broadcast %cst_63 : f32 to vector<16x1xf32>
    %122 = arith.divf %120, %121 : vector<16x1xf32>
    %123 = vector.broadcast %115 : vector<16x1xf32> to vector<16x32xf32>
    %124 = arith.subf %111, %123 : vector<16x32xf32>
    %cst_64 = arith.constant 9.99999974E-6 : f32
    %125 = vector.broadcast %cst_64 : f32 to vector<16x1xf32>
    %126 = arith.addf %122, %125 : vector<16x1xf32>
    %127 = math.rsqrt %126 : vector<16x1xf32>
    %128 = vector.broadcast %127 : vector<16x1xf32> to vector<16x32xf32>
    %129 = arith.mulf %124, %128 : vector<16x32xf32>
    %130 = vector.broadcast %33 : vector<1x32xf32> to vector<16x32xf32>
    %131 = arith.mulf %129, %130 : vector<16x32xf32>
    %132 = vector.broadcast %35 : vector<1x32xf32> to vector<16x32xf32>
    %133 = arith.addf %131, %132 : vector<16x32xf32>
    %c1 = arith.constant 1 : index
    %c0_65 = arith.constant 0 : index
    %c0_66 = arith.constant 0 : index
    %134 = vector.load %arg4[%c1, %c0_65, %c0_66] : memref<2x32x96xf32, #tpu.memory_space<vmem>>, vector<1x32x96xf32>
    %135 = vector.shape_cast %134 : vector<1x32x96xf32> to vector<32x96xf32>
    %c1_67 = arith.constant 1 : index
    %c0_68 = arith.constant 0 : index
    %c0_69 = arith.constant 0 : index
    %136 = vector.load %arg5[%c1_67, %c0_68, %c0_69] : memref<2x1x96xf32, #tpu.memory_space<vmem>>, vector<1x1x96xf32>
    %137 = vector.shape_cast %136 : vector<1x1x96xf32> to vector<1x96xf32>
    %c1_70 = arith.constant 1 : index
    %c0_71 = arith.constant 0 : index
    %c0_72 = arith.constant 0 : index
    %138 = vector.load %arg6[%c1_70, %c0_71, %c0_72] : memref<2x32x32xf32, #tpu.memory_space<vmem>>, vector<1x32x32xf32>
    %139 = vector.shape_cast %138 : vector<1x32x32xf32> to vector<32x32xf32>
    %c1_73 = arith.constant 1 : index
    %c0_74 = arith.constant 0 : index
    %c0_75 = arith.constant 0 : index
    %140 = vector.load %arg7[%c1_73, %c0_74, %c0_75] : memref<2x1x32xf32, #tpu.memory_space<vmem>>, vector<1x1x32xf32>
    %141 = vector.shape_cast %140 : vector<1x1x32xf32> to vector<1x32xf32>
    %c1_76 = arith.constant 1 : index
    %c0_77 = arith.constant 0 : index
    %c0_78 = arith.constant 0 : index
    %142 = vector.load %arg8[%c1_76, %c0_77, %c0_78] : memref<2x1x32xf32, #tpu.memory_space<vmem>>, vector<1x1x32xf32>
    %143 = vector.shape_cast %142 : vector<1x1x32xf32> to vector<1x32xf32>
    %c1_79 = arith.constant 1 : index
    %c0_80 = arith.constant 0 : index
    %c0_81 = arith.constant 0 : index
    %144 = vector.load %arg9[%c1_79, %c0_80, %c0_81] : memref<2x1x32xf32, #tpu.memory_space<vmem>>, vector<1x1x32xf32>
    %145 = vector.shape_cast %144 : vector<1x1x32xf32> to vector<1x32xf32>
    %c1_82 = arith.constant 1 : index
    %c0_83 = arith.constant 0 : index
    %c0_84 = arith.constant 0 : index
    %146 = vector.load %arg10[%c1_82, %c0_83, %c0_84] : memref<2x32x64xf32, #tpu.memory_space<vmem>>, vector<1x32x64xf32>
    %147 = vector.shape_cast %146 : vector<1x32x64xf32> to vector<32x64xf32>
    %c1_85 = arith.constant 1 : index
    %c0_86 = arith.constant 0 : index
    %c0_87 = arith.constant 0 : index
    %148 = vector.load %arg11[%c1_85, %c0_86, %c0_87] : memref<2x1x64xf32, #tpu.memory_space<vmem>>, vector<1x1x64xf32>
    %149 = vector.shape_cast %148 : vector<1x1x64xf32> to vector<1x64xf32>
    %c1_88 = arith.constant 1 : index
    %c0_89 = arith.constant 0 : index
    %c0_90 = arith.constant 0 : index
    %150 = vector.load %arg12[%c1_88, %c0_89, %c0_90] : memref<2x64x32xf32, #tpu.memory_space<vmem>>, vector<1x64x32xf32>
    %151 = vector.shape_cast %150 : vector<1x64x32xf32> to vector<64x32xf32>
    %c1_91 = arith.constant 1 : index
    %c0_92 = arith.constant 0 : index
    %c0_93 = arith.constant 0 : index
    %152 = vector.load %arg13[%c1_91, %c0_92, %c0_93] : memref<2x1x32xf32, #tpu.memory_space<vmem>>, vector<1x1x32xf32>
    %153 = vector.shape_cast %152 : vector<1x1x32xf32> to vector<1x32xf32>
    %c1_94 = arith.constant 1 : index
    %c0_95 = arith.constant 0 : index
    %c0_96 = arith.constant 0 : index
    %154 = vector.load %arg14[%c1_94, %c0_95, %c0_96] : memref<2x1x32xf32, #tpu.memory_space<vmem>>, vector<1x1x32xf32>
    %155 = vector.shape_cast %154 : vector<1x1x32xf32> to vector<1x32xf32>
    %c1_97 = arith.constant 1 : index
    %c0_98 = arith.constant 0 : index
    %c0_99 = arith.constant 0 : index
    %156 = vector.load %arg15[%c1_97, %c0_98, %c0_99] : memref<2x1x32xf32, #tpu.memory_space<vmem>>, vector<1x1x32xf32>
    %157 = vector.shape_cast %156 : vector<1x1x32xf32> to vector<1x32xf32>
    %cst_100 = arith.constant dense<0.000000e+00> : vector<16x96xf32>
    %158 = tpu.matmul %133, %135, %cst_100 {dimension_numbers = #tpu.dot_dimension_numbers<[1], [0], [0], [1], [0, 0, 1, 1], [], []>} : vector<16x32xf32>, vector<32x96xf32>, vector<16x96xf32> -> vector<16x96xf32>
    %159 = vector.broadcast %137 : vector<1x96xf32> to vector<16x96xf32>
    %160 = arith.addf %158, %159 : vector<16x96xf32>
    %161 = vector.extract_strided_slice %160 {offsets = [0, 0], sizes = [16, 8], strides = [1, 1]} : vector<16x96xf32> to vector<16x8xf32>
    %162 = vector.extract_strided_slice %160 {offsets = [0, 8], sizes = [16, 8], strides = [1, 1]} : vector<16x96xf32> to vector<16x8xf32>
    %163 = vector.extract_strided_slice %160 {offsets = [0, 16], sizes = [16, 8], strides = [1, 1]} : vector<16x96xf32> to vector<16x8xf32>
    %164 = vector.extract_strided_slice %160 {offsets = [0, 24], sizes = [16, 8], strides = [1, 1]} : vector<16x96xf32> to vector<16x8xf32>
    %165 = tpu.concatenate %161, %162, %163, %164 in 0 : vector<16x8xf32>, vector<16x8xf32>, vector<16x8xf32>, vector<16x8xf32> -> vector<64x8xf32>
    %166 = vector.shape_cast %165 : vector<64x8xf32> to vector<8x8x8xf32>
    %167 = vector.extract_strided_slice %160 {offsets = [0, 32], sizes = [16, 8], strides = [1, 1]} : vector<16x96xf32> to vector<16x8xf32>
    %168 = vector.extract_strided_slice %160 {offsets = [0, 40], sizes = [16, 8], strides = [1, 1]} : vector<16x96xf32> to vector<16x8xf32>
    %169 = vector.extract_strided_slice %160 {offsets = [0, 48], sizes = [16, 8], strides = [1, 1]} : vector<16x96xf32> to vector<16x8xf32>
    %170 = vector.extract_strided_slice %160 {offsets = [0, 56], sizes = [16, 8], strides = [1, 1]} : vector<16x96xf32> to vector<16x8xf32>
    %171 = tpu.concatenate %167, %168, %169, %170 in 0 : vector<16x8xf32>, vector<16x8xf32>, vector<16x8xf32>, vector<16x8xf32> -> vector<64x8xf32>
    %172 = vector.shape_cast %171 : vector<64x8xf32> to vector<8x8x8xf32>
    %173 = vector.extract_strided_slice %160 {offsets = [0, 64], sizes = [16, 8], strides = [1, 1]} : vector<16x96xf32> to vector<16x8xf32>
    %174 = vector.extract_strided_slice %160 {offsets = [0, 72], sizes = [16, 8], strides = [1, 1]} : vector<16x96xf32> to vector<16x8xf32>
    %175 = vector.extract_strided_slice %160 {offsets = [0, 80], sizes = [16, 8], strides = [1, 1]} : vector<16x96xf32> to vector<16x8xf32>
    %176 = vector.extract_strided_slice %160 {offsets = [0, 88], sizes = [16, 8], strides = [1, 1]} : vector<16x96xf32> to vector<16x8xf32>
    %177 = tpu.concatenate %173, %174, %175, %176 in 0 : vector<16x8xf32>, vector<16x8xf32>, vector<16x8xf32>, vector<16x8xf32> -> vector<64x8xf32>
    %178 = vector.shape_cast %177 : vector<64x8xf32> to vector<8x8x8xf32>
    "tpu.trace_start"() <{level = 10 : i32, message = "gqd,gkd->gqk"}> : () -> ()
    %cst_101 = arith.constant dense<0.000000e+00> : vector<8x8x8xf32>
    %179 = tpu.matmul %166, %172, %cst_101 {dimension_numbers = #tpu.dot_dimension_numbers<[2], [2], [1], [1], [0, 0, 0, 1, 1, 1], [0], [0]>} : vector<8x8x8xf32>, vector<8x8x8xf32>, vector<8x8x8xf32> -> vector<8x8x8xf32>
    "tpu.trace_stop"() : () -> ()
    %cst_102 = arith.constant 0.353553385 : f32
    %180 = vector.broadcast %cst_102 : f32 to vector<8x8x8xf32>
    %181 = arith.mulf %179, %180 : vector<8x8x8xf32>
    %cst_103 = arith.constant dense<0xFF800000> : vector<8x8xf32>
    %182 = vector.multi_reduction <maximumf>, %181, %cst_103 [2] : vector<8x8x8xf32> to vector<8x8xf32>
    %183 = vector.shape_cast %182 : vector<8x8xf32> to vector<8x8x1xf32>
    %184 = vector.broadcast %183 : vector<8x8x1xf32> to vector<8x8x8xf32>
    %185 = arith.subf %181, %184 : vector<8x8x8xf32>
    %186 = math.exp %185 : vector<8x8x8xf32>
    %cst_104 = arith.constant dense<0.000000e+00> : vector<8x8xf32>
    %187 = vector.multi_reduction <add>, %186, %cst_104 [2] : vector<8x8x8xf32> to vector<8x8xf32>
    %188 = vector.shape_cast %187 : vector<8x8xf32> to vector<8x8x1xf32>
    %189 = tpu.reciprocal %188 {approx = true} : vector<8x8x1xf32> -> vector<8x8x1xf32>
    %190 = vector.broadcast %189 : vector<8x8x1xf32> to vector<8x8x8xf32>
    %191 = arith.mulf %186, %190 : vector<8x8x8xf32>
    "tpu.trace_start"() <{level = 10 : i32, message = "gqk,gkd->gqd"}> : () -> ()
    %cst_105 = arith.constant dense<0.000000e+00> : vector<8x8x8xf32>
    %192 = tpu.matmul %191, %178, %cst_105 {dimension_numbers = #tpu.dot_dimension_numbers<[2], [1], [1], [2], [0, 0, 0, 1, 1, 2], [0], [0]>} : vector<8x8x8xf32>, vector<8x8x8xf32>, vector<8x8x8xf32> -> vector<8x8x8xf32>
    "tpu.trace_stop"() : () -> ()
    %193 = vector.shape_cast %192 : vector<8x8x8xf32> to vector<64x8xf32>
    %194 = vector.extract_strided_slice %193 {offsets = [0, 0], sizes = [16, 8], strides = [1, 1]} : vector<64x8xf32> to vector<16x8xf32>
    %195 = vector.extract_strided_slice %193 {offsets = [16, 0], sizes = [16, 8], strides = [1, 1]} : vector<64x8xf32> to vector<16x8xf32>
    %196 = vector.extract_strided_slice %193 {offsets = [32, 0], sizes = [16, 8], strides = [1, 1]} : vector<64x8xf32> to vector<16x8xf32>
    %197 = vector.extract_strided_slice %193 {offsets = [48, 0], sizes = [16, 8], strides = [1, 1]} : vector<64x8xf32> to vector<16x8xf32>
    %198 = tpu.concatenate %194, %195, %196, %197 in 1 : vector<16x8xf32>, vector<16x8xf32>, vector<16x8xf32>, vector<16x8xf32> -> vector<16x32xf32>
    %cst_106 = arith.constant dense<0.000000e+00> : vector<16x32xf32>
    %199 = tpu.matmul %198, %139, %cst_106 {dimension_numbers = #tpu.dot_dimension_numbers<[1], [0], [0], [1], [0, 0, 1, 1], [], []>} : vector<16x32xf32>, vector<32x32xf32>, vector<16x32xf32> -> vector<16x32xf32>
    %200 = vector.broadcast %141 : vector<1x32xf32> to vector<16x32xf32>
    %201 = arith.addf %199, %200 : vector<16x32xf32>
    %202 = arith.addf %133, %201 : vector<16x32xf32>
    %cst_107 = arith.constant dense<0.000000e+00> : vector<16xf32>
    %203 = vector.multi_reduction <add>, %202, %cst_107 [1] : vector<16x32xf32> to vector<16xf32>
    %204 = vector.shape_cast %203 : vector<16xf32> to vector<16x1xf32>
    %cst_108 = arith.constant 3.200000e+01 : f32
    %205 = vector.broadcast %cst_108 : f32 to vector<16x1xf32>
    %206 = arith.divf %204, %205 : vector<16x1xf32>
    %207 = vector.broadcast %206 : vector<16x1xf32> to vector<16x32xf32>
    %208 = arith.subf %202, %207 : vector<16x32xf32>
    %209 = arith.mulf %208, %208 : vector<16x32xf32>
    %cst_109 = arith.constant dense<0.000000e+00> : vector<16xf32>
    %210 = vector.multi_reduction <add>, %209, %cst_109 [1] : vector<16x32xf32> to vector<16xf32>
    %211 = vector.shape_cast %210 : vector<16xf32> to vector<16x1xf32>
    %cst_110 = arith.constant 3.200000e+01 : f32
    %212 = vector.broadcast %cst_110 : f32 to vector<16x1xf32>
    %213 = arith.divf %211, %212 : vector<16x1xf32>
    %214 = vector.broadcast %206 : vector<16x1xf32> to vector<16x32xf32>
    %215 = arith.subf %202, %214 : vector<16x32xf32>
    %cst_111 = arith.constant 9.99999974E-6 : f32
    %216 = vector.broadcast %cst_111 : f32 to vector<16x1xf32>
    %217 = arith.addf %213, %216 : vector<16x1xf32>
    %218 = math.rsqrt %217 : vector<16x1xf32>
    %219 = vector.broadcast %218 : vector<16x1xf32> to vector<16x32xf32>
    %220 = arith.mulf %215, %219 : vector<16x32xf32>
    %221 = vector.broadcast %143 : vector<1x32xf32> to vector<16x32xf32>
    %222 = arith.mulf %220, %221 : vector<16x32xf32>
    %223 = vector.broadcast %145 : vector<1x32xf32> to vector<16x32xf32>
    %224 = arith.addf %222, %223 : vector<16x32xf32>
    %cst_112 = arith.constant dense<0.000000e+00> : vector<16x64xf32>
    %225 = tpu.matmul %224, %147, %cst_112 {dimension_numbers = #tpu.dot_dimension_numbers<[1], [0], [0], [1], [0, 0, 1, 1], [], []>} : vector<16x32xf32>, vector<32x64xf32>, vector<16x64xf32> -> vector<16x64xf32>
    %226 = vector.broadcast %149 : vector<1x64xf32> to vector<16x64xf32>
    %227 = arith.addf %225, %226 : vector<16x64xf32>
    %cst_113 = arith.constant 0.000000e+00 : f32
    %228 = vector.broadcast %cst_113 : f32 to vector<16x64xf32>
    %229 = arith.maximumf %227, %228 : vector<16x64xf32>
    %cst_114 = arith.constant dense<0.000000e+00> : vector<16x32xf32>
    %230 = tpu.matmul %229, %151, %cst_114 {dimension_numbers = #tpu.dot_dimension_numbers<[1], [0], [0], [1], [0, 0, 1, 1], [], []>} : vector<16x64xf32>, vector<64x32xf32>, vector<16x32xf32> -> vector<16x32xf32>
    %231 = vector.broadcast %153 : vector<1x32xf32> to vector<16x32xf32>
    %232 = arith.addf %230, %231 : vector<16x32xf32>
    %233 = arith.addf %224, %232 : vector<16x32xf32>
    %cst_115 = arith.constant dense<0.000000e+00> : vector<16xf32>
    %234 = vector.multi_reduction <add>, %233, %cst_115 [1] : vector<16x32xf32> to vector<16xf32>
    %235 = vector.shape_cast %234 : vector<16xf32> to vector<16x1xf32>
    %cst_116 = arith.constant 3.200000e+01 : f32
    %236 = vector.broadcast %cst_116 : f32 to vector<16x1xf32>
    %237 = arith.divf %235, %236 : vector<16x1xf32>
    %238 = vector.broadcast %237 : vector<16x1xf32> to vector<16x32xf32>
    %239 = arith.subf %233, %238 : vector<16x32xf32>
    %240 = arith.mulf %239, %239 : vector<16x32xf32>
    %cst_117 = arith.constant dense<0.000000e+00> : vector<16xf32>
    %241 = vector.multi_reduction <add>, %240, %cst_117 [1] : vector<16x32xf32> to vector<16xf32>
    %242 = vector.shape_cast %241 : vector<16xf32> to vector<16x1xf32>
    %cst_118 = arith.constant 3.200000e+01 : f32
    %243 = vector.broadcast %cst_118 : f32 to vector<16x1xf32>
    %244 = arith.divf %242, %243 : vector<16x1xf32>
    %245 = vector.broadcast %237 : vector<16x1xf32> to vector<16x32xf32>
    %246 = arith.subf %233, %245 : vector<16x32xf32>
    %cst_119 = arith.constant 9.99999974E-6 : f32
    %247 = vector.broadcast %cst_119 : f32 to vector<16x1xf32>
    %248 = arith.addf %244, %247 : vector<16x1xf32>
    %249 = math.rsqrt %248 : vector<16x1xf32>
    %250 = vector.broadcast %249 : vector<16x1xf32> to vector<16x32xf32>
    %251 = arith.mulf %246, %250 : vector<16x32xf32>
    %252 = vector.broadcast %155 : vector<1x32xf32> to vector<16x32xf32>
    %253 = arith.mulf %251, %252 : vector<16x32xf32>
    %254 = vector.broadcast %157 : vector<1x32xf32> to vector<16x32xf32>
    %255 = arith.addf %253, %254 : vector<16x32xf32>
    %256 = vector.shape_cast %255 : vector<16x32xf32> to vector<2x8x32xf32>
    %cst_120 = arith.constant dense<0.000000e+00> : vector<2x32xf32>
    %257 = vector.multi_reduction <add>, %256, %cst_120 [1] : vector<2x8x32xf32> to vector<2x32xf32>
    %cst_121 = arith.constant 8.000000e+00 : f32
    %258 = vector.broadcast %cst_121 : f32 to vector<2x32xf32>
    %259 = arith.divf %257, %258 : vector<2x32xf32>
    %c0_122 = arith.constant 0 : index
    %c0_123 = arith.constant 0 : index
    %260 = vector.load %arg16[%c0_122, %c0_123] : memref<32x32xf32, #tpu.memory_space<vmem>>, vector<32x32xf32>
    %cst_124 = arith.constant dense<0.000000e+00> : vector<2x32xf32>
    %261 = tpu.matmul %259, %260, %cst_124 {dimension_numbers = #tpu.dot_dimension_numbers<[1], [0], [0], [1], [0, 0, 1, 1], [], []>} : vector<2x32xf32>, vector<32x32xf32>, vector<2x32xf32> -> vector<2x32xf32>
    %c0_125 = arith.constant 0 : index
    %c0_126 = arith.constant 0 : index
    %262 = vector.load %arg17[%c0_125, %c0_126] : memref<1x32xf32, #tpu.memory_space<vmem>>, vector<1x32xf32>
    %263 = vector.broadcast %262 : vector<1x32xf32> to vector<2x32xf32>
    %264 = arith.addf %261, %263 : vector<2x32xf32>
    %c0_127 = arith.constant 0 : index
    %c0_128 = arith.constant 0 : index
    %265 = vector.load %arg18[%c0_127, %c0_128] : memref<1x32xf32, #tpu.memory_space<vmem>>, vector<1x32xf32>
    %c0_129 = arith.constant 0 : index
    %c0_130 = arith.constant 0 : index
    %266 = vector.load %arg19[%c0_129, %c0_130] : memref<1x32xf32, #tpu.memory_space<vmem>>, vector<1x32xf32>
    %cst_131 = arith.constant dense<0.000000e+00> : vector<2xf32>
    %267 = vector.multi_reduction <add>, %264, %cst_131 [1] : vector<2x32xf32> to vector<2xf32>
    %268 = vector.shape_cast %267 : vector<2xf32> to vector<2x1xf32>
    %cst_132 = arith.constant 3.200000e+01 : f32
    %269 = vector.broadcast %cst_132 : f32 to vector<2x1xf32>
    %270 = arith.divf %268, %269 : vector<2x1xf32>
    %271 = vector.broadcast %270 : vector<2x1xf32> to vector<2x32xf32>
    %272 = arith.subf %264, %271 : vector<2x32xf32>
    %273 = arith.mulf %272, %272 : vector<2x32xf32>
    %cst_133 = arith.constant dense<0.000000e+00> : vector<2xf32>
    %274 = vector.multi_reduction <add>, %273, %cst_133 [1] : vector<2x32xf32> to vector<2xf32>
    %275 = vector.shape_cast %274 : vector<2xf32> to vector<2x1xf32>
    %cst_134 = arith.constant 3.200000e+01 : f32
    %276 = vector.broadcast %cst_134 : f32 to vector<2x1xf32>
    %277 = arith.divf %275, %276 : vector<2x1xf32>
    %278 = vector.broadcast %270 : vector<2x1xf32> to vector<2x32xf32>
    %279 = arith.subf %264, %278 : vector<2x32xf32>
    %cst_135 = arith.constant 9.99999974E-6 : f32
    %280 = vector.broadcast %cst_135 : f32 to vector<2x1xf32>
    %281 = arith.addf %277, %280 : vector<2x1xf32>
    %282 = math.rsqrt %281 : vector<2x1xf32>
    %283 = vector.broadcast %282 : vector<2x1xf32> to vector<2x32xf32>
    %284 = arith.mulf %279, %283 : vector<2x32xf32>
    %285 = vector.broadcast %265 : vector<1x32xf32> to vector<2x32xf32>
    %286 = arith.mulf %284, %285 : vector<2x32xf32>
    %287 = vector.broadcast %266 : vector<1x32xf32> to vector<2x32xf32>
    %288 = arith.addf %286, %287 : vector<2x32xf32>
    %cst_136 = arith.constant 0.000000e+00 : f32
    %289 = vector.broadcast %cst_136 : f32 to vector<2x32xf32>
    %290 = arith.maximumf %288, %289 : vector<2x32xf32>
    %c0_137 = arith.constant 0 : index
    %c0_138 = arith.constant 0 : index
    %291 = vector.load %arg20[%c0_137, %c0_138] : memref<32x4xf32, #tpu.memory_space<vmem>>, vector<32x4xf32>
    %cst_139 = arith.constant dense<0.000000e+00> : vector<2x4xf32>
    %292 = tpu.matmul %290, %291, %cst_139 {dimension_numbers = #tpu.dot_dimension_numbers<[1], [0], [0], [1], [0, 0, 1, 1], [], []>} : vector<2x32xf32>, vector<32x4xf32>, vector<2x4xf32> -> vector<2x4xf32>
    %c0_140 = arith.constant 0 : index
    %c0_141 = arith.constant 0 : index
    %293 = vector.load %arg21[%c0_140, %c0_141] : memref<1x4xf32, #tpu.memory_space<vmem>>, vector<1x4xf32>
    %294 = vector.broadcast %293 : vector<1x4xf32> to vector<2x4xf32>
    %295 = arith.addf %292, %294 : vector<2x4xf32>
    %c0_142 = arith.constant 0 : index
    %c0_143 = arith.constant 0 : index
    %296 = vector.load %arg22[%c0_142, %c0_143] : memref<2x4xf32, #tpu.memory_space<vmem>>, vector<2x4xf32>
    tpu.vector_store %arg22[%c0_142, %c0_143], %295 {strides = array<i32>} : memref<2x4xf32, #tpu.memory_space<vmem>>, vector<2x4xf32>,
    return
  }
}

</mosaic_0001>

<llo_original>
// kernel: tpu_custom_call.1
$region0: #{tpu_custom_call.1}
  #allocation0 [shape = 'u32[]', space=smem, size = 0x4, offset = 0x4, fixed_abs, tag = 'smem constant byte address 0x4 - core index']
  #allocation1 [shape = 'u32[144,128]{1,0:T(1,128)}', space=vmem, size = 0x12000, scoped, tag = 'internal scratch']
  %s0 = inlined_call_operand.hbm [shape: f32[2,8,16], index: 0, kind: input, shape index: {}]
  %s1 = inlined_call_operand.hbm [shape: f32[2,1,32], index: 1, kind: input, shape index: {}]
  %s2 = inlined_call_operand.hbm [shape: f32[16,32], index: 2, kind: input, shape index: {}]
  %s3 = inlined_call_operand.hbm [shape: f32[1,32], index: 3, kind: input, shape index: {}]
  %s4 = inlined_call_operand.vmem [shape: f32[2,32,96], index: 4, kind: input, shape index: {}]
  %s5 = inlined_call_operand.hbm [shape: f32[2,1,96], index: 5, kind: input, shape index: {}]
  %s6 = inlined_call_operand.vmem [shape: f32[2,32,32], index: 6, kind: input, shape index: {}]
  %s7 = inlined_call_operand.hbm [shape: f32[2,1,32], index: 7, kind: input, shape index: {}]
  %s8 = inlined_call_operand.hbm [shape: f32[2,1,32], index: 8, kind: input, shape index: {}]
  %s9 = inlined_call_operand.hbm [shape: f32[2,1,32], index: 9, kind: input, shape index: {}]
  %s10 = inlined_call_operand.vmem [shape: f32[2,32,64], index: 10, kind: input, shape index: {}]
  %s11 = inlined_call_operand.hbm [shape: f32[2,1,64], index: 11, kind: input, shape index: {}]
  %s12 = inlined_call_operand.vmem [shape: f32[2,64,32], index: 12, kind: input, shape index: {}]
  %s13 = inlined_call_operand.hbm [shape: f32[2,1,32], index: 13, kind: input, shape index: {}]
  %s14 = inlined_call_operand.hbm [shape: f32[2,1,32], index: 14, kind: input, shape index: {}]
  %s15 = inlined_call_operand.hbm [shape: f32[2,1,32], index: 15, kind: input, shape index: {}]
  %s16 = inlined_call_operand.vmem [shape: f32[32,32], index: 16, kind: input, shape index: {}]
  %s17 = inlined_call_operand.hbm [shape: f32[1,32], index: 17, kind: input, shape index: {}]
  %s18 = inlined_call_operand.vmem [shape: f32[1,32], index: 18, kind: input, shape index: {}]
  %s19 = inlined_call_operand.vmem [shape: f32[1,32], index: 19, kind: input, shape index: {}]
  %s20 = inlined_call_operand.vmem [shape: f32[32,4], index: 20, kind: input, shape index: {}]
  %s21 = inlined_call_operand.vmem [shape: f32[1,4], index: 21, kind: input, shape index: {}]
  %s22 = inlined_call_operand.hbm [shape: f32[2,4], index: 22, kind: output, shape index: {}]
  %s23 = sld [smem:[#allocation0]]
  $region150: #{tpu_custom_call.1} parent=0
    _
  %s25 = ssub.s32 1, %s23
  %s26 = scalar_select 0, %s25, %s23
  $region1: #{tpu_custom_call.1} parent=0
    #allocation2 [shape = 'u8[8192]{0}', space=vmem, size = 0x2000, scoped, tag = 'input window, operand 0, single buffered']
    #allocation3 [shape = 's32[1]{0}', space=sflag, size = 0x4, scoped, tag = 'scoped memory for tpu_custom_call.1']
    #allocation4 [shape = 's32[1]{0}', space=sflag, size = 0x4, scoped, tag = 'scoped memory for tpu_custom_call.1']
    #allocation5 [shape = 'u8[1024]{0}', space=vmem, size = 0x400, scoped, tag = 'input window, operand 1, single buffered']
    #allocation6 [shape = 's32[1]{0}', space=sflag, size = 0x4, scoped, tag = 'scoped memory for tpu_custom_call.1']
    #allocation7 [shape = 'u8[8192]{0}', space=vmem, size = 0x2000, scoped, tag = 'input window, operand 2, single buffered']
    #allocation8 [shape = 'u8[512]{0}', space=vmem, size = 0x400, scoped, tag = 'input window, operand 3, single buffered']
    #allocation9 [shape = 's32[1]{0}', space=sflag, size = 0x4, scoped, tag = 'scoped memory for tpu_custom_call.1']
    #allocation10 [shape = 'u8[1024]{0}', space=vmem, size = 0x400, scoped, tag = 'input window, operand 5, single buffered']
    #allocation11 [shape = 'u8[1024]{0}', space=vmem, size = 0x400, scoped, tag = 'input window, operand 7, single buffered']
    #allocation12 [shape = 's32[1]{0}', space=sflag, size = 0x4, scoped, tag = 'scoped memory for tpu_custom_call.1']
    #allocation13 [shape = 'u8[1024]{0}', space=vmem, size = 0x400, scoped, tag = 'input window, operand 8, single buffered']
    #allocation14 [shape = 'u8[1024]{0}', space=vmem, size = 0x400, scoped, tag = 'input window, operand 9, single buffered']
    #allocation15 [shape = 's32[1]{0}', space=sflag, size = 0x4, scoped, tag = 'scoped memory for tpu_custom_call.1']
    #allocation16 [shape = 'u8[1024]{0}', space=vmem, size = 0x400, scoped, tag = 'input window, operand 11, single buffered']
    #allocation17 [shape = 'u8[1024]{0}', space=vmem, size = 0x400, scoped, tag = 'input window, operand 13, single buffered']
    #allocation18 [shape = 's32[1]{0}', space=sflag, size = 0x4, scoped, tag = 'scoped memory for tpu_custom_call.1']
    #allocation19 [shape = 'u8[1024]{0}', space=vmem, size = 0x400, scoped, tag = 'input window, operand 14, single buffered']
    #allocation20 [shape = 'u8[1024]{0}', space=vmem, size = 0x400, scoped, tag = 'input window, operand 15, single buffered']
    #allocation21 [shape = 's32[1]{0}', space=sflag, size = 0x4, scoped, tag = 'scoped memory for tpu_custom_call.1']
    #allocation22 [shape = 'u8[512]{0}', space=vmem, size = 0x400, scoped, tag = 'input window, operand 17, single buffered']
    #allocation23 [shape = 'u8[1024]{0}', space=vmem, size = 0x400, scoped, tag = 'output window, operand 0, single buffered']
    %27 = vsyncpa [#allocation3], 0
    %28 = vsyncpa [#allocation6], 0
    %29 = vsyncpa [#allocation9], 0
    %30 = vsyncpa [#allocation12], 0
    %31 = vsyncpa [#allocation15], 0
    %32 = vsyncpa [#allocation18], 0
    %33 = vsyncpa [#allocation21], 0
    %34 = vsyncpa [#allocation4], 0
    // Predicated region
    $region2: #{tpu_custom_call.1} parent=1 // pred_check
      _
    $region3: #{tpu_custom_call.1} parent=1 // pred_check_branch
      %36 = sbr.rel (0) target = $region5
    $region4: #{tpu_custom_call.1} parent=1 // pred_region
      %s38 = ssub.s32 256, 256
      %39 = vsyncadd [#allocation3], %s38
      %s40 = sshll.u32 [#allocation2], 4
      %s41 = int_to_ptr.vmem [resolvable:$true] %s40
      %46 = dma.hbm_to_vmem [thread:$0]  %s0, 256, %s41, [#allocation3], 128, 128, 8
    $region5: #{tpu_custom_call.1} parent=1 // pred_fallthru
      _
    // Predicated region
    $region6: #{tpu_custom_call.1} parent=1 // pred_check
      _
    $region7: #{tpu_custom_call.1} parent=1 // pred_check_branch
      %48 = sbr.rel (0) target = $region9
    $region8: #{tpu_custom_call.1} parent=1 // pred_region
      %s50 = ssub.s32 32, 32
      %51 = vsyncadd [#allocation6], %s50
      %s52 = sshll.u32 [#allocation5], 4
      %s53 = int_to_ptr.vmem [resolvable:$true] %s52
      %58 = dma.hbm_to_vmem [thread:$0]  %s1, 32, %s53, [#allocation6], 16, 16, 1
    $region9: #{tpu_custom_call.1} parent=1 // pred_fallthru
      _
    // Predicated region
    $region10: #{tpu_custom_call.1} parent=1 // pred_check
      _
    $region11: #{tpu_custom_call.1} parent=1 // pred_check_branch
      %60 = sbr.rel (0) target = $region13
    $region12: #{tpu_custom_call.1} parent=1 // pred_region
      %s62 = ssub.s32 256, 256
      %63 = vsyncadd [#allocation6], %s62
      %s64 = sshll.u32 [#allocation7], 4
      %s65 = int_to_ptr.vmem [resolvable:$true] %s64
      %70 = dma.hbm_to_vmem [thread:$0]  %s2, 256, %s65, [#allocation6], 128, 128, 8
    $region13: #{tpu_custom_call.1} parent=1 // pred_fallthru
      _
    // Predicated region
    $region14: #{tpu_custom_call.1} parent=1 // pred_check
      _
    $region15: #{tpu_custom_call.1} parent=1 // pred_check_branch
      %72 = sbr.rel (0) target = $region17
    $region16: #{tpu_custom_call.1} parent=1 // pred_region
      %s74 = ssub.s32 16, 16
      %75 = vsyncadd [#allocation9], %s74
      %s77 = sshll.u32 [#allocation8], 4
      %s78 = int_to_ptr.vmem [resolvable:$true] %s77
      %80 = dma.hbm_to_vmem [thread:$0]  %s3, 16, %s78, [#allocation9]
    $region17: #{tpu_custom_call.1} parent=1 // pred_fallthru
      _
    // Predicated region
    $region18: #{tpu_custom_call.1} parent=1 // pred_check
      _
    $region19: #{tpu_custom_call.1} parent=1 // pred_check_branch
      %82 = sbr.rel (0) target = $region21
    $region20: #{tpu_custom_call.1} parent=1 // pred_region
      _
    $region21: #{tpu_custom_call.1} parent=1 // pred_fallthru
      _
    // Predicated region
    $region22: #{tpu_custom_call.1} parent=1 // pred_check
      _
    $region23: #{tpu_custom_call.1} parent=1 // pred_check_branch
      %84 = sbr.rel (0) target = $region25
    $region24: #{tpu_custom_call.1} parent=1 // pred_region
      %s86 = ssub.s32 32, 32
      %87 = vsyncadd [#allocation9], %s86
      %s88 = sshll.u32 [#allocation10], 4
      %s89 = int_to_ptr.vmem [resolvable:$true] %s88
      %94 = dma.hbm_to_vmem [thread:$0]  %s5, 32, %s89, [#allocation9], 16, 16, 1
    $region25: #{tpu_custom_call.1} parent=1 // pred_fallthru
      _
    // Predicated region
    $region26: #{tpu_custom_call.1} parent=1 // pred_check
      _
    $region27: #{tpu_custom_call.1} parent=1 // pred_check_branch
      %96 = sbr.rel (0) target = $region29
    $region28: #{tpu_custom_call.1} parent=1 // pred_region
      _
    $region29: #{tpu_custom_call.1} parent=1 // pred_fallthru
      _
    // Predicated region
    $region30: #{tpu_custom_call.1} parent=1 // pred_check
      _
    $region31: #{tpu_custom_call.1} parent=1 // pred_check_branch
      %98 = sbr.rel (0) target = $region33
    $region32: #{tpu_custom_call.1} parent=1 // pred_region
      %s100 = ssub.s32 32, 32
      %101 = vsyncadd [#allocation12], %s100
      %s102 = sshll.u32 [#allocation11], 4
      %s103 = int_to_ptr.vmem [resolvable:$true] %s102
      %108 = dma.hbm_to_vmem [thread:$0]  %s7, 32, %s103, [#allocation12], 16, 16, 1
    $region33: #{tpu_custom_call.1} parent=1 // pred_fallthru
      _
    // Predicated region
    $region34: #{tpu_custom_call.1} parent=1 // pred_check
      _
    $region35: #{tpu_custom_call.1} parent=1 // pred_check_branch
      %110 = sbr.rel (0) target = $region37
    $region36: #{tpu_custom_call.1} parent=1 // pred_region
      %s112 = ssub.s32 32, 32
      %113 = vsyncadd [#allocation12], %s112
      %s114 = sshll.u32 [#allocation13], 4
      %s115 = int_to_ptr.vmem [resolvable:$true] %s114
      %120 = dma.hbm_to_vmem [thread:$0]  %s8, 32, %s115, [#allocation12], 16, 16, 1
    $region37: #{tpu_custom_call.1} parent=1 // pred_fallthru
      _
    // Predicated region
    $region38: #{tpu_custom_call.1} parent=1 // pred_check
      _
    $region39: #{tpu_custom_call.1} parent=1 // pred_check_branch
      %122 = sbr.rel (0) target = $region41
    $region40: #{tpu_custom_call.1} parent=1 // pred_region
      %s124 = ssub.s32 32, 32
      %125 = vsyncadd [#allocation15], %s124
      %s126 = sshll.u32 [#allocation14], 4
      %s127 = int_to_ptr.vmem [resolvable:$true] %s126
      %132 = dma.hbm_to_vmem [thread:$0]  %s9, 32, %s127, [#allocation15], 16, 16, 1
    $region41: #{tpu_custom_call.1} parent=1 // pred_fallthru
      _
    // Predicated region
    $region42: #{tpu_custom_call.1} parent=1 // pred_check
      _
    $region43: #{tpu_custom_call.1} parent=1 // pred_check_branch
      %134 = sbr.rel (0) target = $region45
    $region44: #{tpu_custom_call.1} parent=1 // pred_region
      _
    $region45: #{tpu_custom_call.1} parent=1 // pred_fallthru
      _
    // Predicated region
    $region46: #{tpu_custom_call.1} parent=1 // pred_check
      _
    $region47: #{tpu_custom_call.1} parent=1 // pred_check_branch
      %136 = sbr.rel (0) target = $region49
    $region48: #{tpu_custom_call.1} parent=1 // pred_region
      %s138 = ssub.s32 32, 32
      %139 = vsyncadd [#allocation15], %s138
      %s140 = sshll.u32 [#allocation16], 4
      %s141 = int_to_ptr.vmem [resolvable:$true] %s140
      %146 = dma.hbm_to_vmem [thread:$0]  %s11, 32, %s141, [#allocation15], 16, 16, 1
    $region49: #{tpu_custom_call.1} parent=1 // pred_fallthru
      _
    // Predicated region
    $region50: #{tpu_custom_call.1} parent=1 // pred_check
      _
    $region51: #{tpu_custom_call.1} parent=1 // pred_check_branch
      %148 = sbr.rel (0) target = $region53
    $region52: #{tpu_custom_call.1} parent=1 // pred_region
      _
    $region53: #{tpu_custom_call.1} parent=1 // pred_fallthru
      _
    // Predicated region
    $region54: #{tpu_custom_call.1} parent=1 // pred_check
      _
    $region55: #{tpu_custom_call.1} parent=1 // pred_check_branch
      %150 = sbr.rel (0) target = $region57
    $region56: #{tpu_custom_call.1} parent=1 // pred_region
      %s152 = ssub.s32 32, 32
      %153 = vsyncadd [#allocation18], %s152
      %s154 = sshll.u32 [#allocation17], 4
      %s155 = int_to_ptr.vmem [resolvable:$true] %s154
      %160 = dma.hbm_to_vmem [thread:$0]  %s13, 32, %s155, [#allocation18], 16, 16, 1
    $region57: #{tpu_custom_call.1} parent=1 // pred_fallthru
      _
    // Predicated region
    $region58: #{tpu_custom_call.1} parent=1 // pred_check
      _
    $region59: #{tpu_custom_call.1} parent=1 // pred_check_branch
      %162 = sbr.rel (0) target = $region61
    $region60: #{tpu_custom_call.1} parent=1 // pred_region
      %s164 = ssub.s32 32, 32
      %165 = vsyncadd [#allocation18], %s164
      %s166 = sshll.u32 [#allocation19], 4
      %s167 = int_to_ptr.vmem [resolvable:$true] %s166
      %172 = dma.hbm_to_vmem [thread:$0]  %s14, 32, %s167, [#allocation18], 16, 16, 1
    $region61: #{tpu_custom_call.1} parent=1 // pred_fallthru
      _
    // Predicated region
    $region62: #{tpu_custom_call.1} parent=1 // pred_check
      _
    $region63: #{tpu_custom_call.1} parent=1 // pred_check_branch
      %174 = sbr.rel (0) target = $region65
    $region64: #{tpu_custom_call.1} parent=1 // pred_region
      %s176 = ssub.s32 32, 32
      %177 = vsyncadd [#allocation21], %s176
      %s178 = sshll.u32 [#allocation20], 4
      %s179 = int_to_ptr.vmem [resolvable:$true] %s178
      %184 = dma.hbm_to_vmem [thread:$0]  %s15, 32, %s179, [#allocation21], 16, 16, 1
    $region65: #{tpu_custom_call.1} parent=1 // pred_fallthru
      _
    // Predicated region
    $region66: #{tpu_custom_call.1} parent=1 // pred_check
      _
    $region67: #{tpu_custom_call.1} parent=1 // pred_check_branch
      %186 = sbr.rel (0) target = $region69
    $region68: #{tpu_custom_call.1} parent=1 // pred_region
      _
    $region69: #{tpu_custom_call.1} parent=1 // pred_fallthru
      _
    // Predicated region
    $region70: #{tpu_custom_call.1} parent=1 // pred_check
      _
    $region71: #{tpu_custom_call.1} parent=1 // pred_check_branch
      %188 = sbr.rel (0) target = $region73
    $region72: #{tpu_custom_call.1} parent=1 // pred_region
      %s190 = ssub.s32 16, 16
      %191 = vsyncadd [#allocation21], %s190
      %s193 = sshll.u32 [#allocation22], 4
      %s194 = int_to_ptr.vmem [resolvable:$true] %s193
      %196 = dma.hbm_to_vmem [thread:$0]  %s17, 16, %s194, [#allocation21]
    $region73: #{tpu_custom_call.1} parent=1 // pred_fallthru
      _
    // Predicated region
    $region74: #{tpu_custom_call.1} parent=1 // pred_check
      _
    $region75: #{tpu_custom_call.1} parent=1 // pred_check_branch
      %198 = sbr.rel (0) target = $region77
    $region76: #{tpu_custom_call.1} parent=1 // pred_region
      _
    $region77: #{tpu_custom_call.1} parent=1 // pred_fallthru
      _
    // Predicated region
    $region78: #{tpu_custom_call.1} parent=1 // pred_check
      _
    $region79: #{tpu_custom_call.1} parent=1 // pred_check_branch
      %200 = sbr.rel (0) target = $region81
    $region80: #{tpu_custom_call.1} parent=1 // pred_region
      _
    $region81: #{tpu_custom_call.1} parent=1 // pred_fallthru
      _
    // Predicated region
    $region82: #{tpu_custom_call.1} parent=1 // pred_check
      _
    $region83: #{tpu_custom_call.1} parent=1 // pred_check_branch
      %202 = sbr.rel (0) target = $region85
    $region84: #{tpu_custom_call.1} parent=1 // pred_region
      _
    $region85: #{tpu_custom_call.1} parent=1 // pred_fallthru
      _
    // Predicated region
    $region86: #{tpu_custom_call.1} parent=1 // pred_check
      _
    $region87: #{tpu_custom_call.1} parent=1 // pred_check_branch
      %204 = sbr.rel (0) target = $region89
    $region88: #{tpu_custom_call.1} parent=1 // pred_region
      _
    $region89: #{tpu_custom_call.1} parent=1 // pred_fallthru
      _
    // Predicated region
    $region90: #{tpu_custom_call.1} parent=1 // pred_check
      _
    $region91: #{tpu_custom_call.1} parent=1 // pred_check_branch
      %206 = sbr.rel (0) target = $region93
    $region92: #{tpu_custom_call.1} parent=1 // pred_region
      %207 = dma.done [#allocation3], 256
    $region93: #{tpu_custom_call.1} parent=1 // pred_fallthru
      _
    // Predicated region
    $region94: #{tpu_custom_call.1} parent=1 // pred_check
      _
    $region95: #{tpu_custom_call.1} parent=1 // pred_check_branch
      %209 = sbr.rel (0) target = $region97
    $region96: #{tpu_custom_call.1} parent=1 // pred_region
      %210 = dma.done [#allocation6], 32
    $region97: #{tpu_custom_call.1} parent=1 // pred_fallthru
      _
    // Predicated region
    $region98: #{tpu_custom_call.1} parent=1 // pred_check
      _
    $region99: #{tpu_custom_call.1} parent=1 // pred_check_branch
      %212 = sbr.rel (0) target = $region101
    $region100: #{tpu_custom_call.1} parent=1 // pred_region
      %213 = dma.done [#allocation6], 256
    $region101: #{tpu_custom_call.1} parent=1 // pred_fallthru
      _
    // Predicated region
    $region102: #{tpu_custom_call.1} parent=1 // pred_check
      _
    $region103: #{tpu_custom_call.1} parent=1 // pred_check_branch
      %215 = sbr.rel (0) target = $region105
    $region104: #{tpu_custom_call.1} parent=1 // pred_region
      %216 = dma.done [#allocation9], 16
    $region105: #{tpu_custom_call.1} parent=1 // pred_fallthru
      _
    // Predicated region
    $region106: #{tpu_custom_call.1} parent=1 // pred_check
      _
    $region107: #{tpu_custom_call.1} parent=1 // pred_check_branch
      %218 = sbr.rel (0) target = $region109
    $region108: #{tpu_custom_call.1} parent=1 // pred_region
      %219 = dma.done [#allocation9], 32
    $region109: #{tpu_custom_call.1} parent=1 // pred_fallthru
      _
    // Predicated region
    $region110: #{tpu_custom_call.1} parent=1 // pred_check
      _
    $region111: #{tpu_custom_call.1} parent=1 // pred_check_branch
      %221 = sbr.rel (0) target = $region113
    $region112: #{tpu_custom_call.1} parent=1 // pred_region
      %222 = dma.done [#allocation12], 32
    $region113: #{tpu_custom_call.1} parent=1 // pred_fallthru
      _
    // Predicated region
    $region114: #{tpu_custom_call.1} parent=1 // pred_check
      _
    $region115: #{tpu_custom_call.1} parent=1 // pred_check_branch
      %224 = sbr.rel (0) target = $region117
    $region116: #{tpu_custom_call.1} parent=1 // pred_region
      %225 = dma.done [#allocation12], 32
    $region117: #{tpu_custom_call.1} parent=1 // pred_fallthru
      _
    // Predicated region
    $region118: #{tpu_custom_call.1} parent=1 // pred_check
      _
    $region119: #{tpu_custom_call.1} parent=1 // pred_check_branch
      %227 = sbr.rel (0) target = $region121
    $region120: #{tpu_custom_call.1} parent=1 // pred_region
      %228 = dma.done [#allocation15], 32
    $region121: #{tpu_custom_call.1} parent=1 // pred_fallthru
      _
    // Predicated region
    $region122: #{tpu_custom_call.1} parent=1 // pred_check
      _
    $region123: #{tpu_custom_call.1} parent=1 // pred_check_branch
      %230 = sbr.rel (0) target = $region125
    $region124: #{tpu_custom_call.1} parent=1 // pred_region
      %231 = dma.done [#allocation15], 32
    $region125: #{tpu_custom_call.1} parent=1 // pred_fallthru
      _
    // Predicated region
    $region126: #{tpu_custom_call.1} parent=1 // pred_check
      _
    $region127: #{tpu_custom_call.1} parent=1 // pred_check_branch
      %233 = sbr.rel (0) target = $region129
    $region128: #{tpu_custom_call.1} parent=1 // pred_region
      %234 = dma.done [#allocation18], 32
    $region129: #{tpu_custom_call.1} parent=1 // pred_fallthru
      _
    // Predicated region
    $region130: #{tpu_custom_call.1} parent=1 // pred_check
      _
    $region131: #{tpu_custom_call.1} parent=1 // pred_check_branch
      %236 = sbr.rel (0) target = $region133
    $region132: #{tpu_custom_call.1} parent=1 // pred_region
      %237 = dma.done [#allocation18], 32
    $region133: #{tpu_custom_call.1} parent=1 // pred_fallthru
      _
    // Predicated region
    $region134: #{tpu_custom_call.1} parent=1 // pred_check
      _
    $region135: #{tpu_custom_call.1} parent=1 // pred_check_branch
      %239 = sbr.rel (0) target = $region137
    $region136: #{tpu_custom_call.1} parent=1 // pred_region
      %240 = dma.done [#allocation21], 32
    $region137: #{tpu_custom_call.1} parent=1 // pred_fallthru
      _
    // Predicated region
    $region138: #{tpu_custom_call.1} parent=1 // pred_check
      _
    $region139: #{tpu_custom_call.1} parent=1 // pred_check_branch
      %242 = sbr.rel (0) target = $region141
    $region140: #{tpu_custom_call.1} parent=1 // pred_region
      %243 = dma.done [#allocation21], 16
    $region141: #{tpu_custom_call.1} parent=1 // pred_fallthru
      _
    %v244 = vld [vmem:[#allocation2] sm:$0xff]
    %v245 = vld [vmem:[#allocation2 + $0x8] sm:$0xff]
    %v246 = vld [vmem:[#allocation7] sm:$0xff]
    %v247 = vld [vmem:[#allocation7 + $0x8] sm:$0xff]
    %v248 = vld [vmem:[#allocation8] sm:$0x1]
    %v250 = vlaneseq
    %v251 = vshrl.u32 %v250, 7
    %v252 = vsub.s32 0, %v251
    %v253 = vrot.slane %v248, %v252
    %vm255 = vcmask 130048
    %v257 = vsel %vm255, %v244, 0
    %v260 = vsel %vm255, %v245, 0
    %262 = vmatprep.subr.mxu0 0.0
    %263 = vmatpush1.msra.mxu0 %v246
    %264 = vmatprep.subr.mxu0 0.0
    %265 = vmatpush1.msra.mxu0 %v247
    %266 = vmatprep.subr.mxu0 0.0
    %267 = vmatpush1.msra.mxu0 0.0
    %268 = vmatprep.subr.mxu0 0.0
    %269 = vmatpush1.msra.mxu0 0.0
    %270 = vmatprep.subr.mxu0 0.0
    %271 = vmatpush1.msra.mxu0 0.0
    %272 = vmatprep.subr.mxu0 0.0
    %273 = vmatpush1.msra.mxu0 0.0
    %274 = vmatprep.subr.mxu0 0.0
    %275 = vmatpush1.msra.mxu0 0.0
    %276 = vmatprep.subr.mxu0 0.0
    %277 = vmatpush1.msra.mxu0 0.0
    %278 = vmatprep.subr.mxu0 0.0
    %279 = vmatpush1.msra.mxu0 0.0
    %280 = vmatprep.subr.mxu0 0.0
    %281 = vmatpush1.msra.mxu0 0.0
    %282 = vmatprep.subr.mxu0 0.0
    %283 = vmatpush1.msra.mxu0 0.0
    %284 = vmatprep.subr.mxu0 0.0
    %285 = vmatpush1.msra.mxu0 0.0
    %286 = vmatprep.subr.mxu0 0.0
    %287 = vmatpush1.msra.mxu0 0.0
    %288 = vmatprep.subr.mxu0 0.0
    %289 = vmatpush1.msra.mxu0 0.0
    %290 = vmatprep.subr.mxu0 0.0
    %291 = vmatpush1.msra.mxu0 0.0
    %292 = vmatprep.subr.mxu0 0.0
    %293 = vmatpush1.msra.mxu0 0.0
    %294 = vmatprep.subr.mxu0 0.0
    %295 = vmatpush1.msra.mxu0 0.0
    %296 = vmatprep.subr.mxu0 0.0
    %297 = vmatpush1.msra.mxu0 0.0
    %298 = vmatprep.subr.mxu0 0.0
    %299 = vmatpush1.msra.mxu0 0.0
    %300 = vmatprep.subr.mxu0 0.0
    %301 = vmatpush1.msra.mxu0 0.0
    %302 = vmatprep.subr.mxu0 0.0
    %303 = vmatpush1.msra.mxu0 0.0
    %304 = vmatprep.subr.mxu0 0.0
    %305 = vmatpush1.msra.mxu0 0.0
    %306 = vmatprep.subr.mxu0 0.0
    %307 = vmatpush1.msra.mxu0 0.0
    %308 = vmatprep.subr.mxu0 0.0
    %309 = vmatpush1.msra.mxu0 0.0
    %310 = vmatprep.subr.mxu0 0.0
    %311 = vmatpush1.msra.mxu0 0.0
    %312 = vmatprep.subr.mxu0 0.0
    %313 = vmatpush1.msra.mxu0 0.0
    %314 = vmatprep.subr.mxu0 0.0
    %315 = vmatpush1.msra.mxu0 0.0
    %316 = vmatprep.subr.mxu0 0.0
    %317 = vmatpush1.msra.mxu0 0.0
    %318 = vmatprep.subr.mxu0 0.0
    %319 = vmatpush1.msra.mxu0 0.0
    %320 = vmatprep.subr.mxu0 0.0
    %321 = vmatpush1.msra.mxu0 0.0
    %322 = vmatprep.subr.mxu0 0.0
    %323 = vmatpush1.msra.mxu0 0.0
    %324 = vmatprep.subr.mxu0 0.0
    %325 = vmatpush1.msra.mxu0 0.0
    %326 = vmatprep.mubr.f32.mxu0 0.0
    %327 = vmatmul.mubr.f32.gmra.mrb[0].mxu0 %v257
    %v328 = vpop.f32.mrb[0].mxu0
    %v329 = vadd.f32 %v253, %v328
    %v330 = vpop.f32.mrb[0].mxu0
    %331 = vmatprep.mubr.f32.mxu0 0.0
    %332 = vmatmul.mubr.f32.gmra.mrb[0].mxu0 %v260
    %v333 = vpop.f32.mrb[0].mxu0
    %v334 = vadd.f32 %v253, %v333
    %v335 = vpop.f32.mrb[0].mxu0
    %336 = vdwg.mxu0
    %v337 = vld [vmem:[#allocation5] sm:$0x1]
    %v338 = vld [vmem:[#allocation5 + $0x1] sm:$0x1]
    %v341 = vlaneseq
    %v342 = vshrl.u32 %v341, 7
    %v343 = vsub.s32 0, %v342
    %v344 = vrot.slane %v337, %v343
    %v345 = vlaneseq
    %v346 = vshrl.u32 %v345, 7
    %v347 = vsub.s32 0, %v346
    %v348 = vrot.slane %v338, %v347
    %v351 = vadd.f32 %v329, %v344
    %v352 = vadd.f32 %v334, %v348
    %v353 = vld [vmem:[%s4] sm:$0xff]
    %v354 = vld [vmem:[%s4 + $0x8] sm:$0xff]
    %v355 = vld [vmem:[%s4 + $0x10] sm:$0xff]
    %v356 = vld [vmem:[%s4 + $0x18] sm:$0xff]
    %v357 = vld [vmem:[#allocation10] sm:$0x1]
    %v358 = vld [vmem:[%s6] sm:$0xff]
    %v359 = vld [vmem:[%s6 + $0x8] sm:$0xff]
    %v360 = vld [vmem:[%s6 + $0x10] sm:$0xff]
    %v361 = vld [vmem:[%s6 + $0x18] sm:$0xff]
    %v362 = vld [vmem:[#allocation11] sm:$0x1]
    %v363 = vld [vmem:[#allocation13] sm:$0x1]
    %v364 = vld [vmem:[#allocation14] sm:$0x1]
    %v365 = vld [vmem:[%s10] sm:$0xff]
    %v366 = vld [vmem:[%s10 + $0x8] sm:$0xff]
    %v367 = vld [vmem:[%s10 + $0x10] sm:$0xff]
    %v368 = vld [vmem:[%s10 + $0x18] sm:$0xff]
    %v369 = vld [vmem:[#allocation16] sm:$0x1]
    %v370 = vld [vmem:[%s12] sm:$0xff]
    %v371 = vld [vmem:[%s12 + $0x8] sm:$0xff]
    %v372 = vld [vmem:[%s12 + $0x10] sm:$0xff]
    %v373 = vld [vmem:[%s12 + $0x18] sm:$0xff]
    %v374 = vld [vmem:[%s12 + $0x20] sm:$0xff]
    %v375 = vld [vmem:[%s12 + $0x28] sm:$0xff]
    %v376 = vld [vmem:[%s12 + $0x30] sm:$0xff]
    %v377 = vld [vmem:[%s12 + $0x38] sm:$0xff]
    %v378 = vld [vmem:[#allocation17] sm:$0x1]
    %v379 = vld [vmem:[#allocation19] sm:$0x1]
    %v380 = vld [vmem:[#allocation20] sm:$0x1]
    %v382 = vlaneseq
    %v383 = vshrl.u32 %v382, 7
    %v384 = vsub.s32 0, %v383
    %v385 = vrot.slane %v357, %v384
    %vm387 = vcmask 261120
    %v389 = vsel %vm387, %v351, 0
    %v392 = vsel %vm387, %v352, 0
    %394 = vmatprep.subr.mxu0 0.0
    %395 = vmatpush1.msra.mxu0 %v353
    %396 = vmatprep.subr.mxu0 0.0
    %397 = vmatpush1.msra.mxu0 %v354
    %398 = vmatprep.subr.mxu0 0.0
    %399 = vmatpush1.msra.mxu0 %v355
    %400 = vmatprep.subr.mxu0 0.0
    %401 = vmatpush1.msra.mxu0 %v356
    %402 = vmatprep.subr.mxu0 0.0
    %403 = vmatpush1.msra.mxu0 0.0
    %404 = vmatprep.subr.mxu0 0.0
    %405 = vmatpush1.msra.mxu0 0.0
    %406 = vmatprep.subr.mxu0 0.0
    %407 = vmatpush1.msra.mxu0 0.0
    %408 = vmatprep.subr.mxu0 0.0
    %409 = vmatpush1.msra.mxu0 0.0
    %410 = vmatprep.subr.mxu0 0.0
    %411 = vmatpush1.msra.mxu0 0.0
    %412 = vmatprep.subr.mxu0 0.0
    %413 = vmatpush1.msra.mxu0 0.0
    %414 = vmatprep.subr.mxu0 0.0
    %415 = vmatpush1.msra.mxu0 0.0
    %416 = vmatprep.subr.mxu0 0.0
    %417 = vmatpush1.msra.mxu0 0.0
    %418 = vmatprep.subr.mxu0 0.0
    %419 = vmatpush1.msra.mxu0 0.0
    %420 = vmatprep.subr.mxu0 0.0
    %421 = vmatpush1.msra.mxu0 0.0
    %422 = vmatprep.subr.mxu0 0.0
    %423 = vmatpush1.msra.mxu0 0.0
    %424 = vmatprep.subr.mxu0 0.0
    %425 = vmatpush1.msra.mxu0 0.0
    %426 = vmatprep.subr.mxu0 0.0
    %427 = vmatpush1.msra.mxu0 0.0
    %428 = vmatprep.subr.mxu0 0.0
    %429 = vmatpush1.msra.mxu0 0.0
    %430 = vmatprep.subr.mxu0 0.0
    %431 = vmatpush1.msra.mxu0 0.0
    %432 = vmatprep.subr.mxu0 0.0
    %433 = vmatpush1.msra.mxu0 0.0
    %434 = vmatprep.subr.mxu0 0.0
    %435 = vmatpush1.msra.mxu0 0.0
    %436 = vmatprep.subr.mxu0 0.0
    %437 = vmatpush1.msra.mxu0 0.0
    %438 = vmatprep.subr.mxu0 0.0
    %439 = vmatpush1.msra.mxu0 0.0
    %440 = vmatprep.subr.mxu0 0.0
    %441 = vmatpush1.msra.mxu0 0.0
    %442 = vmatprep.subr.mxu0 0.0
    %443 = vmatpush1.msra.mxu0 0.0
    %444 = vmatprep.subr.mxu0 0.0
    %445 = vmatpush1.msra.mxu0 0.0
    %446 = vmatprep.subr.mxu0 0.0
    %447 = vmatpush1.msra.mxu0 0.0
    %448 = vmatprep.subr.mxu0 0.0
    %449 = vmatpush1.msra.mxu0 0.0
    %450 = vmatprep.subr.mxu0 0.0
    %451 = vmatpush1.msra.mxu0 0.0
    %452 = vmatprep.subr.mxu0 0.0
    %453 = vmatpush1.msra.mxu0 0.0
    %454 = vmatprep.subr.mxu0 0.0
    %455 = vmatpush1.msra.mxu0 0.0
    %456 = vmatprep.subr.mxu0 0.0
    %457 = vmatpush1.msra.mxu0 0.0
    %458 = vmatprep.mubr.f32.mxu0 0.0
    %459 = vmatmul.mubr.f32.gmra.mrb[0].mxu0 %v389
    %v460 = vpop.f32.mrb[0].mxu0
    %v461 = vadd.f32 %v385, %v460
    %v462 = vpop.f32.mrb[0].mxu0
    %463 = vmatprep.mubr.f32.mxu0 0.0
    %464 = vmatmul.mubr.f32.gmra.mrb[0].mxu0 %v392
    %v465 = vpop.f32.mrb[0].mxu0
    %v466 = vadd.f32 %v385, %v465
    %v467 = vpop.f32.mrb[0].mxu0
    %468 = vdwg.mxu0
    %471 = vrot.lane.b32.xlu0 %v461, 120
    %v472 = vpop.permute.xlu0 %471
    %473 = vrot.lane.b32.xlu0 %v466, 120
    %v474 = vpop.permute.xlu0 %473
    %475 = vrot.lane.b32.xlu0 %v461, 112
    %v476 = vpop.permute.xlu0 %475
    %477 = vrot.lane.b32.xlu0 %v466, 112
    %v478 = vpop.permute.xlu0 %477
    %479 = vrot.lane.b32.xlu0 %v461, 104
    %v480 = vpop.permute.xlu0 %479
    %481 = vrot.lane.b32.xlu0 %v466, 104
    %v482 = vpop.permute.xlu0 %481
    %483 = vrot.lane.b32.xlu0 %v461, 96
    %v484 = vpop.permute.xlu0 %483
    %vm485 = vcmask 64512
    %v486 = vsel %vm485, %v461, 0
    %v488 = vsel %vm485, %v484, 0
    %490 = vmatprep.subr.mxu0 0.0
    %491 = vmatpush1.xpose.msra.mxu0 %v488
    %492 = vmatprep.subr.mxu0 0.0
    %493 = vmatpush1.xpose.msra.mxu0 0.0
    %494 = vmatprep.subr.mxu0 0.0
    %495 = vmatpush1.xpose.msra.mxu0 0.0
    %496 = vmatprep.subr.mxu0 0.0
    %497 = vmatpush1.xpose.msra.mxu0 0.0
    %498 = vmatprep.subr.mxu0 0.0
    %499 = vmatpush1.xpose.msra.mxu0 0.0
    %500 = vmatprep.subr.mxu0 0.0
    %501 = vmatpush1.xpose.msra.mxu0 0.0
    %502 = vmatprep.subr.mxu0 0.0
    %503 = vmatpush1.xpose.msra.mxu0 0.0
    %504 = vmatprep.subr.mxu0 0.0
    %505 = vmatpush1.xpose.msra.mxu0 0.0
    %506 = vmatprep.subr.mxu0 0.0
    %507 = vmatpush1.xpose.msra.mxu0 0.0
    %508 = vmatprep.subr.mxu0 0.0
    %509 = vmatpush1.xpose.msra.mxu0 0.0
    %510 = vmatprep.subr.mxu0 0.0
    %511 = vmatpush1.xpose.msra.mxu0 0.0
    %512 = vmatprep.subr.mxu0 0.0
    %513 = vmatpush1.xpose.msra.mxu0 0.0
    %514 = vmatprep.subr.mxu0 0.0
    %515 = vmatpush1.xpose.msra.mxu0 0.0
    %516 = vmatprep.subr.mxu0 0.0
    %517 = vmatpush1.xpose.msra.mxu0 0.0
    %518 = vmatprep.subr.mxu0 0.0
    %519 = vmatpush1.xpose.msra.mxu0 0.0
    %520 = vmatprep.subr.mxu0 0.0
    %521 = vmatpush1.xpose.msra.mxu0 0.0
    %522 = vmatprep.subr.mxu0 0.0
    %523 = vmatpush1.xpose.msra.mxu0 0.0
    %524 = vmatprep.subr.mxu0 0.0
    %525 = vmatpush1.xpose.msra.mxu0 0.0
    %526 = vmatprep.subr.mxu0 0.0
    %527 = vmatpush1.xpose.msra.mxu0 0.0
    %528 = vmatprep.subr.mxu0 0.0
    %529 = vmatpush1.xpose.msra.mxu0 0.0
    %530 = vmatprep.subr.mxu0 0.0
    %531 = vmatpush1.xpose.msra.mxu0 0.0
    %532 = vmatprep.subr.mxu0 0.0
    %533 = vmatpush1.xpose.msra.mxu0 0.0
    %534 = vmatprep.subr.mxu0 0.0
    %535 = vmatpush1.xpose.msra.mxu0 0.0
    %536 = vmatprep.subr.mxu0 0.0
    %537 = vmatpush1.xpose.msra.mxu0 0.0
    %538 = vmatprep.subr.mxu0 0.0
    %539 = vmatpush1.xpose.msra.mxu0 0.0
    %540 = vmatprep.subr.mxu0 0.0
    %541 = vmatpush1.xpose.msra.mxu0 0.0
    %542 = vmatprep.subr.mxu0 0.0
    %543 = vmatpush1.xpose.msra.mxu0 0.0
    %544 = vmatprep.subr.mxu0 0.0
    %545 = vmatpush1.xpose.msra.mxu0 0.0
    %546 = vmatprep.subr.mxu0 0.0
    %547 = vmatpush1.xpose.msra.mxu0 0.0
    %548 = vmatprep.subr.mxu0 0.0
    %549 = vmatpush1.xpose.msra.mxu0 0.0
    %550 = vmatprep.subr.mxu0 0.0
    %551 = vmatpush1.xpose.msra.mxu0 0.0
    %552 = vmatprep.subr.mxu0 0.0
    %553 = vmatpush1.xpose.msra.mxu0 0.0
    %554 = vmatprep.mubr.f32.mxu0 0.0
    %555 = vmatmul.mubr.f32.gmra.mrb[0].mxu0 %v486
    %v556 = vpop.f32.mrb[0].mxu0
    %v557 = vadd.f32 0.0, %v556
    %v558 = vpop.f32.mrb[0].mxu0
    %559 = vdwg.mxu0
    %560 = vrot.lane.b32.xlu0 %v466, 96
    %v561 = vpop.permute.xlu0 %560
    %v562 = vsel %vm485, %v466, 0
    %v564 = vsel %vm485, %v561, 0
    %566 = vmatprep.subr.mxu0 0.0
    %567 = vmatpush1.xpose.msra.mxu0 %v564
    %568 = vmatprep.subr.mxu0 0.0
    %569 = vmatpush1.xpose.msra.mxu0 0.0
    %570 = vmatprep.subr.mxu0 0.0
    %571 = vmatpush1.xpose.msra.mxu0 0.0
    %572 = vmatprep.subr.mxu0 0.0
    %573 = vmatpush1.xpose.msra.mxu0 0.0
    %574 = vmatprep.subr.mxu0 0.0
    %575 = vmatpush1.xpose.msra.mxu0 0.0
    %576 = vmatprep.subr.mxu0 0.0
    %577 = vmatpush1.xpose.msra.mxu0 0.0
    %578 = vmatprep.subr.mxu0 0.0
    %579 = vmatpush1.xpose.msra.mxu0 0.0
    %580 = vmatprep.subr.mxu0 0.0
    %581 = vmatpush1.xpose.msra.mxu0 0.0
    %582 = vmatprep.subr.mxu0 0.0
    %583 = vmatpush1.xpose.msra.mxu0 0.0
    %584 = vmatprep.subr.mxu0 0.0
    %585 = vmatpush1.xpose.msra.mxu0 0.0
    %586 = vmatprep.subr.mxu0 0.0
    %587 = vmatpush1.xpose.msra.mxu0 0.0
    %588 = vmatprep.subr.mxu0 0.0
    %589 = vmatpush1.xpose.msra.mxu0 0.0
    %590 = vmatprep.subr.mxu0 0.0
    %591 = vmatpush1.xpose.msra.mxu0 0.0
    %592 = vmatprep.subr.mxu0 0.0
    %593 = vmatpush1.xpose.msra.mxu0 0.0
    %594 = vmatprep.subr.mxu0 0.0
    %595 = vmatpush1.xpose.msra.mxu0 0.0
    %596 = vmatprep.subr.mxu0 0.0
    %597 = vmatpush1.xpose.msra.mxu0 0.0
    %598 = vmatprep.subr.mxu0 0.0
    %599 = vmatpush1.xpose.msra.mxu0 0.0
    %600 = vmatprep.subr.mxu0 0.0
    %601 = vmatpush1.xpose.msra.mxu0 0.0
    %602 = vmatprep.subr.mxu0 0.0
    %603 = vmatpush1.xpose.msra.mxu0 0.0
    %604 = vmatprep.subr.mxu0 0.0
    %605 = vmatpush1.xpose.msra.mxu0 0.0
    %606 = vmatprep.subr.mxu0 0.0
    %607 = vmatpush1.xpose.msra.mxu0 0.0
    %608 = vmatprep.subr.mxu0 0.0
    %609 = vmatpush1.xpose.msra.mxu0 0.0
    %610 = vmatprep.subr.mxu0 0.0
    %611 = vmatpush1.xpose.msra.mxu0 0.0
    %612 = vmatprep.subr.mxu0 0.0
    %613 = vmatpush1.xpose.msra.mxu0 0.0
    %614 = vmatprep.subr.mxu0 0.0
    %615 = vmatpush1.xpose.msra.mxu0 0.0
    %616 = vmatprep.subr.mxu0 0.0
    %617 = vmatpush1.xpose.msra.mxu0 0.0
    %618 = vmatprep.subr.mxu0 0.0
    %619 = vmatpush1.xpose.msra.mxu0 0.0
    %620 = vmatprep.subr.mxu0 0.0
    %621 = vmatpush1.xpose.msra.mxu0 0.0
    %622 = vmatprep.subr.mxu0 0.0
    %623 = vmatpush1.xpose.msra.mxu0 0.0
    %624 = vmatprep.subr.mxu0 0.0
    %625 = vmatpush1.xpose.msra.mxu0 0.0
    %626 = vmatprep.subr.mxu0 0.0
    %627 = vmatpush1.xpose.msra.mxu0 0.0
    %628 = vmatprep.subr.mxu0 0.0
    %629 = vmatpush1.xpose.msra.mxu0 0.0
    %630 = vmatprep.mubr.f32.mxu0 0.0
    %631 = vmatmul.mubr.f32.gmra.mrb[0].mxu0 %v562
    %v632 = vpop.f32.mrb[0].mxu0
    %v633 = vadd.f32 0.0, %v632
    %v634 = vpop.f32.mrb[0].mxu0
    %635 = vdwg.mxu0
    %636 = vrot.lane.b32.xlu0 %v472, 96
    %v637 = vpop.permute.xlu0 %636
    %v638 = vsel %vm485, %v472, 0
    %v640 = vsel %vm485, %v637, 0
    %642 = vmatprep.subr.mxu0 0.0
    %643 = vmatpush1.xpose.msra.mxu0 %v640
    %644 = vmatprep.subr.mxu0 0.0
    %645 = vmatpush1.xpose.msra.mxu0 0.0
    %646 = vmatprep.subr.mxu0 0.0
    %647 = vmatpush1.xpose.msra.mxu0 0.0
    %648 = vmatprep.subr.mxu0 0.0
    %649 = vmatpush1.xpose.msra.mxu0 0.0
    %650 = vmatprep.subr.mxu0 0.0
    %651 = vmatpush1.xpose.msra.mxu0 0.0
    %652 = vmatprep.subr.mxu0 0.0
    %653 = vmatpush1.xpose.msra.mxu0 0.0
    %654 = vmatprep.subr.mxu0 0.0
    %655 = vmatpush1.xpose.msra.mxu0 0.0
    %656 = vmatprep.subr.mxu0 0.0
    %657 = vmatpush1.xpose.msra.mxu0 0.0
    %658 = vmatprep.subr.mxu0 0.0
    %659 = vmatpush1.xpose.msra.mxu0 0.0
    %660 = vmatprep.subr.mxu0 0.0
    %661 = vmatpush1.xpose.msra.mxu0 0.0
    %662 = vmatprep.subr.mxu0 0.0
    %663 = vmatpush1.xpose.msra.mxu0 0.0
    %664 = vmatprep.subr.mxu0 0.0
    %665 = vmatpush1.xpose.msra.mxu0 0.0
    %666 = vmatprep.subr.mxu0 0.0
    %667 = vmatpush1.xpose.msra.mxu0 0.0
    %668 = vmatprep.subr.mxu0 0.0
    %669 = vmatpush1.xpose.msra.mxu0 0.0
    %670 = vmatprep.subr.mxu0 0.0
    %671 = vmatpush1.xpose.msra.mxu0 0.0
    %672 = vmatprep.subr.mxu0 0.0
    %673 = vmatpush1.xpose.msra.mxu0 0.0
    %674 = vmatprep.subr.mxu0 0.0
    %675 = vmatpush1.xpose.msra.mxu0 0.0
    %676 = vmatprep.subr.mxu0 0.0
    %677 = vmatpush1.xpose.msra.mxu0 0.0
    %678 = vmatprep.subr.mxu0 0.0
    %679 = vmatpush1.xpose.msra.mxu0 0.0
    %680 = vmatprep.subr.mxu0 0.0
    %681 = vmatpush1.xpose.msra.mxu0 0.0
    %682 = vmatprep.subr.mxu0 0.0
    %683 = vmatpush1.xpose.msra.mxu0 0.0
    %684 = vmatprep.subr.mxu0 0.0
    %685 = vmatpush1.xpose.msra.mxu0 0.0
    %686 = vmatprep.subr.mxu0 0.0
    %687 = vmatpush1.xpose.msra.mxu0 0.0
    %688 = vmatprep.subr.mxu0 0.0
    %689 = vmatpush1.xpose.msra.mxu0 0.0
    %690 = vmatprep.subr.mxu0 0.0
    %691 = vmatpush1.xpose.msra.mxu0 0.0
    %692 = vmatprep.subr.mxu0 0.0
    %693 = vmatpush1.xpose.msra.mxu0 0.0
    %694 = vmatprep.subr.mxu0 0.0
    %695 = vmatpush1.xpose.msra.mxu0 0.0
    %696 = vmatprep.subr.mxu0 0.0
    %697 = vmatpush1.xpose.msra.mxu0 0.0
    %698 = vmatprep.subr.mxu0 0.0
    %699 = vmatpush1.xpose.msra.mxu0 0.0
    %700 = vmatprep.subr.mxu0 0.0
    %701 = vmatpush1.xpose.msra.mxu0 0.0
    %702 = vmatprep.subr.mxu0 0.0
    %703 = vmatpush1.xpose.msra.mxu0 0.0
    %704 = vmatprep.subr.mxu0 0.0
    %705 = vmatpush1.xpose.msra.mxu0 0.0
    %706 = vmatprep.mubr.f32.mxu0 0.0
    %707 = vmatmul.mubr.f32.gmra.mrb[0].mxu0 %v638
    %v708 = vpop.f32.mrb[0].mxu0
    %v709 = vadd.f32 0.0, %v708
    %v710 = vpop.f32.mrb[0].mxu0
    %711 = vdwg.mxu0
    %712 = vrot.lane.b32.xlu0 %v474, 96
    %v713 = vpop.permute.xlu0 %712
    %v714 = vsel %vm485, %v474, 0
    %v716 = vsel %vm485, %v713, 0
    %718 = vmatprep.subr.mxu0 0.0
    %719 = vmatpush1.xpose.msra.mxu0 %v716
    %720 = vmatprep.subr.mxu0 0.0
    %721 = vmatpush1.xpose.msra.mxu0 0.0
    %722 = vmatprep.subr.mxu0 0.0
    %723 = vmatpush1.xpose.msra.mxu0 0.0
    %724 = vmatprep.subr.mxu0 0.0
    %725 = vmatpush1.xpose.msra.mxu0 0.0
    %726 = vmatprep.subr.mxu0 0.0
    %727 = vmatpush1.xpose.msra.mxu0 0.0
    %728 = vmatprep.subr.mxu0 0.0
    %729 = vmatpush1.xpose.msra.mxu0 0.0
    %730 = vmatprep.subr.mxu0 0.0
    %731 = vmatpush1.xpose.msra.mxu0 0.0
    %732 = vmatprep.subr.mxu0 0.0
    %733 = vmatpush1.xpose.msra.mxu0 0.0
    %734 = vmatprep.subr.mxu0 0.0
    %735 = vmatpush1.xpose.msra.mxu0 0.0
    %736 = vmatprep.subr.mxu0 0.0
    %737 = vmatpush1.xpose.msra.mxu0 0.0
    %738 = vmatprep.subr.mxu0 0.0
    %739 = vmatpush1.xpose.msra.mxu0 0.0
    %740 = vmatprep.subr.mxu0 0.0
    %741 = vmatpush1.xpose.msra.mxu0 0.0
    %742 = vmatprep.subr.mxu0 0.0
    %743 = vmatpush1.xpose.msra.mxu0 0.0
    %744 = vmatprep.subr.mxu0 0.0
    %745 = vmatpush1.xpose.msra.mxu0 0.0
    %746 = vmatprep.subr.mxu0 0.0
    %747 = vmatpush1.xpose.msra.mxu0 0.0
    %748 = vmatprep.subr.mxu0 0.0
    %749 = vmatpush1.xpose.msra.mxu0 0.0
    %750 = vmatprep.subr.mxu0 0.0
    %751 = vmatpush1.xpose.msra.mxu0 0.0
    %752 = vmatprep.subr.mxu0 0.0
    %753 = vmatpush1.xpose.msra.mxu0 0.0
    %754 = vmatprep.subr.mxu0 0.0
    %755 = vmatpush1.xpose.msra.mxu0 0.0
    %756 = vmatprep.subr.mxu0 0.0
    %757 = vmatpush1.xpose.msra.mxu0 0.0
    %758 = vmatprep.subr.mxu0 0.0
    %759 = vmatpush1.xpose.msra.mxu0 0.0
    %760 = vmatprep.subr.mxu0 0.0
    %761 = vmatpush1.xpose.msra.mxu0 0.0
    %762 = vmatprep.subr.mxu0 0.0
    %763 = vmatpush1.xpose.msra.mxu0 0.0
    %764 = vmatprep.subr.mxu0 0.0
    %765 = vmatpush1.xpose.msra.mxu0 0.0
    %766 = vmatprep.subr.mxu0 0.0
    %767 = vmatpush1.xpose.msra.mxu0 0.0
    %768 = vmatprep.subr.mxu0 0.0
    %769 = vmatpush1.xpose.msra.mxu0 0.0
    %770 = vmatprep.subr.mxu0 0.0
    %771 = vmatpush1.xpose.msra.mxu0 0.0
    %772 = vmatprep.subr.mxu0 0.0
    %773 = vmatpush1.xpose.msra.mxu0 0.0
    %774 = vmatprep.subr.mxu0 0.0
    %775 = vmatpush1.xpose.msra.mxu0 0.0
    %776 = vmatprep.subr.mxu0 0.0
    %777 = vmatpush1.xpose.msra.mxu0 0.0
    %778 = vmatprep.subr.mxu0 0.0
    %779 = vmatpush1.xpose.msra.mxu0 0.0
    %780 = vmatprep.subr.mxu0 0.0
    %781 = vmatpush1.xpose.msra.mxu0 0.0
    %782 = vmatprep.mubr.f32.mxu0 0.0
    %783 = vmatmul.mubr.f32.gmra.mrb[0].mxu0 %v714
    %v784 = vpop.f32.mrb[0].mxu0
    %v785 = vadd.f32 0.0, %v784
    %v786 = vpop.f32.mrb[0].mxu0
    %787 = vdwg.mxu0
    %788 = vrot.lane.b32.xlu0 %v476, 96
    %v789 = vpop.permute.xlu0 %788
    %v790 = vsel %vm485, %v476, 0
    %v792 = vsel %vm485, %v789, 0
    %794 = vmatprep.subr.mxu0 0.0
    %795 = vmatpush1.xpose.msra.mxu0 %v792
    %796 = vmatprep.subr.mxu0 0.0
    %797 = vmatpush1.xpose.msra.mxu0 0.0
    %798 = vmatprep.subr.mxu0 0.0
    %799 = vmatpush1.xpose.msra.mxu0 0.0
    %800 = vmatprep.subr.mxu0 0.0
    %801 = vmatpush1.xpose.msra.mxu0 0.0
    %802 = vmatprep.subr.mxu0 0.0
    %803 = vmatpush1.xpose.msra.mxu0 0.0
    %804 = vmatprep.subr.mxu0 0.0
    %805 = vmatpush1.xpose.msra.mxu0 0.0
    %806 = vmatprep.subr.mxu0 0.0
    %807 = vmatpush1.xpose.msra.mxu0 0.0
    %808 = vmatprep.subr.mxu0 0.0
    %809 = vmatpush1.xpose.msra.mxu0 0.0
    %810 = vmatprep.subr.mxu0 0.0
    %811 = vmatpush1.xpose.msra.mxu0 0.0
    %812 = vmatprep.subr.mxu0 0.0
    %813 = vmatpush1.xpose.msra.mxu0 0.0
    %814 = vmatprep.subr.mxu0 0.0
    %815 = vmatpush1.xpose.msra.mxu0 0.0
    %816 = vmatprep.subr.mxu0 0.0
    %817 = vmatpush1.xpose.msra.mxu0 0.0
    %818 = vmatprep.subr.mxu0 0.0
    %819 = vmatpush1.xpose.msra.mxu0 0.0
    %820 = vmatprep.subr.mxu0 0.0
    %821 = vmatpush1.xpose.msra.mxu0 0.0
    %822 = vmatprep.subr.mxu0 0.0
    %823 = vmatpush1.xpose.msra.mxu0 0.0
    %824 = vmatprep.subr.mxu0 0.0
    %825 = vmatpush1.xpose.msra.mxu0 0.0
    %826 = vmatprep.subr.mxu0 0.0
    %827 = vmatpush1.xpose.msra.mxu0 0.0
    %828 = vmatprep.subr.mxu0 0.0
    %829 = vmatpush1.xpose.msra.mxu0 0.0
    %830 = vmatprep.subr.mxu0 0.0
    %831 = vmatpush1.xpose.msra.mxu0 0.0
    %832 = vmatprep.subr.mxu0 0.0
    %833 = vmatpush1.xpose.msra.mxu0 0.0
    %834 = vmatprep.subr.mxu0 0.0
    %835 = vmatpush1.xpose.msra.mxu0 0.0
    %836 = vmatprep.subr.mxu0 0.0
    %837 = vmatpush1.xpose.msra.mxu0 0.0
    %838 = vmatprep.subr.mxu0 0.0
    %839 = vmatpush1.xpose.msra.mxu0 0.0
    %840 = vmatprep.subr.mxu0 0.0
    %841 = vmatpush1.xpose.msra.mxu0 0.0
    %842 = vmatprep.subr.mxu0 0.0
    %843 = vmatpush1.xpose.msra.mxu0 0.0
    %844 = vmatprep.subr.mxu0 0.0
    %845 = vmatpush1.xpose.msra.mxu0 0.0
    %846 = vmatprep.subr.mxu0 0.0
    %847 = vmatpush1.xpose.msra.mxu0 0.0
    %848 = vmatprep.subr.mxu0 0.0
    %849 = vmatpush1.xpose.msra.mxu0 0.0
    %850 = vmatprep.subr.mxu0 0.0
    %851 = vmatpush1.xpose.msra.mxu0 0.0
    %852 = vmatprep.subr.mxu0 0.0
    %853 = vmatpush1.xpose.msra.mxu0 0.0
    %854 = vmatprep.subr.mxu0 0.0
    %855 = vmatpush1.xpose.msra.mxu0 0.0
    %856 = vmatprep.subr.mxu0 0.0
    %857 = vmatpush1.xpose.msra.mxu0 0.0
    %858 = vmatprep.mubr.f32.mxu0 0.0
    %859 = vmatmul.mubr.f32.gmra.mrb[0].mxu0 %v790
    %v860 = vpop.f32.mrb[0].mxu0
    %v861 = vadd.f32 0.0, %v860
    %v862 = vpop.f32.mrb[0].mxu0
    %863 = vdwg.mxu0
    %864 = vrot.lane.b32.xlu0 %v478, 96
    %v865 = vpop.permute.xlu0 %864
    %v866 = vsel %vm485, %v478, 0
    %v868 = vsel %vm485, %v865, 0
    %870 = vmatprep.subr.mxu0 0.0
    %871 = vmatpush1.xpose.msra.mxu0 %v868
    %872 = vmatprep.subr.mxu0 0.0
    %873 = vmatpush1.xpose.msra.mxu0 0.0
    %874 = vmatprep.subr.mxu0 0.0
    %875 = vmatpush1.xpose.msra.mxu0 0.0
    %876 = vmatprep.subr.mxu0 0.0
    %877 = vmatpush1.xpose.msra.mxu0 0.0
    %878 = vmatprep.subr.mxu0 0.0
    %879 = vmatpush1.xpose.msra.mxu0 0.0
    %880 = vmatprep.subr.mxu0 0.0
    %881 = vmatpush1.xpose.msra.mxu0 0.0
    %882 = vmatprep.subr.mxu0 0.0
    %883 = vmatpush1.xpose.msra.mxu0 0.0
    %884 = vmatprep.subr.mxu0 0.0
    %885 = vmatpush1.xpose.msra.mxu0 0.0
    %886 = vmatprep.subr.mxu0 0.0
    %887 = vmatpush1.xpose.msra.mxu0 0.0
    %888 = vmatprep.subr.mxu0 0.0
    %889 = vmatpush1.xpose.msra.mxu0 0.0
    %890 = vmatprep.subr.mxu0 0.0
    %891 = vmatpush1.xpose.msra.mxu0 0.0
    %892 = vmatprep.subr.mxu0 0.0
    %893 = vmatpush1.xpose.msra.mxu0 0.0
    %894 = vmatprep.subr.mxu0 0.0
    %895 = vmatpush1.xpose.msra.mxu0 0.0
    %896 = vmatprep.subr.mxu0 0.0
    %897 = vmatpush1.xpose.msra.mxu0 0.0
    %898 = vmatprep.subr.mxu0 0.0
    %899 = vmatpush1.xpose.msra.mxu0 0.0
    %900 = vmatprep.subr.mxu0 0.0
    %901 = vmatpush1.xpose.msra.mxu0 0.0
    %902 = vmatprep.subr.mxu0 0.0
    %903 = vmatpush1.xpose.msra.mxu0 0.0
    %904 = vmatprep.subr.mxu0 0.0
    %905 = vmatpush1.xpose.msra.mxu0 0.0
    %906 = vmatprep.subr.mxu0 0.0
    %907 = vmatpush1.xpose.msra.mxu0 0.0
    %908 = vmatprep.subr.mxu0 0.0
    %909 = vmatpush1.xpose.msra.mxu0 0.0
    %910 = vmatprep.subr.mxu0 0.0
    %911 = vmatpush1.xpose.msra.mxu0 0.0
    %912 = vmatprep.subr.mxu0 0.0
    %913 = vmatpush1.xpose.msra.mxu0 0.0
    %914 = vmatprep.subr.mxu0 0.0
    %915 = vmatpush1.xpose.msra.mxu0 0.0
    %916 = vmatprep.subr.mxu0 0.0
    %917 = vmatpush1.xpose.msra.mxu0 0.0
    %918 = vmatprep.subr.mxu0 0.0
    %919 = vmatpush1.xpose.msra.mxu0 0.0
    %920 = vmatprep.subr.mxu0 0.0
    %921 = vmatpush1.xpose.msra.mxu0 0.0
    %922 = vmatprep.subr.mxu0 0.0
    %923 = vmatpush1.xpose.msra.mxu0 0.0
    %924 = vmatprep.subr.mxu0 0.0
    %925 = vmatpush1.xpose.msra.mxu0 0.0
    %926 = vmatprep.subr.mxu0 0.0
    %927 = vmatpush1.xpose.msra.mxu0 0.0
    %928 = vmatprep.subr.mxu0 0.0
    %929 = vmatpush1.xpose.msra.mxu0 0.0
    %930 = vmatprep.subr.mxu0 0.0
    %931 = vmatpush1.xpose.msra.mxu0 0.0
    %932 = vmatprep.subr.mxu0 0.0
    %933 = vmatpush1.xpose.msra.mxu0 0.0
    %934 = vmatprep.mubr.f32.mxu0 0.0
    %935 = vmatmul.mubr.f32.gmra.mrb[0].mxu0 %v866
    %v936 = vpop.f32.mrb[0].mxu0
    %v937 = vadd.f32 0.0, %v936
    %v938 = vpop.f32.mrb[0].mxu0
    %939 = vdwg.mxu0
    %940 = vrot.lane.b32.xlu0 %v480, 96
    %v941 = vpop.permute.xlu0 %940
    %v942 = vsel %vm485, %v480, 0
    %v944 = vsel %vm485, %v941, 0
    %946 = vmatprep.subr.mxu0 0.0
    %947 = vmatpush1.xpose.msra.mxu0 %v944
    %948 = vmatprep.subr.mxu0 0.0
    %949 = vmatpush1.xpose.msra.mxu0 0.0
    %950 = vmatprep.subr.mxu0 0.0
    %951 = vmatpush1.xpose.msra.mxu0 0.0
    %952 = vmatprep.subr.mxu0 0.0
    %953 = vmatpush1.xpose.msra.mxu0 0.0
    %954 = vmatprep.subr.mxu0 0.0
    %955 = vmatpush1.xpose.msra.mxu0 0.0
    %956 = vmatprep.subr.mxu0 0.0
    %957 = vmatpush1.xpose.msra.mxu0 0.0
    %958 = vmatprep.subr.mxu0 0.0
    %959 = vmatpush1.xpose.msra.mxu0 0.0
    %960 = vmatprep.subr.mxu0 0.0
    %961 = vmatpush1.xpose.msra.mxu0 0.0
    %962 = vmatprep.subr.mxu0 0.0
    %963 = vmatpush1.xpose.msra.mxu0 0.0
    %964 = vmatprep.subr.mxu0 0.0
    %965 = vmatpush1.xpose.msra.mxu0 0.0
    %966 = vmatprep.subr.mxu0 0.0
    %967 = vmatpush1.xpose.msra.mxu0 0.0
    %968 = vmatprep.subr.mxu0 0.0
    %969 = vmatpush1.xpose.msra.mxu0 0.0
    %970 = vmatprep.subr.mxu0 0.0
    %971 = vmatpush1.xpose.msra.mxu0 0.0
    %972 = vmatprep.subr.mxu0 0.0
    %973 = vmatpush1.xpose.msra.mxu0 0.0
    %974 = vmatprep.subr.mxu0 0.0
    %975 = vmatpush1.xpose.msra.mxu0 0.0
    %976 = vmatprep.subr.mxu0 0.0
    %977 = vmatpush1.xpose.msra.mxu0 0.0
    %978 = vmatprep.subr.mxu0 0.0
    %979 = vmatpush1.xpose.msra.mxu0 0.0
    %980 = vmatprep.subr.mxu0 0.0
    %981 = vmatpush1.xpose.msra.mxu0 0.0
    %982 = vmatprep.subr.mxu0 0.0
    %983 = vmatpush1.xpose.msra.mxu0 0.0
    %984 = vmatprep.subr.mxu0 0.0
    %985 = vmatpush1.xpose.msra.mxu0 0.0
    %986 = vmatprep.subr.mxu0 0.0
    %987 = vmatpush1.xpose.msra.mxu0 0.0
    %988 = vmatprep.subr.mxu0 0.0
    %989 = vmatpush1.xpose.msra.mxu0 0.0
    %990 = vmatprep.subr.mxu0 0.0
    %991 = vmatpush1.xpose.msra.mxu0 0.0
    %992 = vmatprep.subr.mxu0 0.0
    %993 = vmatpush1.xpose.msra.mxu0 0.0
    %994 = vmatprep.subr.mxu0 0.0
    %995 = vmatpush1.xpose.msra.mxu0 0.0
    %996 = vmatprep.subr.mxu0 0.0
    %997 = vmatpush1.xpose.msra.mxu0 0.0
    %998 = vmatprep.subr.mxu0 0.0
    %999 = vmatpush1.xpose.msra.mxu0 0.0
    %1000 = vmatprep.subr.mxu0 0.0
    %1001 = vmatpush1.xpose.msra.mxu0 0.0
    %1002 = vmatprep.subr.mxu0 0.0
    %1003 = vmatpush1.xpose.msra.mxu0 0.0
    %1004 = vmatprep.subr.mxu0 0.0
    %1005 = vmatpush1.xpose.msra.mxu0 0.0
    %1006 = vmatprep.subr.mxu0 0.0
    %1007 = vmatpush1.xpose.msra.mxu0 0.0
    %1008 = vmatprep.subr.mxu0 0.0
    %1009 = vmatpush1.xpose.msra.mxu0 0.0
    %1010 = vmatprep.mubr.f32.mxu0 0.0
    %1011 = vmatmul.mubr.f32.gmra.mrb[0].mxu0 %v942
    %v1012 = vpop.f32.mrb[0].mxu0
    %v1013 = vadd.f32 0.0, %v1012
    %v1014 = vpop.f32.mrb[0].mxu0
    %1015 = vdwg.mxu0
    %1016 = vrot.lane.b32.xlu0 %v482, 96
    %v1017 = vpop.permute.xlu0 %1016
    %v1018 = vsel %vm485, %v482, 0
    %v1020 = vsel %vm485, %v1017, 0
    %1022 = vmatprep.subr.mxu0 0.0
    %1023 = vmatpush1.xpose.msra.mxu0 %v1020
    %1024 = vmatprep.subr.mxu0 0.0
    %1025 = vmatpush1.xpose.msra.mxu0 0.0
    %1026 = vmatprep.subr.mxu0 0.0
    %1027 = vmatpush1.xpose.msra.mxu0 0.0
    %1028 = vmatprep.subr.mxu0 0.0
    %1029 = vmatpush1.xpose.msra.mxu0 0.0
    %1030 = vmatprep.subr.mxu0 0.0
    %1031 = vmatpush1.xpose.msra.mxu0 0.0
    %1032 = vmatprep.subr.mxu0 0.0
    %1033 = vmatpush1.xpose.msra.mxu0 0.0
    %1034 = vmatprep.subr.mxu0 0.0
    %1035 = vmatpush1.xpose.msra.mxu0 0.0
    %1036 = vmatprep.subr.mxu0 0.0
    %1037 = vmatpush1.xpose.msra.mxu0 0.0
    %1038 = vmatprep.subr.mxu0 0.0
    %1039 = vmatpush1.xpose.msra.mxu0 0.0
    %1040 = vmatprep.subr.mxu0 0.0
    %1041 = vmatpush1.xpose.msra.mxu0 0.0
    %1042 = vmatprep.subr.mxu0 0.0
    %1043 = vmatpush1.xpose.msra.mxu0 0.0
    %1044 = vmatprep.subr.mxu0 0.0
    %1045 = vmatpush1.xpose.msra.mxu0 0.0
    %1046 = vmatprep.subr.mxu0 0.0
    %1047 = vmatpush1.xpose.msra.mxu0 0.0
    %1048 = vmatprep.subr.mxu0 0.0
    %1049 = vmatpush1.xpose.msra.mxu0 0.0
    %1050 = vmatprep.subr.mxu0 0.0
    %1051 = vmatpush1.xpose.msra.mxu0 0.0
    %1052 = vmatprep.subr.mxu0 0.0
    %1053 = vmatpush1.xpose.msra.mxu0 0.0
    %1054 = vmatprep.subr.mxu0 0.0
    %1055 = vmatpush1.xpose.msra.mxu0 0.0
    %1056 = vmatprep.subr.mxu0 0.0
    %1057 = vmatpush1.xpose.msra.mxu0 0.0
    %1058 = vmatprep.subr.mxu0 0.0
    %1059 = vmatpush1.xpose.msra.mxu0 0.0
    %1060 = vmatprep.subr.mxu0 0.0
    %1061 = vmatpush1.xpose.msra.mxu0 0.0
    %1062 = vmatprep.subr.mxu0 0.0
    %1063 = vmatpush1.xpose.msra.mxu0 0.0
    %1064 = vmatprep.subr.mxu0 0.0
    %1065 = vmatpush1.xpose.msra.mxu0 0.0
    %1066 = vmatprep.subr.mxu0 0.0
    %1067 = vmatpush1.xpose.msra.mxu0 0.0
    %1068 = vmatprep.subr.mxu0 0.0
    %1069 = vmatpush1.xpose.msra.mxu0 0.0
    %1070 = vmatprep.subr.mxu0 0.0
    %1071 = vmatpush1.xpose.msra.mxu0 0.0
    %1072 = vmatprep.subr.mxu0 0.0
    %1073 = vmatpush1.xpose.msra.mxu0 0.0
    %1074 = vmatprep.subr.mxu0 0.0
    %1075 = vmatpush1.xpose.msra.mxu0 0.0
    %1076 = vmatprep.subr.mxu0 0.0
    %1077 = vmatpush1.xpose.msra.mxu0 0.0
    %1078 = vmatprep.subr.mxu0 0.0
    %1079 = vmatpush1.xpose.msra.mxu0 0.0
    %1080 = vmatprep.subr.mxu0 0.0
    %1081 = vmatpush1.xpose.msra.mxu0 0.0
    %1082 = vmatprep.subr.mxu0 0.0
    %1083 = vmatpush1.xpose.msra.mxu0 0.0
    %1084 = vmatprep.subr.mxu0 0.0
    %1085 = vmatpush1.xpose.msra.mxu0 0.0
    %1086 = vmatprep.mubr.f32.mxu0 0.0
    %1087 = vmatmul.mubr.f32.gmra.mrb[0].mxu0 %v1018
    %v1088 = vpop.f32.mrb[0].mxu0
    %v1089 = vadd.f32 0.0, %v1088
    %v1090 = vpop.f32.mrb[0].mxu0
    %1091 = vdwg.mxu0
    %v1092 = vmul.f32 %v557, 0.35355338
    %v1093 = vmul.f32 %v633, 0.35355338
    %v1094 = vmul.f32 %v709, 0.35355338
    %v1095 = vmul.f32 %v785, 0.35355338
    %v1096 = vmul.f32 %v861, 0.35355338
    %v1097 = vmul.f32 %v937, 0.35355338
    %v1098 = vmul.f32 %v1013, 0.35355338
    %v1099 = vmul.f32 %v1089, 0.35355338
    %v1100 = vsel %vm485, %v1092, -inf
    %1101 = vmax.xlane.f32.xlu0 %v1100
    %v1102 = vpop.xlane.xlu0 %1101
    %v1103 = vsel %vm485, %v1093, -inf
    %1104 = vmax.xlane.f32.xlu0 %v1103
    %v1105 = vpop.xlane.xlu0 %1104
    %v1106 = vsel %vm485, %v1094, -inf
    %1107 = vmax.xlane.f32.xlu0 %v1106
    %v1108 = vpop.xlane.xlu0 %1107
    %v1109 = vsel %vm485, %v1095, -inf
    %1110 = vmax.xlane.f32.xlu0 %v1109
    %v1111 = vpop.xlane.xlu0 %1110
    %v1112 = vsel %vm485, %v1096, -inf
    %1113 = vmax.xlane.f32.xlu0 %v1112
    %v1114 = vpop.xlane.xlu0 %1113
    %v1115 = vsel %vm485, %v1097, -inf
    %1116 = vmax.xlane.f32.xlu0 %v1115
    %v1117 = vpop.xlane.xlu0 %1116
    %v1118 = vsel %vm485, %v1098, -inf
    %1119 = vmax.xlane.f32.xlu0 %v1118
    %v1120 = vpop.xlane.xlu0 %1119
    %v1121 = vsel %vm485, %v1099, -inf
    %1122 = vmax.xlane.f32.xlu0 %v1121
    %v1123 = vpop.xlane.xlu0 %1122
    %v1124 = vsub.f32 %v1092, %v1102
    %v1125 = vsub.f32 %v1093, %v1105
    %v1126 = vsub.f32 %v1094, %v1108
    %v1127 = vsub.f32 %v1095, %v1111
    %v1128 = vsub.f32 %v1096, %v1114
    %v1129 = vsub.f32 %v1097, %v1117
    %v1130 = vsub.f32 %v1098, %v1120
    %v1131 = vsub.f32 %v1099, %v1123
    %v1132 = vmul.f32 %v1124, 1.442695
    %v1133 = vpow.pop %v1132
    %v1134 = vmul.f32 %v1125, 1.442695
    %v1135 = vpow.pop %v1134
    %v1136 = vmul.f32 %v1126, 1.442695
    %v1137 = vpow.pop %v1136
    %v1138 = vmul.f32 %v1127, 1.442695
    %v1139 = vpow.pop %v1138
    %v1140 = vmul.f32 %v1128, 1.442695
    %v1141 = vpow.pop %v1140
    %v1142 = vmul.f32 %v1129, 1.442695
    %v1143 = vpow.pop %v1142
    %v1144 = vmul.f32 %v1130, 1.442695
    %v1145 = vpow.pop %v1144
    %v1146 = vmul.f32 %v1131, 1.442695
    %v1147 = vpow.pop %v1146
    %v1148 = vsel %vm485, %v1133, 0.0
    %1149 = vadd.xlane.f32.xlu0 %v1148
    %v1150 = vpop.xlane.xlu0 %1149
    %v1151 = vsel %vm485, %v1135, 0.0
    %1152 = vadd.xlane.f32.xlu0 %v1151
    %v1153 = vpop.xlane.xlu0 %1152
    %v1154 = vsel %vm485, %v1137, 0.0
    %1155 = vadd.xlane.f32.xlu0 %v1154
    %v1156 = vpop.xlane.xlu0 %1155
    %v1157 = vsel %vm485, %v1139, 0.0
    %1158 = vadd.xlane.f32.xlu0 %v1157
    %v1159 = vpop.xlane.xlu0 %1158
    %v1160 = vsel %vm485, %v1141, 0.0
    %1161 = vadd.xlane.f32.xlu0 %v1160
    %v1162 = vpop.xlane.xlu0 %1161
    %v1163 = vsel %vm485, %v1143, 0.0
    %1164 = vadd.xlane.f32.xlu0 %v1163
    %v1165 = vpop.xlane.xlu0 %1164
    %v1166 = vsel %vm485, %v1145, 0.0
    %1167 = vadd.xlane.f32.xlu0 %v1166
    %v1168 = vpop.xlane.xlu0 %1167
    %v1169 = vsel %vm485, %v1147, 0.0
    %1170 = vadd.xlane.f32.xlu0 %v1169
    %v1171 = vpop.xlane.xlu0 %1170
    %v1172 = vrcp.pop %v1150
    %v1173 = vrcp.pop %v1153
    %v1174 = vrcp.pop %v1156
    %v1175 = vrcp.pop %v1159
    %v1176 = vrcp.pop %v1162
    %v1177 = vrcp.pop %v1165
    %v1178 = vrcp.pop %v1168
    %v1179 = vrcp.pop %v1171
    %v1180 = vmul.f32 %v1133, %v1172
    %v1181 = vmul.f32 %v1135, %v1173
    %v1182 = vmul.f32 %v1137, %v1174
    %v1183 = vmul.f32 %v1139, %v1175
    %v1184 = vmul.f32 %v1141, %v1176
    %v1185 = vmul.f32 %v1143, %v1177
    %v1186 = vmul.f32 %v1145, %v1178
    %v1187 = vmul.f32 %v1147, %v1179
    %1188 = vrot.lane.b32.xlu0 %v461, 64
    %v1189 = vpop.permute.xlu0 %1188
    %v1192 = vsel %vm485, %v1180, 0
    %1194 = vmatprep.subr.mxu0 0.0
    %1195 = vmatpush1.msra.mxu0 %v1189
    %1196 = vmatprep.subr.mxu0 0.0
    %1197 = vmatpush1.msra.mxu0 0.0
    %1198 = vmatprep.subr.mxu0 0.0
    %1199 = vmatpush1.msra.mxu0 0.0
    %1200 = vmatprep.subr.mxu0 0.0
    %1201 = vmatpush1.msra.mxu0 0.0
    %1202 = vmatprep.subr.mxu0 0.0
    %1203 = vmatpush1.msra.mxu0 0.0
    %1204 = vmatprep.subr.mxu0 0.0
    %1205 = vmatpush1.msra.mxu0 0.0
    %1206 = vmatprep.subr.mxu0 0.0
    %1207 = vmatpush1.msra.mxu0 0.0
    %1208 = vmatprep.subr.mxu0 0.0
    %1209 = vmatpush1.msra.mxu0 0.0
    %1210 = vmatprep.subr.mxu0 0.0
    %1211 = vmatpush1.msra.mxu0 0.0
    %1212 = vmatprep.subr.mxu0 0.0
    %1213 = vmatpush1.msra.mxu0 0.0
    %1214 = vmatprep.subr.mxu0 0.0
    %1215 = vmatpush1.msra.mxu0 0.0
    %1216 = vmatprep.subr.mxu0 0.0
    %1217 = vmatpush1.msra.mxu0 0.0
    %1218 = vmatprep.subr.mxu0 0.0
    %1219 = vmatpush1.msra.mxu0 0.0
    %1220 = vmatprep.subr.mxu0 0.0
    %1221 = vmatpush1.msra.mxu0 0.0
    %1222 = vmatprep.subr.mxu0 0.0
    %1223 = vmatpush1.msra.mxu0 0.0
    %1224 = vmatprep.subr.mxu0 0.0
    %1225 = vmatpush1.msra.mxu0 0.0
    %1226 = vmatprep.subr.mxu0 0.0
    %1227 = vmatpush1.msra.mxu0 0.0
    %1228 = vmatprep.subr.mxu0 0.0
    %1229 = vmatpush1.msra.mxu0 0.0
    %1230 = vmatprep.subr.mxu0 0.0
    %1231 = vmatpush1.msra.mxu0 0.0
    %1232 = vmatprep.subr.mxu0 0.0
    %1233 = vmatpush1.msra.mxu0 0.0
    %1234 = vmatprep.subr.mxu0 0.0
    %1235 = vmatpush1.msra.mxu0 0.0
    %1236 = vmatprep.subr.mxu0 0.0
    %1237 = vmatpush1.msra.mxu0 0.0
    %1238 = vmatprep.subr.mxu0 0.0
    %1239 = vmatpush1.msra.mxu0 0.0
    %1240 = vmatprep.subr.mxu0 0.0
    %1241 = vmatpush1.msra.mxu0 0.0
    %1242 = vmatprep.subr.mxu0 0.0
    %1243 = vmatpush1.msra.mxu0 0.0
    %1244 = vmatprep.subr.mxu0 0.0
    %1245 = vmatpush1.msra.mxu0 0.0
    %1246 = vmatprep.subr.mxu0 0.0
    %1247 = vmatpush1.msra.mxu0 0.0
    %1248 = vmatprep.subr.mxu0 0.0
    %1249 = vmatpush1.msra.mxu0 0.0
    %1250 = vmatprep.subr.mxu0 0.0
    %1251 = vmatpush1.msra.mxu0 0.0
    %1252 = vmatprep.subr.mxu0 0.0
    %1253 = vmatpush1.msra.mxu0 0.0
    %1254 = vmatprep.subr.mxu0 0.0
    %1255 = vmatpush1.msra.mxu0 0.0
    %1256 = vmatprep.subr.mxu0 0.0
    %1257 = vmatpush1.msra.mxu0 0.0
    %1258 = vmatprep.mubr.f32.mxu0 0.0
    %1259 = vmatmul.mubr.f32.gmra.mrb[0].mxu0 %v1192
    %v1260 = vpop.f32.mrb[0].mxu0
    %v1261 = vadd.f32 0.0, %v1260
    %v1262 = vpop.f32.mrb[0].mxu0
    %1263 = vdwg.mxu0
    %1264 = vrot.lane.b32.xlu0 %v466, 64
    %v1265 = vpop.permute.xlu0 %1264
    %v1268 = vsel %vm485, %v1181, 0
    %1270 = vmatprep.subr.mxu0 0.0
    %1271 = vmatpush1.msra.mxu0 %v1265
    %1272 = vmatprep.subr.mxu0 0.0
    %1273 = vmatpush1.msra.mxu0 0.0
    %1274 = vmatprep.subr.mxu0 0.0
    %1275 = vmatpush1.msra.mxu0 0.0
    %1276 = vmatprep.subr.mxu0 0.0
    %1277 = vmatpush1.msra.mxu0 0.0
    %1278 = vmatprep.subr.mxu0 0.0
    %1279 = vmatpush1.msra.mxu0 0.0
    %1280 = vmatprep.subr.mxu0 0.0
    %1281 = vmatpush1.msra.mxu0 0.0
    %1282 = vmatprep.subr.mxu0 0.0
    %1283 = vmatpush1.msra.mxu0 0.0
    %1284 = vmatprep.subr.mxu0 0.0
    %1285 = vmatpush1.msra.mxu0 0.0
    %1286 = vmatprep.subr.mxu0 0.0
    %1287 = vmatpush1.msra.mxu0 0.0
    %1288 = vmatprep.subr.mxu0 0.0
    %1289 = vmatpush1.msra.mxu0 0.0
    %1290 = vmatprep.subr.mxu0 0.0
    %1291 = vmatpush1.msra.mxu0 0.0
    %1292 = vmatprep.subr.mxu0 0.0
    %1293 = vmatpush1.msra.mxu0 0.0
    %1294 = vmatprep.subr.mxu0 0.0
    %1295 = vmatpush1.msra.mxu0 0.0
    %1296 = vmatprep.subr.mxu0 0.0
    %1297 = vmatpush1.msra.mxu0 0.0
    %1298 = vmatprep.subr.mxu0 0.0
    %1299 = vmatpush1.msra.mxu0 0.0
    %1300 = vmatprep.subr.mxu0 0.0
    %1301 = vmatpush1.msra.mxu0 0.0
    %1302 = vmatprep.subr.mxu0 0.0
    %1303 = vmatpush1.msra.mxu0 0.0
    %1304 = vmatprep.subr.mxu0 0.0
    %1305 = vmatpush1.msra.mxu0 0.0
    %1306 = vmatprep.subr.mxu0 0.0
    %1307 = vmatpush1.msra.mxu0 0.0
    %1308 = vmatprep.subr.mxu0 0.0
    %1309 = vmatpush1.msra.mxu0 0.0
    %1310 = vmatprep.subr.mxu0 0.0
    %1311 = vmatpush1.msra.mxu0 0.0
    %1312 = vmatprep.subr.mxu0 0.0
    %1313 = vmatpush1.msra.mxu0 0.0
    %1314 = vmatprep.subr.mxu0 0.0
    %1315 = vmatpush1.msra.mxu0 0.0
    %1316 = vmatprep.subr.mxu0 0.0
    %1317 = vmatpush1.msra.mxu0 0.0
    %1318 = vmatprep.subr.mxu0 0.0
    %1319 = vmatpush1.msra.mxu0 0.0
    %1320 = vmatprep.subr.mxu0 0.0
    %1321 = vmatpush1.msra.mxu0 0.0
    %1322 = vmatprep.subr.mxu0 0.0
    %1323 = vmatpush1.msra.mxu0 0.0
    %1324 = vmatprep.subr.mxu0 0.0
    %1325 = vmatpush1.msra.mxu0 0.0
    %1326 = vmatprep.subr.mxu0 0.0
    %1327 = vmatpush1.msra.mxu0 0.0
    %1328 = vmatprep.subr.mxu0 0.0
    %1329 = vmatpush1.msra.mxu0 0.0
    %1330 = vmatprep.subr.mxu0 0.0
    %1331 = vmatpush1.msra.mxu0 0.0
    %1332 = vmatprep.subr.mxu0 0.0
    %1333 = vmatpush1.msra.mxu0 0.0
    %1334 = vmatprep.mubr.f32.mxu0 0.0
    %1335 = vmatmul.mubr.f32.gmra.mrb[0].mxu0 %v1268
    %v1336 = vpop.f32.mrb[0].mxu0
    %v1337 = vadd.f32 0.0, %v1336
    %v1338 = vpop.f32.mrb[0].mxu0
    %1339 = vdwg.mxu0
    %1340 = vrot.lane.b32.xlu0 %v472, 64
    %v1341 = vpop.permute.xlu0 %1340
    %v1344 = vsel %vm485, %v1182, 0
    %1346 = vmatprep.subr.mxu0 0.0
    %1347 = vmatpush1.msra.mxu0 %v1341
    %1348 = vmatprep.subr.mxu0 0.0
    %1349 = vmatpush1.msra.mxu0 0.0
    %1350 = vmatprep.subr.mxu0 0.0
    %1351 = vmatpush1.msra.mxu0 0.0
    %1352 = vmatprep.subr.mxu0 0.0
    %1353 = vmatpush1.msra.mxu0 0.0
    %1354 = vmatprep.subr.mxu0 0.0
    %1355 = vmatpush1.msra.mxu0 0.0
    %1356 = vmatprep.subr.mxu0 0.0
    %1357 = vmatpush1.msra.mxu0 0.0
    %1358 = vmatprep.subr.mxu0 0.0
    %1359 = vmatpush1.msra.mxu0 0.0
    %1360 = vmatprep.subr.mxu0 0.0
    %1361 = vmatpush1.msra.mxu0 0.0
    %1362 = vmatprep.subr.mxu0 0.0
    %1363 = vmatpush1.msra.mxu0 0.0
    %1364 = vmatprep.subr.mxu0 0.0
    %1365 = vmatpush1.msra.mxu0 0.0
    %1366 = vmatprep.subr.mxu0 0.0
    %1367 = vmatpush1.msra.mxu0 0.0
    %1368 = vmatprep.subr.mxu0 0.0
    %1369 = vmatpush1.msra.mxu0 0.0
    %1370 = vmatprep.subr.mxu0 0.0
    %1371 = vmatpush1.msra.mxu0 0.0
    %1372 = vmatprep.subr.mxu0 0.0
    %1373 = vmatpush1.msra.mxu0 0.0
    %1374 = vmatprep.subr.mxu0 0.0
    %1375 = vmatpush1.msra.mxu0 0.0
    %1376 = vmatprep.subr.mxu0 0.0
    %1377 = vmatpush1.msra.mxu0 0.0
    %1378 = vmatprep.subr.mxu0 0.0
    %1379 = vmatpush1.msra.mxu0 0.0
    %1380 = vmatprep.subr.mxu0 0.0
    %1381 = vmatpush1.msra.mxu0 0.0
    %1382 = vmatprep.subr.mxu0 0.0
    %1383 = vmatpush1.msra.mxu0 0.0
    %1384 = vmatprep.subr.mxu0 0.0
    %1385 = vmatpush1.msra.mxu0 0.0
    %1386 = vmatprep.subr.mxu0 0.0
    %1387 = vmatpush1.msra.mxu0 0.0
    %1388 = vmatprep.subr.mxu0 0.0
    %1389 = vmatpush1.msra.mxu0 0.0
    %1390 = vmatprep.subr.mxu0 0.0
    %1391 = vmatpush1.msra.mxu0 0.0
    %1392 = vmatprep.subr.mxu0 0.0
    %1393 = vmatpush1.msra.mxu0 0.0
    %1394 = vmatprep.subr.mxu0 0.0
    %1395 = vmatpush1.msra.mxu0 0.0
    %1396 = vmatprep.subr.mxu0 0.0
    %1397 = vmatpush1.msra.mxu0 0.0
    %1398 = vmatprep.subr.mxu0 0.0
    %1399 = vmatpush1.msra.mxu0 0.0
    %1400 = vmatprep.subr.mxu0 0.0
    %1401 = vmatpush1.msra.mxu0 0.0
    %1402 = vmatprep.subr.mxu0 0.0
    %1403 = vmatpush1.msra.mxu0 0.0
    %1404 = vmatprep.subr.mxu0 0.0
    %1405 = vmatpush1.msra.mxu0 0.0
    %1406 = vmatprep.subr.mxu0 0.0
    %1407 = vmatpush1.msra.mxu0 0.0
    %1408 = vmatprep.subr.mxu0 0.0
    %1409 = vmatpush1.msra.mxu0 0.0
    %1410 = vmatprep.mubr.f32.mxu0 0.0
    %1411 = vmatmul.mubr.f32.gmra.mrb[0].mxu0 %v1344
    %v1412 = vpop.f32.mrb[0].mxu0
    %v1413 = vadd.f32 0.0, %v1412
    %v1414 = vpop.f32.mrb[0].mxu0
    %1415 = vdwg.mxu0
    %1416 = vrot.lane.b32.xlu0 %v474, 64
    %v1417 = vpop.permute.xlu0 %1416
    %v1420 = vsel %vm485, %v1183, 0
    %1422 = vmatprep.subr.mxu0 0.0
    %1423 = vmatpush1.msra.mxu0 %v1417
    %1424 = vmatprep.subr.mxu0 0.0
    %1425 = vmatpush1.msra.mxu0 0.0
    %1426 = vmatprep.subr.mxu0 0.0
    %1427 = vmatpush1.msra.mxu0 0.0
    %1428 = vmatprep.subr.mxu0 0.0
    %1429 = vmatpush1.msra.mxu0 0.0
    %1430 = vmatprep.subr.mxu0 0.0
    %1431 = vmatpush1.msra.mxu0 0.0
    %1432 = vmatprep.subr.mxu0 0.0
    %1433 = vmatpush1.msra.mxu0 0.0
    %1434 = vmatprep.subr.mxu0 0.0
    %1435 = vmatpush1.msra.mxu0 0.0
    %1436 = vmatprep.subr.mxu0 0.0
    %1437 = vmatpush1.msra.mxu0 0.0
    %1438 = vmatprep.subr.mxu0 0.0
    %1439 = vmatpush1.msra.mxu0 0.0
    %1440 = vmatprep.subr.mxu0 0.0
    %1441 = vmatpush1.msra.mxu0 0.0
    %1442 = vmatprep.subr.mxu0 0.0
    %1443 = vmatpush1.msra.mxu0 0.0
    %1444 = vmatprep.subr.mxu0 0.0
    %1445 = vmatpush1.msra.mxu0 0.0
    %1446 = vmatprep.subr.mxu0 0.0
    %1447 = vmatpush1.msra.mxu0 0.0
    %1448 = vmatprep.subr.mxu0 0.0
    %1449 = vmatpush1.msra.mxu0 0.0
    %1450 = vmatprep.subr.mxu0 0.0
    %1451 = vmatpush1.msra.mxu0 0.0
    %1452 = vmatprep.subr.mxu0 0.0
    %1453 = vmatpush1.msra.mxu0 0.0
    %1454 = vmatprep.subr.mxu0 0.0
    %1455 = vmatpush1.msra.mxu0 0.0
    %1456 = vmatprep.subr.mxu0 0.0
    %1457 = vmatpush1.msra.mxu0 0.0
    %1458 = vmatprep.subr.mxu0 0.0
    %1459 = vmatpush1.msra.mxu0 0.0
    %1460 = vmatprep.subr.mxu0 0.0
    %1461 = vmatpush1.msra.mxu0 0.0
    %1462 = vmatprep.subr.mxu0 0.0
    %1463 = vmatpush1.msra.mxu0 0.0
    %1464 = vmatprep.subr.mxu0 0.0
    %1465 = vmatpush1.msra.mxu0 0.0
    %1466 = vmatprep.subr.mxu0 0.0
    %1467 = vmatpush1.msra.mxu0 0.0
    %1468 = vmatprep.subr.mxu0 0.0
    %1469 = vmatpush1.msra.mxu0 0.0
    %1470 = vmatprep.subr.mxu0 0.0
    %1471 = vmatpush1.msra.mxu0 0.0
    %1472 = vmatprep.subr.mxu0 0.0
    %1473 = vmatpush1.msra.mxu0 0.0
    %1474 = vmatprep.subr.mxu0 0.0
    %1475 = vmatpush1.msra.mxu0 0.0
    %1476 = vmatprep.subr.mxu0 0.0
    %1477 = vmatpush1.msra.mxu0 0.0
    %1478 = vmatprep.subr.mxu0 0.0
    %1479 = vmatpush1.msra.mxu0 0.0
    %1480 = vmatprep.subr.mxu0 0.0
    %1481 = vmatpush1.msra.mxu0 0.0
    %1482 = vmatprep.subr.mxu0 0.0
    %1483 = vmatpush1.msra.mxu0 0.0
    %1484 = vmatprep.subr.mxu0 0.0
    %1485 = vmatpush1.msra.mxu0 0.0
    %1486 = vmatprep.mubr.f32.mxu0 0.0
    %1487 = vmatmul.mubr.f32.gmra.mrb[0].mxu0 %v1420
    %v1488 = vpop.f32.mrb[0].mxu0
    %v1489 = vadd.f32 0.0, %v1488
    %v1490 = vpop.f32.mrb[0].mxu0
    %1491 = vdwg.mxu0
    %1492 = vrot.lane.b32.xlu0 %v476, 64
    %v1493 = vpop.permute.xlu0 %1492
    %v1496 = vsel %vm485, %v1184, 0
    %1498 = vmatprep.subr.mxu0 0.0
    %1499 = vmatpush1.msra.mxu0 %v1493
    %1500 = vmatprep.subr.mxu0 0.0
    %1501 = vmatpush1.msra.mxu0 0.0
    %1502 = vmatprep.subr.mxu0 0.0
    %1503 = vmatpush1.msra.mxu0 0.0
    %1504 = vmatprep.subr.mxu0 0.0
    %1505 = vmatpush1.msra.mxu0 0.0
    %1506 = vmatprep.subr.mxu0 0.0
    %1507 = vmatpush1.msra.mxu0 0.0
    %1508 = vmatprep.subr.mxu0 0.0
    %1509 = vmatpush1.msra.mxu0 0.0
    %1510 = vmatprep.subr.mxu0 0.0
    %1511 = vmatpush1.msra.mxu0 0.0
    %1512 = vmatprep.subr.mxu0 0.0
    %1513 = vmatpush1.msra.mxu0 0.0
    %1514 = vmatprep.subr.mxu0 0.0
    %1515 = vmatpush1.msra.mxu0 0.0
    %1516 = vmatprep.subr.mxu0 0.0
    %1517 = vmatpush1.msra.mxu0 0.0
    %1518 = vmatprep.subr.mxu0 0.0
    %1519 = vmatpush1.msra.mxu0 0.0
    %1520 = vmatprep.subr.mxu0 0.0
    %1521 = vmatpush1.msra.mxu0 0.0
    %1522 = vmatprep.subr.mxu0 0.0
    %1523 = vmatpush1.msra.mxu0 0.0
    %1524 = vmatprep.subr.mxu0 0.0
    %1525 = vmatpush1.msra.mxu0 0.0
    %1526 = vmatprep.subr.mxu0 0.0
    %1527 = vmatpush1.msra.mxu0 0.0
    %1528 = vmatprep.subr.mxu0 0.0
    %1529 = vmatpush1.msra.mxu0 0.0
    %1530 = vmatprep.subr.mxu0 0.0
    %1531 = vmatpush1.msra.mxu0 0.0
    %1532 = vmatprep.subr.mxu0 0.0
    %1533 = vmatpush1.msra.mxu0 0.0
    %1534 = vmatprep.subr.mxu0 0.0
    %1535 = vmatpush1.msra.mxu0 0.0
    %1536 = vmatprep.subr.mxu0 0.0
    %1537 = vmatpush1.msra.mxu0 0.0
    %1538 = vmatprep.subr.mxu0 0.0
    %1539 = vmatpush1.msra.mxu0 0.0
    %1540 = vmatprep.subr.mxu0 0.0
    %1541 = vmatpush1.msra.mxu0 0.0
    %1542 = vmatprep.subr.mxu0 0.0
    %1543 = vmatpush1.msra.mxu0 0.0
    %1544 = vmatprep.subr.mxu0 0.0
    %1545 = vmatpush1.msra.mxu0 0.0
    %1546 = vmatprep.subr.mxu0 0.0
    %1547 = vmatpush1.msra.mxu0 0.0
    %1548 = vmatprep.subr.mxu0 0.0
    %1549 = vmatpush1.msra.mxu0 0.0
    %1550 = vmatprep.subr.mxu0 0.0
    %1551 = vmatpush1.msra.mxu0 0.0
    %1552 = vmatprep.subr.mxu0 0.0
    %1553 = vmatpush1.msra.mxu0 0.0
    %1554 = vmatprep.subr.mxu0 0.0
    %1555 = vmatpush1.msra.mxu0 0.0
    %1556 = vmatprep.subr.mxu0 0.0
    %1557 = vmatpush1.msra.mxu0 0.0
    %1558 = vmatprep.subr.mxu0 0.0
    %1559 = vmatpush1.msra.mxu0 0.0
    %1560 = vmatprep.subr.mxu0 0.0
    %1561 = vmatpush1.msra.mxu0 0.0
    %1562 = vmatprep.mubr.f32.mxu0 0.0
    %1563 = vmatmul.mubr.f32.gmra.mrb[0].mxu0 %v1496
    %v1564 = vpop.f32.mrb[0].mxu0
    %v1565 = vadd.f32 0.0, %v1564
    %v1566 = vpop.f32.mrb[0].mxu0
    %1567 = vdwg.mxu0
    %1568 = vrot.lane.b32.xlu0 %v478, 64
    %v1569 = vpop.permute.xlu0 %1568
    %v1572 = vsel %vm485, %v1185, 0
    %1574 = vmatprep.subr.mxu0 0.0
    %1575 = vmatpush1.msra.mxu0 %v1569
    %1576 = vmatprep.subr.mxu0 0.0
    %1577 = vmatpush1.msra.mxu0 0.0
    %1578 = vmatprep.subr.mxu0 0.0
    %1579 = vmatpush1.msra.mxu0 0.0
    %1580 = vmatprep.subr.mxu0 0.0
    %1581 = vmatpush1.msra.mxu0 0.0
    %1582 = vmatprep.subr.mxu0 0.0
    %1583 = vmatpush1.msra.mxu0 0.0
    %1584 = vmatprep.subr.mxu0 0.0
    %1585 = vmatpush1.msra.mxu0 0.0
    %1586 = vmatprep.subr.mxu0 0.0
    %1587 = vmatpush1.msra.mxu0 0.0
    %1588 = vmatprep.subr.mxu0 0.0
    %1589 = vmatpush1.msra.mxu0 0.0
    %1590 = vmatprep.subr.mxu0 0.0
    %1591 = vmatpush1.msra.mxu0 0.0
    %1592 = vmatprep.subr.mxu0 0.0
    %1593 = vmatpush1.msra.mxu0 0.0
    %1594 = vmatprep.subr.mxu0 0.0
    %1595 = vmatpush1.msra.mxu0 0.0
    %1596 = vmatprep.subr.mxu0 0.0
    %1597 = vmatpush1.msra.mxu0 0.0
    %1598 = vmatprep.subr.mxu0 0.0
    %1599 = vmatpush1.msra.mxu0 0.0
    %1600 = vmatprep.subr.mxu0 0.0
    %1601 = vmatpush1.msra.mxu0 0.0
    %1602 = vmatprep.subr.mxu0 0.0
    %1603 = vmatpush1.msra.mxu0 0.0
    %1604 = vmatprep.subr.mxu0 0.0
    %1605 = vmatpush1.msra.mxu0 0.0
    %1606 = vmatprep.subr.mxu0 0.0
    %1607 = vmatpush1.msra.mxu0 0.0
    %1608 = vmatprep.subr.mxu0 0.0
    %1609 = vmatpush1.msra.mxu0 0.0
    %1610 = vmatprep.subr.mxu0 0.0
    %1611 = vmatpush1.msra.mxu0 0.0
    %1612 = vmatprep.subr.mxu0 0.0
    %1613 = vmatpush1.msra.mxu0 0.0
    %1614 = vmatprep.subr.mxu0 0.0
    %1615 = vmatpush1.msra.mxu0 0.0
    %1616 = vmatprep.subr.mxu0 0.0
    %1617 = vmatpush1.msra.mxu0 0.0
    %1618 = vmatprep.subr.mxu0 0.0
    %1619 = vmatpush1.msra.mxu0 0.0
    %1620 = vmatprep.subr.mxu0 0.0
    %1621 = vmatpush1.msra.mxu0 0.0
    %1622 = vmatprep.subr.mxu0 0.0
    %1623 = vmatpush1.msra.mxu0 0.0
    %1624 = vmatprep.subr.mxu0 0.0
    %1625 = vmatpush1.msra.mxu0 0.0
    %1626 = vmatprep.subr.mxu0 0.0
    %1627 = vmatpush1.msra.mxu0 0.0
    %1628 = vmatprep.subr.mxu0 0.0
    %1629 = vmatpush1.msra.mxu0 0.0
    %1630 = vmatprep.subr.mxu0 0.0
    %1631 = vmatpush1.msra.mxu0 0.0
    %1632 = vmatprep.subr.mxu0 0.0
    %1633 = vmatpush1.msra.mxu0 0.0
    %1634 = vmatprep.subr.mxu0 0.0
    %1635 = vmatpush1.msra.mxu0 0.0
    %1636 = vmatprep.subr.mxu0 0.0
    %1637 = vmatpush1.msra.mxu0 0.0
    %1638 = vmatprep.mubr.f32.mxu0 0.0
    %1639 = vmatmul.mubr.f32.gmra.mrb[0].mxu0 %v1572
    %v1640 = vpop.f32.mrb[0].mxu0
    %v1641 = vadd.f32 0.0, %v1640
    %v1642 = vpop.f32.mrb[0].mxu0
    %1643 = vdwg.mxu0
    %1644 = vrot.lane.b32.xlu0 %v480, 64
    %v1645 = vpop.permute.xlu0 %1644
    %v1648 = vsel %vm485, %v1186, 0
    %1650 = vmatprep.subr.mxu0 0.0
    %1651 = vmatpush1.msra.mxu0 %v1645
    %1652 = vmatprep.subr.mxu0 0.0
    %1653 = vmatpush1.msra.mxu0 0.0
    %1654 = vmatprep.subr.mxu0 0.0
    %1655 = vmatpush1.msra.mxu0 0.0
    %1656 = vmatprep.subr.mxu0 0.0
    %1657 = vmatpush1.msra.mxu0 0.0
    %1658 = vmatprep.subr.mxu0 0.0
    %1659 = vmatpush1.msra.mxu0 0.0
    %1660 = vmatprep.subr.mxu0 0.0
    %1661 = vmatpush1.msra.mxu0 0.0
    %1662 = vmatprep.subr.mxu0 0.0
    %1663 = vmatpush1.msra.mxu0 0.0
    %1664 = vmatprep.subr.mxu0 0.0
    %1665 = vmatpush1.msra.mxu0 0.0
    %1666 = vmatprep.subr.mxu0 0.0
    %1667 = vmatpush1.msra.mxu0 0.0
    %1668 = vmatprep.subr.mxu0 0.0
    %1669 = vmatpush1.msra.mxu0 0.0
    %1670 = vmatprep.subr.mxu0 0.0
    %1671 = vmatpush1.msra.mxu0 0.0
    %1672 = vmatprep.subr.mxu0 0.0
    %1673 = vmatpush1.msra.mxu0 0.0
    %1674 = vmatprep.subr.mxu0 0.0
    %1675 = vmatpush1.msra.mxu0 0.0
    %1676 = vmatprep.subr.mxu0 0.0
    %1677 = vmatpush1.msra.mxu0 0.0
    %1678 = vmatprep.subr.mxu0 0.0
    %1679 = vmatpush1.msra.mxu0 0.0
    %1680 = vmatprep.subr.mxu0 0.0
    %1681 = vmatpush1.msra.mxu0 0.0
    %1682 = vmatprep.subr.mxu0 0.0
    %1683 = vmatpush1.msra.mxu0 0.0
    %1684 = vmatprep.subr.mxu0 0.0
    %1685 = vmatpush1.msra.mxu0 0.0
    %1686 = vmatprep.subr.mxu0 0.0
    %1687 = vmatpush1.msra.mxu0 0.0
    %1688 = vmatprep.subr.mxu0 0.0
    %1689 = vmatpush1.msra.mxu0 0.0
    %1690 = vmatprep.subr.mxu0 0.0
    %1691 = vmatpush1.msra.mxu0 0.0
    %1692 = vmatprep.subr.mxu0 0.0
    %1693 = vmatpush1.msra.mxu0 0.0
    %1694 = vmatprep.subr.mxu0 0.0
    %1695 = vmatpush1.msra.mxu0 0.0
    %1696 = vmatprep.subr.mxu0 0.0
    %1697 = vmatpush1.msra.mxu0 0.0
    %1698 = vmatprep.subr.mxu0 0.0
    %1699 = vmatpush1.msra.mxu0 0.0
    %1700 = vmatprep.subr.mxu0 0.0
    %1701 = vmatpush1.msra.mxu0 0.0
    %1702 = vmatprep.subr.mxu0 0.0
    %1703 = vmatpush1.msra.mxu0 0.0
    %1704 = vmatprep.subr.mxu0 0.0
    %1705 = vmatpush1.msra.mxu0 0.0
    %1706 = vmatprep.subr.mxu0 0.0
    %1707 = vmatpush1.msra.mxu0 0.0
    %1708 = vmatprep.subr.mxu0 0.0
    %1709 = vmatpush1.msra.mxu0 0.0
    %1710 = vmatprep.subr.mxu0 0.0
    %1711 = vmatpush1.msra.mxu0 0.0
    %1712 = vmatprep.subr.mxu0 0.0
    %1713 = vmatpush1.msra.mxu0 0.0
    %1714 = vmatprep.mubr.f32.mxu0 0.0
    %1715 = vmatmul.mubr.f32.gmra.mrb[0].mxu0 %v1648
    %v1716 = vpop.f32.mrb[0].mxu0
    %v1717 = vadd.f32 0.0, %v1716
    %v1718 = vpop.f32.mrb[0].mxu0
    %1719 = vdwg.mxu0
    %1720 = vrot.lane.b32.xlu0 %v482, 64
    %v1721 = vpop.permute.xlu0 %1720
    %v1724 = vsel %vm485, %v1187, 0
    %1726 = vmatprep.subr.mxu0 0.0
    %1727 = vmatpush1.msra.mxu0 %v1721
    %1728 = vmatprep.subr.mxu0 0.0
    %1729 = vmatpush1.msra.mxu0 0.0
    %1730 = vmatprep.subr.mxu0 0.0
    %1731 = vmatpush1.msra.mxu0 0.0
    %1732 = vmatprep.subr.mxu0 0.0
    %1733 = vmatpush1.msra.mxu0 0.0
    %1734 = vmatprep.subr.mxu0 0.0
    %1735 = vmatpush1.msra.mxu0 0.0
    %1736 = vmatprep.subr.mxu0 0.0
    %1737 = vmatpush1.msra.mxu0 0.0
    %1738 = vmatprep.subr.mxu0 0.0
    %1739 = vmatpush1.msra.mxu0 0.0
    %1740 = vmatprep.subr.mxu0 0.0
    %1741 = vmatpush1.msra.mxu0 0.0
    %1742 = vmatprep.subr.mxu0 0.0
    %1743 = vmatpush1.msra.mxu0 0.0
    %1744 = vmatprep.subr.mxu0 0.0
    %1745 = vmatpush1.msra.mxu0 0.0
    %1746 = vmatprep.subr.mxu0 0.0
    %1747 = vmatpush1.msra.mxu0 0.0
    %1748 = vmatprep.subr.mxu0 0.0
    %1749 = vmatpush1.msra.mxu0 0.0
    %1750 = vmatprep.subr.mxu0 0.0
    %1751 = vmatpush1.msra.mxu0 0.0
    %1752 = vmatprep.subr.mxu0 0.0
    %1753 = vmatpush1.msra.mxu0 0.0
    %1754 = vmatprep.subr.mxu0 0.0
    %1755 = vmatpush1.msra.mxu0 0.0
    %1756 = vmatprep.subr.mxu0 0.0
    %1757 = vmatpush1.msra.mxu0 0.0
    %1758 = vmatprep.subr.mxu0 0.0
    %1759 = vmatpush1.msra.mxu0 0.0
    %1760 = vmatprep.subr.mxu0 0.0
    %1761 = vmatpush1.msra.mxu0 0.0
    %1762 = vmatprep.subr.mxu0 0.0
    %1763 = vmatpush1.msra.mxu0 0.0
    %1764 = vmatprep.subr.mxu0 0.0
    %1765 = vmatpush1.msra.mxu0 0.0
    %1766 = vmatprep.subr.mxu0 0.0
    %1767 = vmatpush1.msra.mxu0 0.0
    %1768 = vmatprep.subr.mxu0 0.0
    %1769 = vmatpush1.msra.mxu0 0.0
    %1770 = vmatprep.subr.mxu0 0.0
    %1771 = vmatpush1.msra.mxu0 0.0
    %1772 = vmatprep.subr.mxu0 0.0
    %1773 = vmatpush1.msra.mxu0 0.0
    %1774 = vmatprep.subr.mxu0 0.0
    %1775 = vmatpush1.msra.mxu0 0.0
    %1776 = vmatprep.subr.mxu0 0.0
    %1777 = vmatpush1.msra.mxu0 0.0
    %1778 = vmatprep.subr.mxu0 0.0
    %1779 = vmatpush1.msra.mxu0 0.0
    %1780 = vmatprep.subr.mxu0 0.0
    %1781 = vmatpush1.msra.mxu0 0.0
    %1782 = vmatprep.subr.mxu0 0.0
    %1783 = vmatpush1.msra.mxu0 0.0
    %1784 = vmatprep.subr.mxu0 0.0
    %1785 = vmatpush1.msra.mxu0 0.0
    %1786 = vmatprep.subr.mxu0 0.0
    %1787 = vmatpush1.msra.mxu0 0.0
    %1788 = vmatprep.subr.mxu0 0.0
    %1789 = vmatpush1.msra.mxu0 0.0
    %1790 = vmatprep.mubr.f32.mxu0 0.0
    %1791 = vmatmul.mubr.f32.gmra.mrb[0].mxu0 %v1724
    %v1792 = vpop.f32.mrb[0].mxu0
    %v1793 = vadd.f32 0.0, %v1792
    %v1794 = vpop.f32.mrb[0].mxu0
    %1795 = vdwg.mxu0
    %1798 = vrot.lane.b32.xlu0 %v1413, 8
    %v1799 = vpop.permute.xlu0 %1798
    %1800 = vrot.lane.b32.xlu0 %v1489, 8
    %v1801 = vpop.permute.xlu0 %1800
    %1806 = vrot.lane.b32.xlu0 %v1565, 16
    %v1807 = vpop.permute.xlu0 %1806
    %1808 = vrot.lane.b32.xlu0 %v1641, 16
    %v1809 = vpop.permute.xlu0 %1808
    %1814 = vrot.lane.b32.xlu0 %v1717, 24
    %v1815 = vpop.permute.xlu0 %1814
    %1816 = vrot.lane.b32.xlu0 %v1793, 24
    %v1817 = vpop.permute.xlu0 %1816
    %v1820 = vsel %vm485, %v1261, %v1799
    %v1821 = vsel %vm485, %v1337, %v1801
    %v1822 = vsel %vm255, %v1820, %v1807
    %v1823 = vsel %vm255, %v1821, %v1809
    %vm1824 = vcmask 195584
    %v1825 = vsel %vm1824, %v1822, %v1815
    %v1826 = vsel %vm1824, %v1823, %v1817
    %v1828 = vlaneseq
    %v1829 = vshrl.u32 %v1828, 7
    %v1830 = vsub.s32 0, %v1829
    %v1831 = vrot.slane %v362, %v1830
    %v1834 = vsel %vm387, %v1825, 0
    %v1837 = vsel %vm387, %v1826, 0
    %1839 = vmatprep.subr.mxu0 0.0
    %1840 = vmatpush1.msra.mxu0 %v358
    %1841 = vmatprep.subr.mxu0 0.0
    %1842 = vmatpush1.msra.mxu0 %v359
    %1843 = vmatprep.subr.mxu0 0.0
    %1844 = vmatpush1.msra.mxu0 %v360
    %1845 = vmatprep.subr.mxu0 0.0
    %1846 = vmatpush1.msra.mxu0 %v361
    %1847 = vmatprep.subr.mxu0 0.0
    %1848 = vmatpush1.msra.mxu0 0.0
    %1849 = vmatprep.subr.mxu0 0.0
    %1850 = vmatpush1.msra.mxu0 0.0
    %1851 = vmatprep.subr.mxu0 0.0
    %1852 = vmatpush1.msra.mxu0 0.0
    %1853 = vmatprep.subr.mxu0 0.0
    %1854 = vmatpush1.msra.mxu0 0.0
    %1855 = vmatprep.subr.mxu0 0.0
    %1856 = vmatpush1.msra.mxu0 0.0
    %1857 = vmatprep.subr.mxu0 0.0
    %1858 = vmatpush1.msra.mxu0 0.0
    %1859 = vmatprep.subr.mxu0 0.0
    %1860 = vmatpush1.msra.mxu0 0.0
    %1861 = vmatprep.subr.mxu0 0.0
    %1862 = vmatpush1.msra.mxu0 0.0
    %1863 = vmatprep.subr.mxu0 0.0
    %1864 = vmatpush1.msra.mxu0 0.0
    %1865 = vmatprep.subr.mxu0 0.0
    %1866 = vmatpush1.msra.mxu0 0.0
    %1867 = vmatprep.subr.mxu0 0.0
    %1868 = vmatpush1.msra.mxu0 0.0
    %1869 = vmatprep.subr.mxu0 0.0
    %1870 = vmatpush1.msra.mxu0 0.0
    %1871 = vmatprep.subr.mxu0 0.0
    %1872 = vmatpush1.msra.mxu0 0.0
    %1873 = vmatprep.subr.mxu0 0.0
    %1874 = vmatpush1.msra.mxu0 0.0
    %1875 = vmatprep.subr.mxu0 0.0
    %1876 = vmatpush1.msra.mxu0 0.0
    %1877 = vmatprep.subr.mxu0 0.0
    %1878 = vmatpush1.msra.mxu0 0.0
    %1879 = vmatprep.subr.mxu0 0.0
    %1880 = vmatpush1.msra.mxu0 0.0
    %1881 = vmatprep.subr.mxu0 0.0
    %1882 = vmatpush1.msra.mxu0 0.0
    %1883 = vmatprep.subr.mxu0 0.0
    %1884 = vmatpush1.msra.mxu0 0.0
    %1885 = vmatprep.subr.mxu0 0.0
    %1886 = vmatpush1.msra.mxu0 0.0
    %1887 = vmatprep.subr.mxu0 0.0
    %1888 = vmatpush1.msra.mxu0 0.0
    %1889 = vmatprep.subr.mxu0 0.0
    %1890 = vmatpush1.msra.mxu0 0.0
    %1891 = vmatprep.subr.mxu0 0.0
    %1892 = vmatpush1.msra.mxu0 0.0
    %1893 = vmatprep.subr.mxu0 0.0
    %1894 = vmatpush1.msra.mxu0 0.0
    %1895 = vmatprep.subr.mxu0 0.0
    %1896 = vmatpush1.msra.mxu0 0.0
    %1897 = vmatprep.subr.mxu0 0.0
    %1898 = vmatpush1.msra.mxu0 0.0
    %1899 = vmatprep.subr.mxu0 0.0
    %1900 = vmatpush1.msra.mxu0 0.0
    %1901 = vmatprep.subr.mxu0 0.0
    %1902 = vmatpush1.msra.mxu0 0.0
    %1903 = vmatprep.mubr.f32.mxu0 0.0
    %1904 = vmatmul.mubr.f32.gmra.mrb[0].mxu0 %v1834
    %v1905 = vpop.f32.mrb[0].mxu0
    %v1906 = vadd.f32 %v1831, %v1905
    %v1907 = vpop.f32.mrb[0].mxu0
    %1908 = vmatprep.mubr.f32.mxu0 0.0
    %1909 = vmatmul.mubr.f32.gmra.mrb[0].mxu0 %v1837
    %v1910 = vpop.f32.mrb[0].mxu0
    %v1911 = vadd.f32 %v1831, %v1910
    %v1912 = vpop.f32.mrb[0].mxu0
    %1913 = vdwg.mxu0
    %v1914 = vadd.f32 %v351, %v1906
    %v1915 = vadd.f32 %v352, %v1911
    %v1916 = vsel %vm387, %v1914, 0.0
    %1917 = vadd.xlane.f32.xlu0 %v1916
    %v1918 = vpop.xlane.xlu0 %1917
    %v1919 = vsel %vm387, %v1915, 0.0
    %1920 = vadd.xlane.f32.xlu0 %v1919
    %v1921 = vpop.xlane.xlu0 %1920
    %v1922 = vrcp.pop 32.0
    %v1923 = vmul.f32 %v1918, %v1922
    %v1924 = vmul.f32 %v1921, %v1922
    %v1925 = vsub.f32 %v1914, %v1923
    %v1926 = vsub.f32 %v1915, %v1924
    %v1927 = vmul.f32 %v1925, %v1925
    %v1928 = vmul.f32 %v1926, %v1926
    %v1929 = vsel %vm387, %v1927, 0.0
    %1930 = vadd.xlane.f32.xlu0 %v1929
    %v1931 = vpop.xlane.xlu0 %1930
    %v1932 = vsel %vm387, %v1928, 0.0
    %1933 = vadd.xlane.f32.xlu0 %v1932
    %v1934 = vpop.xlane.xlu0 %1933
    %v1935 = vmul.f32 %v1931, %v1922
    %v1936 = vmul.f32 %v1934, %v1922
    %v1937 = vadd.f32 %v1935, 1e-05
    %v1938 = vadd.f32 %v1936, 1e-05
    %v1939 = vrsqrt.pop %v1937
    %v1940 = vrsqrt.pop %v1938
    %v1941 = vmul.f32 %v1925, %v1939
    %v1942 = vmul.f32 %v1926, %v1940
    %v1944 = vlaneseq
    %v1945 = vshrl.u32 %v1944, 7
    %v1946 = vsub.s32 0, %v1945
    %v1947 = vrot.slane %v363, %v1946
    %v1949 = vmul.f32 %v1941, %v1947
    %v1950 = vmul.f32 %v1942, %v1947
    %v1952 = vlaneseq
    %v1953 = vshrl.u32 %v1952, 7
    %v1954 = vsub.s32 0, %v1953
    %v1955 = vrot.slane %v364, %v1954
    %v1957 = vadd.f32 %v1949, %v1955
    %v1958 = vadd.f32 %v1950, %v1955
    %v1960 = vlaneseq
    %v1961 = vshrl.u32 %v1960, 7
    %v1962 = vsub.s32 0, %v1961
    %v1963 = vrot.slane %v369, %v1962
    %v1966 = vsel %vm387, %v1957, 0
    %v1969 = vsel %vm387, %v1958, 0
    %1971 = vmatprep.subr.mxu0 0.0
    %1972 = vmatpush1.msra.mxu0 %v365
    %1973 = vmatprep.subr.mxu0 0.0
    %1974 = vmatpush1.msra.mxu0 %v366
    %1975 = vmatprep.subr.mxu0 0.0
    %1976 = vmatpush1.msra.mxu0 %v367
    %1977 = vmatprep.subr.mxu0 0.0
    %1978 = vmatpush1.msra.mxu0 %v368
    %1979 = vmatprep.subr.mxu0 0.0
    %1980 = vmatpush1.msra.mxu0 0.0
    %1981 = vmatprep.subr.mxu0 0.0
    %1982 = vmatpush1.msra.mxu0 0.0
    %1983 = vmatprep.subr.mxu0 0.0
    %1984 = vmatpush1.msra.mxu0 0.0
    %1985 = vmatprep.subr.mxu0 0.0
    %1986 = vmatpush1.msra.mxu0 0.0
    %1987 = vmatprep.subr.mxu0 0.0
    %1988 = vmatpush1.msra.mxu0 0.0
    %1989 = vmatprep.subr.mxu0 0.0
    %1990 = vmatpush1.msra.mxu0 0.0
    %1991 = vmatprep.subr.mxu0 0.0
    %1992 = vmatpush1.msra.mxu0 0.0
    %1993 = vmatprep.subr.mxu0 0.0
    %1994 = vmatpush1.msra.mxu0 0.0
    %1995 = vmatprep.subr.mxu0 0.0
    %1996 = vmatpush1.msra.mxu0 0.0
    %1997 = vmatprep.subr.mxu0 0.0
    %1998 = vmatpush1.msra.mxu0 0.0
    %1999 = vmatprep.subr.mxu0 0.0
    %2000 = vmatpush1.msra.mxu0 0.0
    %2001 = vmatprep.subr.mxu0 0.0
    %2002 = vmatpush1.msra.mxu0 0.0
    %2003 = vmatprep.subr.mxu0 0.0
    %2004 = vmatpush1.msra.mxu0 0.0
    %2005 = vmatprep.subr.mxu0 0.0
    %2006 = vmatpush1.msra.mxu0 0.0
    %2007 = vmatprep.subr.mxu0 0.0
    %2008 = vmatpush1.msra.mxu0 0.0
    %2009 = vmatprep.subr.mxu0 0.0
    %2010 = vmatpush1.msra.mxu0 0.0
    %2011 = vmatprep.subr.mxu0 0.0
    %2012 = vmatpush1.msra.mxu0 0.0
    %2013 = vmatprep.subr.mxu0 0.0
    %2014 = vmatpush1.msra.mxu0 0.0
    %2015 = vmatprep.subr.mxu0 0.0
    %2016 = vmatpush1.msra.mxu0 0.0
    %2017 = vmatprep.subr.mxu0 0.0
    %2018 = vmatpush1.msra.mxu0 0.0
    %2019 = vmatprep.subr.mxu0 0.0
    %2020 = vmatpush1.msra.mxu0 0.0
    %2021 = vmatprep.subr.mxu0 0.0
    %2022 = vmatpush1.msra.mxu0 0.0
    %2023 = vmatprep.subr.mxu0 0.0
    %2024 = vmatpush1.msra.mxu0 0.0
    %2025 = vmatprep.subr.mxu0 0.0
    %2026 = vmatpush1.msra.mxu0 0.0
    %2027 = vmatprep.subr.mxu0 0.0
    %2028 = vmatpush1.msra.mxu0 0.0
    %2029 = vmatprep.subr.mxu0 0.0
    %2030 = vmatpush1.msra.mxu0 0.0
    %2031 = vmatprep.subr.mxu0 0.0
    %2032 = vmatpush1.msra.mxu0 0.0
    %2033 = vmatprep.subr.mxu0 0.0
    %2034 = vmatpush1.msra.mxu0 0.0
    %2035 = vmatprep.mubr.f32.mxu0 0.0
    %2036 = vmatmul.mubr.f32.gmra.mrb[0].mxu0 %v1966
    %v2037 = vpop.f32.mrb[0].mxu0
    %v2038 = vadd.f32 %v1963, %v2037
    %v2039 = vpop.f32.mrb[0].mxu0
    %2040 = vmatprep.mubr.f32.mxu0 0.0
    %2041 = vmatmul.mubr.f32.gmra.mrb[0].mxu0 %v1969
    %v2042 = vpop.f32.mrb[0].mxu0
    %v2043 = vadd.f32 %v1963, %v2042
    %v2044 = vpop.f32.mrb[0].mxu0
    %2045 = vdwg.mxu0
    %v2046 = vmax.f32 %v2038, 0.0
    %v2047 = vmax.f32 %v2043, 0.0
    %v2049 = vlaneseq
    %v2050 = vshrl.u32 %v2049, 7
    %v2051 = vsub.s32 0, %v2050
    %v2052 = vrot.slane %v378, %v2051
    %vm2054 = vcmask 523264
    %v2056 = vsel %vm2054, %v2046, 0
    %v2059 = vsel %vm2054, %v2047, 0
    %2061 = vmatprep.subr.mxu0 0.0
    %2062 = vmatpush1.msra.mxu0 %v370
    %2063 = vmatprep.subr.mxu0 0.0
    %2064 = vmatpush1.msra.mxu0 %v371
    %2065 = vmatprep.subr.mxu0 0.0
    %2066 = vmatpush1.msra.mxu0 %v372
    %2067 = vmatprep.subr.mxu0 0.0
    %2068 = vmatpush1.msra.mxu0 %v373
    %2069 = vmatprep.subr.mxu0 0.0
    %2070 = vmatpush1.msra.mxu0 %v374
    %2071 = vmatprep.subr.mxu0 0.0
    %2072 = vmatpush1.msra.mxu0 %v375
    %2073 = vmatprep.subr.mxu0 0.0
    %2074 = vmatpush1.msra.mxu0 %v376
    %2075 = vmatprep.subr.mxu0 0.0
    %2076 = vmatpush1.msra.mxu0 %v377
    %2077 = vmatprep.subr.mxu0 0.0
    %2078 = vmatpush1.msra.mxu0 0.0
    %2079 = vmatprep.subr.mxu0 0.0
    %2080 = vmatpush1.msra.mxu0 0.0
    %2081 = vmatprep.subr.mxu0 0.0
    %2082 = vmatpush1.msra.mxu0 0.0
    %2083 = vmatprep.subr.mxu0 0.0
    %2084 = vmatpush1.msra.mxu0 0.0
    %2085 = vmatprep.subr.mxu0 0.0
    %2086 = vmatpush1.msra.mxu0 0.0
    %2087 = vmatprep.subr.mxu0 0.0
    %2088 = vmatpush1.msra.mxu0 0.0
    %2089 = vmatprep.subr.mxu0 0.0
    %2090 = vmatpush1.msra.mxu0 0.0
    %2091 = vmatprep.subr.mxu0 0.0
    %2092 = vmatpush1.msra.mxu0 0.0
    %2093 = vmatprep.subr.mxu0 0.0
    %2094 = vmatpush1.msra.mxu0 0.0
    %2095 = vmatprep.subr.mxu0 0.0
    %2096 = vmatpush1.msra.mxu0 0.0
    %2097 = vmatprep.subr.mxu0 0.0
    %2098 = vmatpush1.msra.mxu0 0.0
    %2099 = vmatprep.subr.mxu0 0.0
    %2100 = vmatpush1.msra.mxu0 0.0
    %2101 = vmatprep.subr.mxu0 0.0
    %2102 = vmatpush1.msra.mxu0 0.0
    %2103 = vmatprep.subr.mxu0 0.0
    %2104 = vmatpush1.msra.mxu0 0.0
    %2105 = vmatprep.subr.mxu0 0.0
    %2106 = vmatpush1.msra.mxu0 0.0
    %2107 = vmatprep.subr.mxu0 0.0
    %2108 = vmatpush1.msra.mxu0 0.0
    %2109 = vmatprep.subr.mxu0 0.0
    %2110 = vmatpush1.msra.mxu0 0.0
    %2111 = vmatprep.subr.mxu0 0.0
    %2112 = vmatpush1.msra.mxu0 0.0
    %2113 = vmatprep.subr.mxu0 0.0
    %2114 = vmatpush1.msra.mxu0 0.0
    %2115 = vmatprep.subr.mxu0 0.0
    %2116 = vmatpush1.msra.mxu0 0.0
    %2117 = vmatprep.subr.mxu0 0.0
    %2118 = vmatpush1.msra.mxu0 0.0
    %2119 = vmatprep.subr.mxu0 0.0
    %2120 = vmatpush1.msra.mxu0 0.0
    %2121 = vmatprep.subr.mxu0 0.0
    %2122 = vmatpush1.msra.mxu0 0.0
    %2123 = vmatprep.subr.mxu0 0.0
    %2124 = vmatpush1.msra.mxu0 0.0
    %2125 = vmatprep.mubr.f32.mxu0 0.0
    %2126 = vmatmul.mubr.f32.gmra.mrb[0].mxu0 %v2056
    %v2127 = vpop.f32.mrb[0].mxu0
    %v2128 = vadd.f32 %v2052, %v2127
    %v2129 = vpop.f32.mrb[0].mxu0
    %2130 = vmatprep.mubr.f32.mxu0 0.0
    %2131 = vmatmul.mubr.f32.gmra.mrb[0].mxu0 %v2059
    %v2132 = vpop.f32.mrb[0].mxu0
    %v2133 = vadd.f32 %v2052, %v2132
    %v2134 = vpop.f32.mrb[0].mxu0
    %2135 = vdwg.mxu0
    %v2136 = vadd.f32 %v1957, %v2128
    %v2137 = vadd.f32 %v1958, %v2133
    %v2138 = vsel %vm387, %v2136, 0.0
    %2139 = vadd.xlane.f32.xlu0 %v2138
    %v2140 = vpop.xlane.xlu0 %2139
    %v2141 = vsel %vm387, %v2137, 0.0
    %2142 = vadd.xlane.f32.xlu0 %v2141
    %v2143 = vpop.xlane.xlu0 %2142
    %v2144 = vmul.f32 %v2140, %v1922
    %v2145 = vmul.f32 %v2143, %v1922
    %v2146 = vsub.f32 %v2136, %v2144
    %v2147 = vsub.f32 %v2137, %v2145
    %v2148 = vmul.f32 %v2146, %v2146
    %v2149 = vmul.f32 %v2147, %v2147
    %v2150 = vsel %vm387, %v2148, 0.0
    %2151 = vadd.xlane.f32.xlu0 %v2150
    %v2152 = vpop.xlane.xlu0 %2151
    %v2153 = vsel %vm387, %v2149, 0.0
    %2154 = vadd.xlane.f32.xlu0 %v2153
    %v2155 = vpop.xlane.xlu0 %2154
    %v2156 = vmul.f32 %v2152, %v1922
    %v2157 = vmul.f32 %v2155, %v1922
    %v2158 = vadd.f32 %v2156, 1e-05
    %v2159 = vadd.f32 %v2157, 1e-05
    %v2160 = vrsqrt.pop %v2158
    %v2161 = vrsqrt.pop %v2159
    %v2162 = vmul.f32 %v2146, %v2160
    %v2163 = vmul.f32 %v2147, %v2161
    %v2165 = vlaneseq
    %v2166 = vshrl.u32 %v2165, 7
    %v2167 = vsub.s32 0, %v2166
    %v2168 = vrot.slane %v379, %v2167
    %v2170 = vmul.f32 %v2162, %v2168
    %v2171 = vmul.f32 %v2163, %v2168
    %v2173 = vlaneseq
    %v2174 = vshrl.u32 %v2173, 7
    %v2175 = vsub.s32 0, %v2174
    %v2176 = vrot.slane %v380, %v2175
    %v2178 = vadd.f32 %v2170, %v2176
    %v2179 = vadd.f32 %v2171, %v2176
    %s2180 = scalar_lea.vmem %s4, 32
    %v2181 = vld [vmem:[%s2180] sm:$0xff]
    %v2182 = vld [vmem:[%s2180 + $0x8] sm:$0xff]
    %v2183 = vld [vmem:[%s2180 + $0x10] sm:$0xff]
    %v2184 = vld [vmem:[%s2180 + $0x18] sm:$0xff]
    %s2185 = scalar_lea.vmem [#allocation10], 1
    %v2186 = vld [vmem:[%s2185] sm:$0x1]
    %s2187 = scalar_lea.vmem %s6, 32
    %v2188 = vld [vmem:[%s2187] sm:$0xff]
    %v2189 = vld [vmem:[%s2187 + $0x8] sm:$0xff]
    %v2190 = vld [vmem:[%s2187 + $0x10] sm:$0xff]
    %v2191 = vld [vmem:[%s2187 + $0x18] sm:$0xff]
    %s2192 = scalar_lea.vmem [#allocation11], 1
    %v2193 = vld [vmem:[%s2192] sm:$0x1]
    %s2194 = scalar_lea.vmem [#allocation13], 1
    %v2195 = vld [vmem:[%s2194] sm:$0x1]
    %s2196 = scalar_lea.vmem [#allocation14], 1
    %v2197 = vld [vmem:[%s2196] sm:$0x1]
    %s2198 = scalar_lea.vmem %s10, 32
    %v2199 = vld [vmem:[%s2198] sm:$0xff]
    %v2200 = vld [vmem:[%s2198 + $0x8] sm:$0xff]
    %v2201 = vld [vmem:[%s2198 + $0x10] sm:$0xff]
    %v2202 = vld [vmem:[%s2198 + $0x18] sm:$0xff]
    %s2203 = scalar_lea.vmem [#allocation16], 1
    %v2204 = vld [vmem:[%s2203] sm:$0x1]
    %s2205 = scalar_lea.vmem %s12, 64
    %v2206 = vld [vmem:[%s2205] sm:$0xff]
    %v2207 = vld [vmem:[%s2205 + $0x8] sm:$0xff]
    %v2208 = vld [vmem:[%s2205 + $0x10] sm:$0xff]
    %v2209 = vld [vmem:[%s2205 + $0x18] sm:$0xff]
    %v2210 = vld [vmem:[%s2205 + $0x20] sm:$0xff]
    %v2211 = vld [vmem:[%s2205 + $0x28] sm:$0xff]
    %v2212 = vld [vmem:[%s2205 + $0x30] sm:$0xff]
    %v2213 = vld [vmem:[%s2205 + $0x38] sm:$0xff]
    %s2214 = scalar_lea.vmem [#allocation17], 1
    %v2215 = vld [vmem:[%s2214] sm:$0x1]
    %s2216 = scalar_lea.vmem [#allocation19], 1
    %v2217 = vld [vmem:[%s2216] sm:$0x1]
    %s2218 = scalar_lea.vmem [#allocation20], 1
    %v2219 = vld [vmem:[%s2218] sm:$0x1]
    %v2221 = vlaneseq
    %v2222 = vshrl.u32 %v2221, 7
    %v2223 = vsub.s32 0, %v2222
    %v2224 = vrot.slane %v2186, %v2223
    %v2227 = vsel %vm387, %v2178, 0
    %v2230 = vsel %vm387, %v2179, 0
    %2232 = vmatprep.subr.mxu0 0.0
    %2233 = vmatpush1.msra.mxu0 %v2181
    %2234 = vmatprep.subr.mxu0 0.0
    %2235 = vmatpush1.msra.mxu0 %v2182
    %2236 = vmatprep.subr.mxu0 0.0
    %2237 = vmatpush1.msra.mxu0 %v2183
    %2238 = vmatprep.subr.mxu0 0.0
    %2239 = vmatpush1.msra.mxu0 %v2184
    %2240 = vmatprep.subr.mxu0 0.0
    %2241 = vmatpush1.msra.mxu0 0.0
    %2242 = vmatprep.subr.mxu0 0.0
    %2243 = vmatpush1.msra.mxu0 0.0
    %2244 = vmatprep.subr.mxu0 0.0
    %2245 = vmatpush1.msra.mxu0 0.0
    %2246 = vmatprep.subr.mxu0 0.0
    %2247 = vmatpush1.msra.mxu0 0.0
    %2248 = vmatprep.subr.mxu0 0.0
    %2249 = vmatpush1.msra.mxu0 0.0
    %2250 = vmatprep.subr.mxu0 0.0
    %2251 = vmatpush1.msra.mxu0 0.0
    %2252 = vmatprep.subr.mxu0 0.0
    %2253 = vmatpush1.msra.mxu0 0.0
    %2254 = vmatprep.subr.mxu0 0.0
    %2255 = vmatpush1.msra.mxu0 0.0
    %2256 = vmatprep.subr.mxu0 0.0
    %2257 = vmatpush1.msra.mxu0 0.0
    %2258 = vmatprep.subr.mxu0 0.0
    %2259 = vmatpush1.msra.mxu0 0.0
    %2260 = vmatprep.subr.mxu0 0.0
    %2261 = vmatpush1.msra.mxu0 0.0
    %2262 = vmatprep.subr.mxu0 0.0
    %2263 = vmatpush1.msra.mxu0 0.0
    %2264 = vmatprep.subr.mxu0 0.0
    %2265 = vmatpush1.msra.mxu0 0.0
    %2266 = vmatprep.subr.mxu0 0.0
    %2267 = vmatpush1.msra.mxu0 0.0
    %2268 = vmatprep.subr.mxu0 0.0
    %2269 = vmatpush1.msra.mxu0 0.0
    %2270 = vmatprep.subr.mxu0 0.0
    %2271 = vmatpush1.msra.mxu0 0.0
    %2272 = vmatprep.subr.mxu0 0.0
    %2273 = vmatpush1.msra.mxu0 0.0
    %2274 = vmatprep.subr.mxu0 0.0
    %2275 = vmatpush1.msra.mxu0 0.0
    %2276 = vmatprep.subr.mxu0 0.0
    %2277 = vmatpush1.msra.mxu0 0.0
    %2278 = vmatprep.subr.mxu0 0.0
    %2279 = vmatpush1.msra.mxu0 0.0
    %2280 = vmatprep.subr.mxu0 0.0
    %2281 = vmatpush1.msra.mxu0 0.0
    %2282 = vmatprep.subr.mxu0 0.0
    %2283 = vmatpush1.msra.mxu0 0.0
    %2284 = vmatprep.subr.mxu0 0.0
    %2285 = vmatpush1.msra.mxu0 0.0
    %2286 = vmatprep.subr.mxu0 0.0
    %2287 = vmatpush1.msra.mxu0 0.0
    %2288 = vmatprep.subr.mxu0 0.0
    %2289 = vmatpush1.msra.mxu0 0.0
    %2290 = vmatprep.subr.mxu0 0.0
    %2291 = vmatpush1.msra.mxu0 0.0
    %2292 = vmatprep.subr.mxu0 0.0
    %2293 = vmatpush1.msra.mxu0 0.0
    %2294 = vmatprep.subr.mxu0 0.0
    %2295 = vmatpush1.msra.mxu0 0.0
    %2296 = vmatprep.mubr.f32.mxu0 0.0
    %2297 = vmatmul.mubr.f32.gmra.mrb[0].mxu0 %v2227
    %v2298 = vpop.f32.mrb[0].mxu0
    %v2299 = vadd.f32 %v2224, %v2298
    %v2300 = vpop.f32.mrb[0].mxu0
    %2301 = vmatprep.mubr.f32.mxu0 0.0
    %2302 = vmatmul.mubr.f32.gmra.mrb[0].mxu0 %v2230
    %v2303 = vpop.f32.mrb[0].mxu0
    %v2304 = vadd.f32 %v2224, %v2303
    %v2305 = vpop.f32.mrb[0].mxu0
    %2306 = vdwg.mxu0
    %2309 = vrot.lane.b32.xlu0 %v2299, 120
    %v2310 = vpop.permute.xlu0 %2309
    %2311 = vrot.lane.b32.xlu0 %v2304, 120
    %v2312 = vpop.permute.xlu0 %2311
    %2313 = vrot.lane.b32.xlu0 %v2299, 112
    %v2314 = vpop.permute.xlu0 %2313
    %2315 = vrot.lane.b32.xlu0 %v2304, 112
    %v2316 = vpop.permute.xlu0 %2315
    %2317 = vrot.lane.b32.xlu0 %v2299, 104
    %v2318 = vpop.permute.xlu0 %2317
    %2319 = vrot.lane.b32.xlu0 %v2304, 104
    %v2320 = vpop.permute.xlu0 %2319
    %2321 = vrot.lane.b32.xlu0 %v2299, 96
    %v2322 = vpop.permute.xlu0 %2321
    %v2323 = vsel %vm485, %v2299, 0
    %v2325 = vsel %vm485, %v2322, 0
    %2327 = vmatprep.subr.mxu0 0.0
    %2328 = vmatpush1.xpose.msra.mxu0 %v2325
    %2329 = vmatprep.subr.mxu0 0.0
    %2330 = vmatpush1.xpose.msra.mxu0 0.0
    %2331 = vmatprep.subr.mxu0 0.0
    %2332 = vmatpush1.xpose.msra.mxu0 0.0
    %2333 = vmatprep.subr.mxu0 0.0
    %2334 = vmatpush1.xpose.msra.mxu0 0.0
    %2335 = vmatprep.subr.mxu0 0.0
    %2336 = vmatpush1.xpose.msra.mxu0 0.0
    %2337 = vmatprep.subr.mxu0 0.0
    %2338 = vmatpush1.xpose.msra.mxu0 0.0
    %2339 = vmatprep.subr.mxu0 0.0
    %2340 = vmatpush1.xpose.msra.mxu0 0.0
    %2341 = vmatprep.subr.mxu0 0.0
    %2342 = vmatpush1.xpose.msra.mxu0 0.0
    %2343 = vmatprep.subr.mxu0 0.0
    %2344 = vmatpush1.xpose.msra.mxu0 0.0
    %2345 = vmatprep.subr.mxu0 0.0
    %2346 = vmatpush1.xpose.msra.mxu0 0.0
    %2347 = vmatprep.subr.mxu0 0.0
    %2348 = vmatpush1.xpose.msra.mxu0 0.0
    %2349 = vmatprep.subr.mxu0 0.0
    %2350 = vmatpush1.xpose.msra.mxu0 0.0
    %2351 = vmatprep.subr.mxu0 0.0
    %2352 = vmatpush1.xpose.msra.mxu0 0.0
    %2353 = vmatprep.subr.mxu0 0.0
    %2354 = vmatpush1.xpose.msra.mxu0 0.0
    %2355 = vmatprep.subr.mxu0 0.0
    %2356 = vmatpush1.xpose.msra.mxu0 0.0
    %2357 = vmatprep.subr.mxu0 0.0
    %2358 = vmatpush1.xpose.msra.mxu0 0.0
    %2359 = vmatprep.subr.mxu0 0.0
    %2360 = vmatpush1.xpose.msra.mxu0 0.0
    %2361 = vmatprep.subr.mxu0 0.0
    %2362 = vmatpush1.xpose.msra.mxu0 0.0
    %2363 = vmatprep.subr.mxu0 0.0
    %2364 = vmatpush1.xpose.msra.mxu0 0.0
    %2365 = vmatprep.subr.mxu0 0.0
    %2366 = vmatpush1.xpose.msra.mxu0 0.0
    %2367 = vmatprep.subr.mxu0 0.0
    %2368 = vmatpush1.xpose.msra.mxu0 0.0
    %2369 = vmatprep.subr.mxu0 0.0
    %2370 = vmatpush1.xpose.msra.mxu0 0.0
    %2371 = vmatprep.subr.mxu0 0.0
    %2372 = vmatpush1.xpose.msra.mxu0 0.0
    %2373 = vmatprep.subr.mxu0 0.0
    %2374 = vmatpush1.xpose.msra.mxu0 0.0
    %2375 = vmatprep.subr.mxu0 0.0
    %2376 = vmatpush1.xpose.msra.mxu0 0.0
    %2377 = vmatprep.subr.mxu0 0.0
    %2378 = vmatpush1.xpose.msra.mxu0 0.0
    %2379 = vmatprep.subr.mxu0 0.0
    %2380 = vmatpush1.xpose.msra.mxu0 0.0
    %2381 = vmatprep.subr.mxu0 0.0
    %2382 = vmatpush1.xpose.msra.mxu0 0.0
    %2383 = vmatprep.subr.mxu0 0.0
    %2384 = vmatpush1.xpose.msra.mxu0 0.0
    %2385 = vmatprep.subr.mxu0 0.0
    %2386 = vmatpush1.xpose.msra.mxu0 0.0
    %2387 = vmatprep.subr.mxu0 0.0
    %2388 = vmatpush1.xpose.msra.mxu0 0.0
    %2389 = vmatprep.subr.mxu0 0.0
    %2390 = vmatpush1.xpose.msra.mxu0 0.0
    %2391 = vmatprep.mubr.f32.mxu0 0.0
    %2392 = vmatmul.mubr.f32.gmra.mrb[0].mxu0 %v2323
    %v2393 = vpop.f32.mrb[0].mxu0
    %v2394 = vadd.f32 0.0, %v2393
    %v2395 = vpop.f32.mrb[0].mxu0
    %2396 = vdwg.mxu0
    %2397 = vrot.lane.b32.xlu0 %v2304, 96
    %v2398 = vpop.permute.xlu0 %2397
    %v2399 = vsel %vm485, %v2304, 0
    %v2401 = vsel %vm485, %v2398, 0
    %2403 = vmatprep.subr.mxu0 0.0
    %2404 = vmatpush1.xpose.msra.mxu0 %v2401
    %2405 = vmatprep.subr.mxu0 0.0
    %2406 = vmatpush1.xpose.msra.mxu0 0.0
    %2407 = vmatprep.subr.mxu0 0.0
    %2408 = vmatpush1.xpose.msra.mxu0 0.0
    %2409 = vmatprep.subr.mxu0 0.0
    %2410 = vmatpush1.xpose.msra.mxu0 0.0
    %2411 = vmatprep.subr.mxu0 0.0
    %2412 = vmatpush1.xpose.msra.mxu0 0.0
    %2413 = vmatprep.subr.mxu0 0.0
    %2414 = vmatpush1.xpose.msra.mxu0 0.0
    %2415 = vmatprep.subr.mxu0 0.0
    %2416 = vmatpush1.xpose.msra.mxu0 0.0
    %2417 = vmatprep.subr.mxu0 0.0
    %2418 = vmatpush1.xpose.msra.mxu0 0.0
    %2419 = vmatprep.subr.mxu0 0.0
    %2420 = vmatpush1.xpose.msra.mxu0 0.0
    %2421 = vmatprep.subr.mxu0 0.0
    %2422 = vmatpush1.xpose.msra.mxu0 0.0
    %2423 = vmatprep.subr.mxu0 0.0
    %2424 = vmatpush1.xpose.msra.mxu0 0.0
    %2425 = vmatprep.subr.mxu0 0.0
    %2426 = vmatpush1.xpose.msra.mxu0 0.0
    %2427 = vmatprep.subr.mxu0 0.0
    %2428 = vmatpush1.xpose.msra.mxu0 0.0
    %2429 = vmatprep.subr.mxu0 0.0
    %2430 = vmatpush1.xpose.msra.mxu0 0.0
    %2431 = vmatprep.subr.mxu0 0.0
    %2432 = vmatpush1.xpose.msra.mxu0 0.0
    %2433 = vmatprep.subr.mxu0 0.0
    %2434 = vmatpush1.xpose.msra.mxu0 0.0
    %2435 = vmatprep.subr.mxu0 0.0
    %2436 = vmatpush1.xpose.msra.mxu0 0.0
    %2437 = vmatprep.subr.mxu0 0.0
    %2438 = vmatpush1.xpose.msra.mxu0 0.0
    %2439 = vmatprep.subr.mxu0 0.0
    %2440 = vmatpush1.xpose.msra.mxu0 0.0
    %2441 = vmatprep.subr.mxu0 0.0
    %2442 = vmatpush1.xpose.msra.mxu0 0.0
    %2443 = vmatprep.subr.mxu0 0.0
    %2444 = vmatpush1.xpose.msra.mxu0 0.0
    %2445 = vmatprep.subr.mxu0 0.0
    %2446 = vmatpush1.xpose.msra.mxu0 0.0
    %2447 = vmatprep.subr.mxu0 0.0
    %2448 = vmatpush1.xpose.msra.mxu0 0.0
    %2449 = vmatprep.subr.mxu0 0.0
    %2450 = vmatpush1.xpose.msra.mxu0 0.0
    %2451 = vmatprep.subr.mxu0 0.0
    %2452 = vmatpush1.xpose.msra.mxu0 0.0
    %2453 = vmatprep.subr.mxu0 0.0
    %2454 = vmatpush1.xpose.msra.mxu0 0.0
    %2455 = vmatprep.subr.mxu0 0.0
    %2456 = vmatpush1.xpose.msra.mxu0 0.0
    %2457 = vmatprep.subr.mxu0 0.0
    %2458 = vmatpush1.xpose.msra.mxu0 0.0
    %2459 = vmatprep.subr.mxu0 0.0
    %2460 = vmatpush1.xpose.msra.mxu0 0.0
    %2461 = vmatprep.subr.mxu0 0.0
    %2462 = vmatpush1.xpose.msra.mxu0 0.0
    %2463 = vmatprep.subr.mxu0 0.0
    %2464 = vmatpush1.xpose.msra.mxu0 0.0
    %2465 = vmatprep.subr.mxu0 0.0
    %2466 = vmatpush1.xpose.msra.mxu0 0.0
    %2467 = vmatprep.mubr.f32.mxu0 0.0
    %2468 = vmatmul.mubr.f32.gmra.mrb[0].mxu0 %v2399
    %v2469 = vpop.f32.mrb[0].mxu0
    %v2470 = vadd.f32 0.0, %v2469
    %v2471 = vpop.f32.mrb[0].mxu0
    %2472 = vdwg.mxu0
    %2473 = vrot.lane.b32.xlu0 %v2310, 96
    %v2474 = vpop.permute.xlu0 %2473
    %v2475 = vsel %vm485, %v2310, 0
    %v2477 = vsel %vm485, %v2474, 0
    %2479 = vmatprep.subr.mxu0 0.0
    %2480 = vmatpush1.xpose.msra.mxu0 %v2477
    %2481 = vmatprep.subr.mxu0 0.0
    %2482 = vmatpush1.xpose.msra.mxu0 0.0
    %2483 = vmatprep.subr.mxu0 0.0
    %2484 = vmatpush1.xpose.msra.mxu0 0.0
    %2485 = vmatprep.subr.mxu0 0.0
    %2486 = vmatpush1.xpose.msra.mxu0 0.0
    %2487 = vmatprep.subr.mxu0 0.0
    %2488 = vmatpush1.xpose.msra.mxu0 0.0
    %2489 = vmatprep.subr.mxu0 0.0
    %2490 = vmatpush1.xpose.msra.mxu0 0.0
    %2491 = vmatprep.subr.mxu0 0.0
    %2492 = vmatpush1.xpose.msra.mxu0 0.0
    %2493 = vmatprep.subr.mxu0 0.0
    %2494 = vmatpush1.xpose.msra.mxu0 0.0
    %2495 = vmatprep.subr.mxu0 0.0
    %2496 = vmatpush1.xpose.msra.mxu0 0.0
    %2497 = vmatprep.subr.mxu0 0.0
    %2498 = vmatpush1.xpose.msra.mxu0 0.0
    %2499 = vmatprep.subr.mxu0 0.0
    %2500 = vmatpush1.xpose.msra.mxu0 0.0
    %2501 = vmatprep.subr.mxu0 0.0
    %2502 = vmatpush1.xpose.msra.mxu0 0.0
    %2503 = vmatprep.subr.mxu0 0.0
    %2504 = vmatpush1.xpose.msra.mxu0 0.0
    %2505 = vmatprep.subr.mxu0 0.0
    %2506 = vmatpush1.xpose.msra.mxu0 0.0
    %2507 = vmatprep.subr.mxu0 0.0
    %2508 = vmatpush1.xpose.msra.mxu0 0.0
    %2509 = vmatprep.subr.mxu0 0.0
    %2510 = vmatpush1.xpose.msra.mxu0 0.0
    %2511 = vmatprep.subr.mxu0 0.0
    %2512 = vmatpush1.xpose.msra.mxu0 0.0
    %2513 = vmatprep.subr.mxu0 0.0
    %2514 = vmatpush1.xpose.msra.mxu0 0.0
    %2515 = vmatprep.subr.mxu0 0.0
    %2516 = vmatpush1.xpose.msra.mxu0 0.0
    %2517 = vmatprep.subr.mxu0 0.0
    %2518 = vmatpush1.xpose.msra.mxu0 0.0
    %2519 = vmatprep.subr.mxu0 0.0
    %2520 = vmatpush1.xpose.msra.mxu0 0.0
    %2521 = vmatprep.subr.mxu0 0.0
    %2522 = vmatpush1.xpose.msra.mxu0 0.0
    %2523 = vmatprep.subr.mxu0 0.0
    %2524 = vmatpush1.xpose.msra.mxu0 0.0
    %2525 = vmatprep.subr.mxu0 0.0
    %2526 = vmatpush1.xpose.msra.mxu0 0.0
    %2527 = vmatprep.subr.mxu0 0.0
    %2528 = vmatpush1.xpose.msra.mxu0 0.0
    %2529 = vmatprep.subr.mxu0 0.0
    %2530 = vmatpush1.xpose.msra.mxu0 0.0
    %2531 = vmatprep.subr.mxu0 0.0
    %2532 = vmatpush1.xpose.msra.mxu0 0.0
    %2533 = vmatprep.subr.mxu0 0.0
    %2534 = vmatpush1.xpose.msra.mxu0 0.0
    %2535 = vmatprep.subr.mxu0 0.0
    %2536 = vmatpush1.xpose.msra.mxu0 0.0
    %2537 = vmatprep.subr.mxu0 0.0
    %2538 = vmatpush1.xpose.msra.mxu0 0.0
    %2539 = vmatprep.subr.mxu0 0.0
    %2540 = vmatpush1.xpose.msra.mxu0 0.0
    %2541 = vmatprep.subr.mxu0 0.0
    %2542 = vmatpush1.xpose.msra.mxu0 0.0
    %2543 = vmatprep.mubr.f32.mxu0 0.0
    %2544 = vmatmul.mubr.f32.gmra.mrb[0].mxu0 %v2475
    %v2545 = vpop.f32.mrb[0].mxu0
    %v2546 = vadd.f32 0.0, %v2545
    %v2547 = vpop.f32.mrb[0].mxu0
    %2548 = vdwg.mxu0
    %2549 = vrot.lane.b32.xlu0 %v2312, 96
    %v2550 = vpop.permute.xlu0 %2549
    %v2551 = vsel %vm485, %v2312, 0
    %v2553 = vsel %vm485, %v2550, 0
    %2555 = vmatprep.subr.mxu0 0.0
    %2556 = vmatpush1.xpose.msra.mxu0 %v2553
    %2557 = vmatprep.subr.mxu0 0.0
    %2558 = vmatpush1.xpose.msra.mxu0 0.0
    %2559 = vmatprep.subr.mxu0 0.0
    %2560 = vmatpush1.xpose.msra.mxu0 0.0
    %2561 = vmatprep.subr.mxu0 0.0
    %2562 = vmatpush1.xpose.msra.mxu0 0.0
    %2563 = vmatprep.subr.mxu0 0.0
    %2564 = vmatpush1.xpose.msra.mxu0 0.0
    %2565 = vmatprep.subr.mxu0 0.0
    %2566 = vmatpush1.xpose.msra.mxu0 0.0
    %2567 = vmatprep.subr.mxu0 0.0
    %2568 = vmatpush1.xpose.msra.mxu0 0.0
    %2569 = vmatprep.subr.mxu0 0.0
    %2570 = vmatpush1.xpose.msra.mxu0 0.0
    %2571 = vmatprep.subr.mxu0 0.0
    %2572 = vmatpush1.xpose.msra.mxu0 0.0
    %2573 = vmatprep.subr.mxu0 0.0
    %2574 = vmatpush1.xpose.msra.mxu0 0.0
    %2575 = vmatprep.subr.mxu0 0.0
    %2576 = vmatpush1.xpose.msra.mxu0 0.0
    %2577 = vmatprep.subr.mxu0 0.0
    %2578 = vmatpush1.xpose.msra.mxu0 0.0
    %2579 = vmatprep.subr.mxu0 0.0
    %2580 = vmatpush1.xpose.msra.mxu0 0.0
    %2581 = vmatprep.subr.mxu0 0.0
    %2582 = vmatpush1.xpose.msra.mxu0 0.0
    %2583 = vmatprep.subr.mxu0 0.0
    %2584 = vmatpush1.xpose.msra.mxu0 0.0
    %2585 = vmatprep.subr.mxu0 0.0
    %2586 = vmatpush1.xpose.msra.mxu0 0.0
    %2587 = vmatprep.subr.mxu0 0.0
    %2588 = vmatpush1.xpose.msra.mxu0 0.0
    %2589 = vmatprep.subr.mxu0 0.0
    %2590 = vmatpush1.xpose.msra.mxu0 0.0
    %2591 = vmatprep.subr.mxu0 0.0
    %2592 = vmatpush1.xpose.msra.mxu0 0.0
    %2593 = vmatprep.subr.mxu0 0.0
    %2594 = vmatpush1.xpose.msra.mxu0 0.0
    %2595 = vmatprep.subr.mxu0 0.0
    %2596 = vmatpush1.xpose.msra.mxu0 0.0
    %2597 = vmatprep.subr.mxu0 0.0
    %2598 = vmatpush1.xpose.msra.mxu0 0.0
    %2599 = vmatprep.subr.mxu0 0.0
    %2600 = vmatpush1.xpose.msra.mxu0 0.0
    %2601 = vmatprep.subr.mxu0 0.0
    %2602 = vmatpush1.xpose.msra.mxu0 0.0
    %2603 = vmatprep.subr.mxu0 0.0
    %2604 = vmatpush1.xpose.msra.mxu0 0.0
    %2605 = vmatprep.subr.mxu0 0.0
    %2606 = vmatpush1.xpose.msra.mxu0 0.0
    %2607 = vmatprep.subr.mxu0 0.0
    %2608 = vmatpush1.xpose.msra.mxu0 0.0
    %2609 = vmatprep.subr.mxu0 0.0
    %2610 = vmatpush1.xpose.msra.mxu0 0.0
    %2611 = vmatprep.subr.mxu0 0.0
    %2612 = vmatpush1.xpose.msra.mxu0 0.0
    %2613 = vmatprep.subr.mxu0 0.0
    %2614 = vmatpush1.xpose.msra.mxu0 0.0
    %2615 = vmatprep.subr.mxu0 0.0
    %2616 = vmatpush1.xpose.msra.mxu0 0.0
    %2617 = vmatprep.subr.mxu0 0.0
    %2618 = vmatpush1.xpose.msra.mxu0 0.0
    %2619 = vmatprep.mubr.f32.mxu0 0.0
    %2620 = vmatmul.mubr.f32.gmra.mrb[0].mxu0 %v2551
    %v2621 = vpop.f32.mrb[0].mxu0
    %v2622 = vadd.f32 0.0, %v2621
    %v2623 = vpop.f32.mrb[0].mxu0
    %2624 = vdwg.mxu0
    %2625 = vrot.lane.b32.xlu0 %v2314, 96
    %v2626 = vpop.permute.xlu0 %2625
    %v2627 = vsel %vm485, %v2314, 0
    %v2629 = vsel %vm485, %v2626, 0
    %2631 = vmatprep.subr.mxu0 0.0
    %2632 = vmatpush1.xpose.msra.mxu0 %v2629
    %2633 = vmatprep.subr.mxu0 0.0
    %2634 = vmatpush1.xpose.msra.mxu0 0.0
    %2635 = vmatprep.subr.mxu0 0.0
    %2636 = vmatpush1.xpose.msra.mxu0 0.0
    %2637 = vmatprep.subr.mxu0 0.0
    %2638 = vmatpush1.xpose.msra.mxu0 0.0
    %2639 = vmatprep.subr.mxu0 0.0
    %2640 = vmatpush1.xpose.msra.mxu0 0.0
    %2641 = vmatprep.subr.mxu0 0.0
    %2642 = vmatpush1.xpose.msra.mxu0 0.0
    %2643 = vmatprep.subr.mxu0 0.0
    %2644 = vmatpush1.xpose.msra.mxu0 0.0
    %2645 = vmatprep.subr.mxu0 0.0
    %2646 = vmatpush1.xpose.msra.mxu0 0.0
    %2647 = vmatprep.subr.mxu0 0.0
    %2648 = vmatpush1.xpose.msra.mxu0 0.0
    %2649 = vmatprep.subr.mxu0 0.0
    %2650 = vmatpush1.xpose.msra.mxu0 0.0
    %2651 = vmatprep.subr.mxu0 0.0
    %2652 = vmatpush1.xpose.msra.mxu0 0.0
    %2653 = vmatprep.subr.mxu0 0.0
    %2654 = vmatpush1.xpose.msra.mxu0 0.0
    %2655 = vmatprep.subr.mxu0 0.0
    %2656 = vmatpush1.xpose.msra.mxu0 0.0
    %2657 = vmatprep.subr.mxu0 0.0
    %2658 = vmatpush1.xpose.msra.mxu0 0.0
    %2659 = vmatprep.subr.mxu0 0.0
    %2660 = vmatpush1.xpose.msra.mxu0 0.0
    %2661 = vmatprep.subr.mxu0 0.0
    %2662 = vmatpush1.xpose.msra.mxu0 0.0
    %2663 = vmatprep.subr.mxu0 0.0
    %2664 = vmatpush1.xpose.msra.mxu0 0.0
    %2665 = vmatprep.subr.mxu0 0.0
    %2666 = vmatpush1.xpose.msra.mxu0 0.0
    %2667 = vmatprep.subr.mxu0 0.0
    %2668 = vmatpush1.xpose.msra.mxu0 0.0
    %2669 = vmatprep.subr.mxu0 0.0
    %2670 = vmatpush1.xpose.msra.mxu0 0.0
    %2671 = vmatprep.subr.mxu0 0.0
    %2672 = vmatpush1.xpose.msra.mxu0 0.0
    %2673 = vmatprep.subr.mxu0 0.0
    %2674 = vmatpush1.xpose.msra.mxu0 0.0
    %2675 = vmatprep.subr.mxu0 0.0
    %2676 = vmatpush1.xpose.msra.mxu0 0.0
    %2677 = vmatprep.subr.mxu0 0.0
    %2678 = vmatpush1.xpose.msra.mxu0 0.0
    %2679 = vmatprep.subr.mxu0 0.0
    %2680 = vmatpush1.xpose.msra.mxu0 0.0
    %2681 = vmatprep.subr.mxu0 0.0
    %2682 = vmatpush1.xpose.msra.mxu0 0.0
    %2683 = vmatprep.subr.mxu0 0.0
    %2684 = vmatpush1.xpose.msra.mxu0 0.0
    %2685 = vmatprep.subr.mxu0 0.0
    %2686 = vmatpush1.xpose.msra.mxu0 0.0
    %2687 = vmatprep.subr.mxu0 0.0
    %2688 = vmatpush1.xpose.msra.mxu0 0.0
    %2689 = vmatprep.subr.mxu0 0.0
    %2690 = vmatpush1.xpose.msra.mxu0 0.0
    %2691 = vmatprep.subr.mxu0 0.0
    %2692 = vmatpush1.xpose.msra.mxu0 0.0
    %2693 = vmatprep.subr.mxu0 0.0
    %2694 = vmatpush1.xpose.msra.mxu0 0.0
    %2695 = vmatprep.mubr.f32.mxu0 0.0
    %2696 = vmatmul.mubr.f32.gmra.mrb[0].mxu0 %v2627
    %v2697 = vpop.f32.mrb[0].mxu0
    %v2698 = vadd.f32 0.0, %v2697
    %v2699 = vpop.f32.mrb[0].mxu0
    %2700 = vdwg.mxu0
    %2701 = vrot.lane.b32.xlu0 %v2316, 96
    %v2702 = vpop.permute.xlu0 %2701
    %v2703 = vsel %vm485, %v2316, 0
    %v2705 = vsel %vm485, %v2702, 0
    %2707 = vmatprep.subr.mxu0 0.0
    %2708 = vmatpush1.xpose.msra.mxu0 %v2705
    %2709 = vmatprep.subr.mxu0 0.0
    %2710 = vmatpush1.xpose.msra.mxu0 0.0
    %2711 = vmatprep.subr.mxu0 0.0
    %2712 = vmatpush1.xpose.msra.mxu0 0.0
    %2713 = vmatprep.subr.mxu0 0.0
    %2714 = vmatpush1.xpose.msra.mxu0 0.0
    %2715 = vmatprep.subr.mxu0 0.0
    %2716 = vmatpush1.xpose.msra.mxu0 0.0
    %2717 = vmatprep.subr.mxu0 0.0
    %2718 = vmatpush1.xpose.msra.mxu0 0.0
    %2719 = vmatprep.subr.mxu0 0.0
    %2720 = vmatpush1.xpose.msra.mxu0 0.0
    %2721 = vmatprep.subr.mxu0 0.0
    %2722 = vmatpush1.xpose.msra.mxu0 0.0
    %2723 = vmatprep.subr.mxu0 0.0
    %2724 = vmatpush1.xpose.msra.mxu0 0.0
    %2725 = vmatprep.subr.mxu0 0.0
    %2726 = vmatpush1.xpose.msra.mxu0 0.0
    %2727 = vmatprep.subr.mxu0 0.0
    %2728 = vmatpush1.xpose.msra.mxu0 0.0
    %2729 = vmatprep.subr.mxu0 0.0
    %2730 = vmatpush1.xpose.msra.mxu0 0.0
    %2731 = vmatprep.subr.mxu0 0.0
    %2732 = vmatpush1.xpose.msra.mxu0 0.0
    %2733 = vmatprep.subr.mxu0 0.0
    %2734 = vmatpush1.xpose.msra.mxu0 0.0
    %2735 = vmatprep.subr.mxu0 0.0
    %2736 = vmatpush1.xpose.msra.mxu0 0.0
    %2737 = vmatprep.subr.mxu0 0.0
    %2738 = vmatpush1.xpose.msra.mxu0 0.0
    %2739 = vmatprep.subr.mxu0 0.0
    %2740 = vmatpush1.xpose.msra.mxu0 0.0
    %2741 = vmatprep.subr.mxu0 0.0
    %2742 = vmatpush1.xpose.msra.mxu0 0.0
    %2743 = vmatprep.subr.mxu0 0.0
    %2744 = vmatpush1.xpose.msra.mxu0 0.0
    %2745 = vmatprep.subr.mxu0 0.0
    %2746 = vmatpush1.xpose.msra.mxu0 0.0
    %2747 = vmatprep.subr.mxu0 0.0
    %2748 = vmatpush1.xpose.msra.mxu0 0.0
    %2749 = vmatprep.subr.mxu0 0.0
    %2750 = vmatpush1.xpose.msra.mxu0 0.0
    %2751 = vmatprep.subr.mxu0 0.0
    %2752 = vmatpush1.xpose.msra.mxu0 0.0
    %2753 = vmatprep.subr.mxu0 0.0
    %2754 = vmatpush1.xpose.msra.mxu0 0.0
    %2755 = vmatprep.subr.mxu0 0.0
    %2756 = vmatpush1.xpose.msra.mxu0 0.0
    %2757 = vmatprep.subr.mxu0 0.0
    %2758 = vmatpush1.xpose.msra.mxu0 0.0
    %2759 = vmatprep.subr.mxu0 0.0
    %2760 = vmatpush1.xpose.msra.mxu0 0.0
    %2761 = vmatprep.subr.mxu0 0.0
    %2762 = vmatpush1.xpose.msra.mxu0 0.0
    %2763 = vmatprep.subr.mxu0 0.0
    %2764 = vmatpush1.xpose.msra.mxu0 0.0
    %2765 = vmatprep.subr.mxu0 0.0
    %2766 = vmatpush1.xpose.msra.mxu0 0.0
    %2767 = vmatprep.subr.mxu0 0.0
    %2768 = vmatpush1.xpose.msra.mxu0 0.0
    %2769 = vmatprep.subr.mxu0 0.0
    %2770 = vmatpush1.xpose.msra.mxu0 0.0
    %2771 = vmatprep.mubr.f32.mxu0 0.0
    %2772 = vmatmul.mubr.f32.gmra.mrb[0].mxu0 %v2703
    %v2773 = vpop.f32.mrb[0].mxu0
    %v2774 = vadd.f32 0.0, %v2773
    %v2775 = vpop.f32.mrb[0].mxu0
    %2776 = vdwg.mxu0
    %2777 = vrot.lane.b32.xlu0 %v2318, 96
    %v2778 = vpop.permute.xlu0 %2777
    %v2779 = vsel %vm485, %v2318, 0
    %v2781 = vsel %vm485, %v2778, 0
    %2783 = vmatprep.subr.mxu0 0.0
    %2784 = vmatpush1.xpose.msra.mxu0 %v2781
    %2785 = vmatprep.subr.mxu0 0.0
    %2786 = vmatpush1.xpose.msra.mxu0 0.0
    %2787 = vmatprep.subr.mxu0 0.0
    %2788 = vmatpush1.xpose.msra.mxu0 0.0
    %2789 = vmatprep.subr.mxu0 0.0
    %2790 = vmatpush1.xpose.msra.mxu0 0.0
    %2791 = vmatprep.subr.mxu0 0.0
    %2792 = vmatpush1.xpose.msra.mxu0 0.0
    %2793 = vmatprep.subr.mxu0 0.0
    %2794 = vmatpush1.xpose.msra.mxu0 0.0
    %2795 = vmatprep.subr.mxu0 0.0
    %2796 = vmatpush1.xpose.msra.mxu0 0.0
    %2797 = vmatprep.subr.mxu0 0.0
    %2798 = vmatpush1.xpose.msra.mxu0 0.0
    %2799 = vmatprep.subr.mxu0 0.0
    %2800 = vmatpush1.xpose.msra.mxu0 0.0
    %2801 = vmatprep.subr.mxu0 0.0
    %2802 = vmatpush1.xpose.msra.mxu0 0.0
    %2803 = vmatprep.subr.mxu0 0.0
    %2804 = vmatpush1.xpose.msra.mxu0 0.0
    %2805 = vmatprep.subr.mxu0 0.0
    %2806 = vmatpush1.xpose.msra.mxu0 0.0
    %2807 = vmatprep.subr.mxu0 0.0
    %2808 = vmatpush1.xpose.msra.mxu0 0.0
    %2809 = vmatprep.subr.mxu0 0.0
    %2810 = vmatpush1.xpose.msra.mxu0 0.0
    %2811 = vmatprep.subr.mxu0 0.0
    %2812 = vmatpush1.xpose.msra.mxu0 0.0
    %2813 = vmatprep.subr.mxu0 0.0
    %2814 = vmatpush1.xpose.msra.mxu0 0.0
    %2815 = vmatprep.subr.mxu0 0.0
    %2816 = vmatpush1.xpose.msra.mxu0 0.0
    %2817 = vmatprep.subr.mxu0 0.0
    %2818 = vmatpush1.xpose.msra.mxu0 0.0
    %2819 = vmatprep.subr.mxu0 0.0
    %2820 = vmatpush1.xpose.msra.mxu0 0.0
    %2821 = vmatprep.subr.mxu0 0.0
    %2822 = vmatpush1.xpose.msra.mxu0 0.0
    %2823 = vmatprep.subr.mxu0 0.0
    %2824 = vmatpush1.xpose.msra.mxu0 0.0
    %2825 = vmatprep.subr.mxu0 0.0
    %2826 = vmatpush1.xpose.msra.mxu0 0.0
    %2827 = vmatprep.subr.mxu0 0.0
    %2828 = vmatpush1.xpose.msra.mxu0 0.0
    %2829 = vmatprep.subr.mxu0 0.0
    %2830 = vmatpush1.xpose.msra.mxu0 0.0
    %2831 = vmatprep.subr.mxu0 0.0
    %2832 = vmatpush1.xpose.msra.mxu0 0.0
    %2833 = vmatprep.subr.mxu0 0.0
    %2834 = vmatpush1.xpose.msra.mxu0 0.0
    %2835 = vmatprep.subr.mxu0 0.0
    %2836 = vmatpush1.xpose.msra.mxu0 0.0
    %2837 = vmatprep.subr.mxu0 0.0
    %2838 = vmatpush1.xpose.msra.mxu0 0.0
    %2839 = vmatprep.subr.mxu0 0.0
    %2840 = vmatpush1.xpose.msra.mxu0 0.0
    %2841 = vmatprep.subr.mxu0 0.0
    %2842 = vmatpush1.xpose.msra.mxu0 0.0
    %2843 = vmatprep.subr.mxu0 0.0
    %2844 = vmatpush1.xpose.msra.mxu0 0.0
    %2845 = vmatprep.subr.mxu0 0.0
    %2846 = vmatpush1.xpose.msra.mxu0 0.0
    %2847 = vmatprep.mubr.f32.mxu0 0.0
    %2848 = vmatmul.mubr.f32.gmra.mrb[0].mxu0 %v2779
    %v2849 = vpop.f32.mrb[0].mxu0
    %v2850 = vadd.f32 0.0, %v2849
    %v2851 = vpop.f32.mrb[0].mxu0
    %2852 = vdwg.mxu0
    %2853 = vrot.lane.b32.xlu0 %v2320, 96
    %v2854 = vpop.permute.xlu0 %2853
    %v2855 = vsel %vm485, %v2320, 0
    %v2857 = vsel %vm485, %v2854, 0
    %2859 = vmatprep.subr.mxu0 0.0
    %2860 = vmatpush1.xpose.msra.mxu0 %v2857
    %2861 = vmatprep.subr.mxu0 0.0
    %2862 = vmatpush1.xpose.msra.mxu0 0.0
    %2863 = vmatprep.subr.mxu0 0.0
    %2864 = vmatpush1.xpose.msra.mxu0 0.0
    %2865 = vmatprep.subr.mxu0 0.0
    %2866 = vmatpush1.xpose.msra.mxu0 0.0
    %2867 = vmatprep.subr.mxu0 0.0
    %2868 = vmatpush1.xpose.msra.mxu0 0.0
    %2869 = vmatprep.subr.mxu0 0.0
    %2870 = vmatpush1.xpose.msra.mxu0 0.0
    %2871 = vmatprep.subr.mxu0 0.0
    %2872 = vmatpush1.xpose.msra.mxu0 0.0
    %2873 = vmatprep.subr.mxu0 0.0
    %2874 = vmatpush1.xpose.msra.mxu0 0.0
    %2875 = vmatprep.subr.mxu0 0.0
    %2876 = vmatpush1.xpose.msra.mxu0 0.0
    %2877 = vmatprep.subr.mxu0 0.0
    %2878 = vmatpush1.xpose.msra.mxu0 0.0
    %2879 = vmatprep.subr.mxu0 0.0
    %2880 = vmatpush1.xpose.msra.mxu0 0.0
    %2881 = vmatprep.subr.mxu0 0.0
    %2882 = vmatpush1.xpose.msra.mxu0 0.0
    %2883 = vmatprep.subr.mxu0 0.0
    %2884 = vmatpush1.xpose.msra.mxu0 0.0
    %2885 = vmatprep.subr.mxu0 0.0
    %2886 = vmatpush1.xpose.msra.mxu0 0.0
    %2887 = vmatprep.subr.mxu0 0.0
    %2888 = vmatpush1.xpose.msra.mxu0 0.0
    %2889 = vmatprep.subr.mxu0 0.0
    %2890 = vmatpush1.xpose.msra.mxu0 0.0
    %2891 = vmatprep.subr.mxu0 0.0
    %2892 = vmatpush1.xpose.msra.mxu0 0.0
    %2893 = vmatprep.subr.mxu0 0.0
    %2894 = vmatpush1.xpose.msra.mxu0 0.0
    %2895 = vmatprep.subr.mxu0 0.0
    %2896 = vmatpush1.xpose.msra.mxu0 0.0
    %2897 = vmatprep.subr.mxu0 0.0
    %2898 = vmatpush1.xpose.msra.mxu0 0.0
    %2899 = vmatprep.subr.mxu0 0.0
    %2900 = vmatpush1.xpose.msra.mxu0 0.0
    %2901 = vmatprep.subr.mxu0 0.0
    %2902 = vmatpush1.xpose.msra.mxu0 0.0
    %2903 = vmatprep.subr.mxu0 0.0
    %2904 = vmatpush1.xpose.msra.mxu0 0.0
    %2905 = vmatprep.subr.mxu0 0.0
    %2906 = vmatpush1.xpose.msra.mxu0 0.0
    %2907 = vmatprep.subr.mxu0 0.0
    %2908 = vmatpush1.xpose.msra.mxu0 0.0
    %2909 = vmatprep.subr.mxu0 0.0
    %2910 = vmatpush1.xpose.msra.mxu0 0.0
    %2911 = vmatprep.subr.mxu0 0.0
    %2912 = vmatpush1.xpose.msra.mxu0 0.0
    %2913 = vmatprep.subr.mxu0 0.0
    %2914 = vmatpush1.xpose.msra.mxu0 0.0
    %2915 = vmatprep.subr.mxu0 0.0
    %2916 = vmatpush1.xpose.msra.mxu0 0.0
    %2917 = vmatprep.subr.mxu0 0.0
    %2918 = vmatpush1.xpose.msra.mxu0 0.0
    %2919 = vmatprep.subr.mxu0 0.0
    %2920 = vmatpush1.xpose.msra.mxu0 0.0
    %2921 = vmatprep.subr.mxu0 0.0
    %2922 = vmatpush1.xpose.msra.mxu0 0.0
    %2923 = vmatprep.mubr.f32.mxu0 0.0
    %2924 = vmatmul.mubr.f32.gmra.mrb[0].mxu0 %v2855
    %v2925 = vpop.f32.mrb[0].mxu0
    %v2926 = vadd.f32 0.0, %v2925
    %v2927 = vpop.f32.mrb[0].mxu0
    %2928 = vdwg.mxu0
    %v2929 = vmul.f32 %v2394, 0.35355338
    %v2930 = vmul.f32 %v2470, 0.35355338
    %v2931 = vmul.f32 %v2546, 0.35355338
    %v2932 = vmul.f32 %v2622, 0.35355338
    %v2933 = vmul.f32 %v2698, 0.35355338
    %v2934 = vmul.f32 %v2774, 0.35355338
    %v2935 = vmul.f32 %v2850, 0.35355338
    %v2936 = vmul.f32 %v2926, 0.35355338
    %v2937 = vsel %vm485, %v2929, -inf
    %2938 = vmax.xlane.f32.xlu0 %v2937
    %v2939 = vpop.xlane.xlu0 %2938
    %v2940 = vsel %vm485, %v2930, -inf
    %2941 = vmax.xlane.f32.xlu0 %v2940
    %v2942 = vpop.xlane.xlu0 %2941
    %v2943 = vsel %vm485, %v2931, -inf
    %2944 = vmax.xlane.f32.xlu0 %v2943
    %v2945 = vpop.xlane.xlu0 %2944
    %v2946 = vsel %vm485, %v2932, -inf
    %2947 = vmax.xlane.f32.xlu0 %v2946
    %v2948 = vpop.xlane.xlu0 %2947
    %v2949 = vsel %vm485, %v2933, -inf
    %2950 = vmax.xlane.f32.xlu0 %v2949
    %v2951 = vpop.xlane.xlu0 %2950
    %v2952 = vsel %vm485, %v2934, -inf
    %2953 = vmax.xlane.f32.xlu0 %v2952
    %v2954 = vpop.xlane.xlu0 %2953
    %v2955 = vsel %vm485, %v2935, -inf
    %2956 = vmax.xlane.f32.xlu0 %v2955
    %v2957 = vpop.xlane.xlu0 %2956
    %v2958 = vsel %vm485, %v2936, -inf
    %2959 = vmax.xlane.f32.xlu0 %v2958
    %v2960 = vpop.xlane.xlu0 %2959
    %v2961 = vsub.f32 %v2929, %v2939
    %v2962 = vsub.f32 %v2930, %v2942
    %v2963 = vsub.f32 %v2931, %v2945
    %v2964 = vsub.f32 %v2932, %v2948
    %v2965 = vsub.f32 %v2933, %v2951
    %v2966 = vsub.f32 %v2934, %v2954
    %v2967 = vsub.f32 %v2935, %v2957
    %v2968 = vsub.f32 %v2936, %v2960
    %v2969 = vmul.f32 %v2961, 1.442695
    %v2970 = vpow.pop %v2969
    %v2971 = vmul.f32 %v2962, 1.442695
    %v2972 = vpow.pop %v2971
    %v2973 = vmul.f32 %v2963, 1.442695
    %v2974 = vpow.pop %v2973
    %v2975 = vmul.f32 %v2964, 1.442695
    %v2976 = vpow.pop %v2975
    %v2977 = vmul.f32 %v2965, 1.442695
    %v2978 = vpow.pop %v2977
    %v2979 = vmul.f32 %v2966, 1.442695
    %v2980 = vpow.pop %v2979
    %v2981 = vmul.f32 %v2967, 1.442695
    %v2982 = vpow.pop %v2981
    %v2983 = vmul.f32 %v2968, 1.442695
    %v2984 = vpow.pop %v2983
    %v2985 = vsel %vm485, %v2970, 0.0
    %2986 = vadd.xlane.f32.xlu0 %v2985
    %v2987 = vpop.xlane.xlu0 %2986
    %v2988 = vsel %vm485, %v2972, 0.0
    %2989 = vadd.xlane.f32.xlu0 %v2988
    %v2990 = vpop.xlane.xlu0 %2989
    %v2991 = vsel %vm485, %v2974, 0.0
    %2992 = vadd.xlane.f32.xlu0 %v2991
    %v2993 = vpop.xlane.xlu0 %2992
    %v2994 = vsel %vm485, %v2976, 0.0
    %2995 = vadd.xlane.f32.xlu0 %v2994
    %v2996 = vpop.xlane.xlu0 %2995
    %v2997 = vsel %vm485, %v2978, 0.0
    %2998 = vadd.xlane.f32.xlu0 %v2997
    %v2999 = vpop.xlane.xlu0 %2998
    %v3000 = vsel %vm485, %v2980, 0.0
    %3001 = vadd.xlane.f32.xlu0 %v3000
    %v3002 = vpop.xlane.xlu0 %3001
    %v3003 = vsel %vm485, %v2982, 0.0
    %3004 = vadd.xlane.f32.xlu0 %v3003
    %v3005 = vpop.xlane.xlu0 %3004
    %v3006 = vsel %vm485, %v2984, 0.0
    %3007 = vadd.xlane.f32.xlu0 %v3006
    %v3008 = vpop.xlane.xlu0 %3007
    %v3009 = vrcp.pop %v2987
    %v3010 = vrcp.pop %v2990
    %v3011 = vrcp.pop %v2993
    %v3012 = vrcp.pop %v2996
    %v3013 = vrcp.pop %v2999
    %v3014 = vrcp.pop %v3002
    %v3015 = vrcp.pop %v3005
    %v3016 = vrcp.pop %v3008
    %v3017 = vmul.f32 %v2970, %v3009
    %v3018 = vmul.f32 %v2972, %v3010
    %v3019 = vmul.f32 %v2974, %v3011
    %v3020 = vmul.f32 %v2976, %v3012
    %v3021 = vmul.f32 %v2978, %v3013
    %v3022 = vmul.f32 %v2980, %v3014
    %v3023 = vmul.f32 %v2982, %v3015
    %v3024 = vmul.f32 %v2984, %v3016
    %3025 = vrot.lane.b32.xlu0 %v2299, 64
    %v3026 = vpop.permute.xlu0 %3025
    %v3029 = vsel %vm485, %v3017, 0
    %3031 = vmatprep.subr.mxu0 0.0
    %3032 = vmatpush1.msra.mxu0 %v3026
    %3033 = vmatprep.subr.mxu0 0.0
    %3034 = vmatpush1.msra.mxu0 0.0
    %3035 = vmatprep.subr.mxu0 0.0
    %3036 = vmatpush1.msra.mxu0 0.0
    %3037 = vmatprep.subr.mxu0 0.0
    %3038 = vmatpush1.msra.mxu0 0.0
    %3039 = vmatprep.subr.mxu0 0.0
    %3040 = vmatpush1.msra.mxu0 0.0
    %3041 = vmatprep.subr.mxu0 0.0
    %3042 = vmatpush1.msra.mxu0 0.0
    %3043 = vmatprep.subr.mxu0 0.0
    %3044 = vmatpush1.msra.mxu0 0.0
    %3045 = vmatprep.subr.mxu0 0.0
    %3046 = vmatpush1.msra.mxu0 0.0
    %3047 = vmatprep.subr.mxu0 0.0
    %3048 = vmatpush1.msra.mxu0 0.0
    %3049 = vmatprep.subr.mxu0 0.0
    %3050 = vmatpush1.msra.mxu0 0.0
    %3051 = vmatprep.subr.mxu0 0.0
    %3052 = vmatpush1.msra.mxu0 0.0
    %3053 = vmatprep.subr.mxu0 0.0
    %3054 = vmatpush1.msra.mxu0 0.0
    %3055 = vmatprep.subr.mxu0 0.0
    %3056 = vmatpush1.msra.mxu0 0.0
    %3057 = vmatprep.subr.mxu0 0.0
    %3058 = vmatpush1.msra.mxu0 0.0
    %3059 = vmatprep.subr.mxu0 0.0
    %3060 = vmatpush1.msra.mxu0 0.0
    %3061 = vmatprep.subr.mxu0 0.0
    %3062 = vmatpush1.msra.mxu0 0.0
    %3063 = vmatprep.subr.mxu0 0.0
    %3064 = vmatpush1.msra.mxu0 0.0
    %3065 = vmatprep.subr.mxu0 0.0
    %3066 = vmatpush1.msra.mxu0 0.0
    %3067 = vmatprep.subr.mxu0 0.0
    %3068 = vmatpush1.msra.mxu0 0.0
    %3069 = vmatprep.subr.mxu0 0.0
    %3070 = vmatpush1.msra.mxu0 0.0
    %3071 = vmatprep.subr.mxu0 0.0
    %3072 = vmatpush1.msra.mxu0 0.0
    %3073 = vmatprep.subr.mxu0 0.0
    %3074 = vmatpush1.msra.mxu0 0.0
    %3075 = vmatprep.subr.mxu0 0.0
    %3076 = vmatpush1.msra.mxu0 0.0
    %3077 = vmatprep.subr.mxu0 0.0
    %3078 = vmatpush1.msra.mxu0 0.0
    %3079 = vmatprep.subr.mxu0 0.0
    %3080 = vmatpush1.msra.mxu0 0.0
    %3081 = vmatprep.subr.mxu0 0.0
    %3082 = vmatpush1.msra.mxu0 0.0
    %3083 = vmatprep.subr.mxu0 0.0
    %3084 = vmatpush1.msra.mxu0 0.0
    %3085 = vmatprep.subr.mxu0 0.0
    %3086 = vmatpush1.msra.mxu0 0.0
    %3087 = vmatprep.subr.mxu0 0.0
    %3088 = vmatpush1.msra.mxu0 0.0
    %3089 = vmatprep.subr.mxu0 0.0
    %3090 = vmatpush1.msra.mxu0 0.0
    %3091 = vmatprep.subr.mxu0 0.0
    %3092 = vmatpush1.msra.mxu0 0.0
    %3093 = vmatprep.subr.mxu0 0.0
    %3094 = vmatpush1.msra.mxu0 0.0
    %3095 = vmatprep.mubr.f32.mxu0 0.0
    %3096 = vmatmul.mubr.f32.gmra.mrb[0].mxu0 %v3029
    %v3097 = vpop.f32.mrb[0].mxu0
    %v3098 = vadd.f32 0.0, %v3097
    %v3099 = vpop.f32.mrb[0].mxu0
    %3100 = vdwg.mxu0
    %3101 = vrot.lane.b32.xlu0 %v2304, 64
    %v3102 = vpop.permute.xlu0 %3101
    %v3105 = vsel %vm485, %v3018, 0
    %3107 = vmatprep.subr.mxu0 0.0
    %3108 = vmatpush1.msra.mxu0 %v3102
    %3109 = vmatprep.subr.mxu0 0.0
    %3110 = vmatpush1.msra.mxu0 0.0
    %3111 = vmatprep.subr.mxu0 0.0
    %3112 = vmatpush1.msra.mxu0 0.0
    %3113 = vmatprep.subr.mxu0 0.0
    %3114 = vmatpush1.msra.mxu0 0.0
    %3115 = vmatprep.subr.mxu0 0.0
    %3116 = vmatpush1.msra.mxu0 0.0
    %3117 = vmatprep.subr.mxu0 0.0
    %3118 = vmatpush1.msra.mxu0 0.0
    %3119 = vmatprep.subr.mxu0 0.0
    %3120 = vmatpush1.msra.mxu0 0.0
    %3121 = vmatprep.subr.mxu0 0.0
    %3122 = vmatpush1.msra.mxu0 0.0
    %3123 = vmatprep.subr.mxu0 0.0
    %3124 = vmatpush1.msra.mxu0 0.0
    %3125 = vmatprep.subr.mxu0 0.0
    %3126 = vmatpush1.msra.mxu0 0.0
    %3127 = vmatprep.subr.mxu0 0.0
    %3128 = vmatpush1.msra.mxu0 0.0
    %3129 = vmatprep.subr.mxu0 0.0
    %3130 = vmatpush1.msra.mxu0 0.0
    %3131 = vmatprep.subr.mxu0 0.0
    %3132 = vmatpush1.msra.mxu0 0.0
    %3133 = vmatprep.subr.mxu0 0.0
    %3134 = vmatpush1.msra.mxu0 0.0
    %3135 = vmatprep.subr.mxu0 0.0
    %3136 = vmatpush1.msra.mxu0 0.0
    %3137 = vmatprep.subr.mxu0 0.0
    %3138 = vmatpush1.msra.mxu0 0.0
    %3139 = vmatprep.subr.mxu0 0.0
    %3140 = vmatpush1.msra.mxu0 0.0
    %3141 = vmatprep.subr.mxu0 0.0
    %3142 = vmatpush1.msra.mxu0 0.0
    %3143 = vmatprep.subr.mxu0 0.0
    %3144 = vmatpush1.msra.mxu0 0.0
    %3145 = vmatprep.subr.mxu0 0.0
    %3146 = vmatpush1.msra.mxu0 0.0
    %3147 = vmatprep.subr.mxu0 0.0
    %3148 = vmatpush1.msra.mxu0 0.0
    %3149 = vmatprep.subr.mxu0 0.0
    %3150 = vmatpush1.msra.mxu0 0.0
    %3151 = vmatprep.subr.mxu0 0.0
    %3152 = vmatpush1.msra.mxu0 0.0
    %3153 = vmatprep.subr.mxu0 0.0
    %3154 = vmatpush1.msra.mxu0 0.0
    %3155 = vmatprep.subr.mxu0 0.0
    %3156 = vmatpush1.msra.mxu0 0.0
    %3157 = vmatprep.subr.mxu0 0.0
    %3158 = vmatpush1.msra.mxu0 0.0
    %3159 = vmatprep.subr.mxu0 0.0
    %3160 = vmatpush1.msra.mxu0 0.0
    %3161 = vmatprep.subr.mxu0 0.0
    %3162 = vmatpush1.msra.mxu0 0.0
    %3163 = vmatprep.subr.mxu0 0.0
    %3164 = vmatpush1.msra.mxu0 0.0
    %3165 = vmatprep.subr.mxu0 0.0
    %3166 = vmatpush1.msra.mxu0 0.0
    %3167 = vmatprep.subr.mxu0 0.0
    %3168 = vmatpush1.msra.mxu0 0.0
    %3169 = vmatprep.subr.mxu0 0.0
    %3170 = vmatpush1.msra.mxu0 0.0
    %3171 = vmatprep.mubr.f32.mxu0 0.0
    %3172 = vmatmul.mubr.f32.gmra.mrb[0].mxu0 %v3105
    %v3173 = vpop.f32.mrb[0].mxu0
    %v3174 = vadd.f32 0.0, %v3173
    %v3175 = vpop.f32.mrb[0].mxu0
    %3176 = vdwg.mxu0
    %3177 = vrot.lane.b32.xlu0 %v2310, 64
    %v3178 = vpop.permute.xlu0 %3177
    %v3181 = vsel %vm485, %v3019, 0
    %3183 = vmatprep.subr.mxu0 0.0
    %3184 = vmatpush1.msra.mxu0 %v3178
    %3185 = vmatprep.subr.mxu0 0.0
    %3186 = vmatpush1.msra.mxu0 0.0
    %3187 = vmatprep.subr.mxu0 0.0
    %3188 = vmatpush1.msra.mxu0 0.0
    %3189 = vmatprep.subr.mxu0 0.0
    %3190 = vmatpush1.msra.mxu0 0.0
    %3191 = vmatprep.subr.mxu0 0.0
    %3192 = vmatpush1.msra.mxu0 0.0
    %3193 = vmatprep.subr.mxu0 0.0
    %3194 = vmatpush1.msra.mxu0 0.0
    %3195 = vmatprep.subr.mxu0 0.0
    %3196 = vmatpush1.msra.mxu0 0.0
    %3197 = vmatprep.subr.mxu0 0.0
    %3198 = vmatpush1.msra.mxu0 0.0
    %3199 = vmatprep.subr.mxu0 0.0
    %3200 = vmatpush1.msra.mxu0 0.0
    %3201 = vmatprep.subr.mxu0 0.0
    %3202 = vmatpush1.msra.mxu0 0.0
    %3203 = vmatprep.subr.mxu0 0.0
    %3204 = vmatpush1.msra.mxu0 0.0
    %3205 = vmatprep.subr.mxu0 0.0
    %3206 = vmatpush1.msra.mxu0 0.0
    %3207 = vmatprep.subr.mxu0 0.0
    %3208 = vmatpush1.msra.mxu0 0.0
    %3209 = vmatprep.subr.mxu0 0.0
    %3210 = vmatpush1.msra.mxu0 0.0
    %3211 = vmatprep.subr.mxu0 0.0
    %3212 = vmatpush1.msra.mxu0 0.0
    %3213 = vmatprep.subr.mxu0 0.0
    %3214 = vmatpush1.msra.mxu0 0.0
    %3215 = vmatprep.subr.mxu0 0.0
    %3216 = vmatpush1.msra.mxu0 0.0
    %3217 = vmatprep.subr.mxu0 0.0
    %3218 = vmatpush1.msra.mxu0 0.0
    %3219 = vmatprep.subr.mxu0 0.0
    %3220 = vmatpush1.msra.mxu0 0.0
    %3221 = vmatprep.subr.mxu0 0.0
    %3222 = vmatpush1.msra.mxu0 0.0
    %3223 = vmatprep.subr.mxu0 0.0
    %3224 = vmatpush1.msra.mxu0 0.0
    %3225 = vmatprep.subr.mxu0 0.0
    %3226 = vmatpush1.msra.mxu0 0.0
    %3227 = vmatprep.subr.mxu0 0.0
    %3228 = vmatpush1.msra.mxu0 0.0
    %3229 = vmatprep.subr.mxu0 0.0
    %3230 = vmatpush1.msra.mxu0 0.0
    %3231 = vmatprep.subr.mxu0 0.0
    %3232 = vmatpush1.msra.mxu0 0.0
    %3233 = vmatprep.subr.mxu0 0.0
    %3234 = vmatpush1.msra.mxu0 0.0
    %3235 = vmatprep.subr.mxu0 0.0
    %3236 = vmatpush1.msra.mxu0 0.0
    %3237 = vmatprep.subr.mxu0 0.0
    %3238 = vmatpush1.msra.mxu0 0.0
    %3239 = vmatprep.subr.mxu0 0.0
    %3240 = vmatpush1.msra.mxu0 0.0
    %3241 = vmatprep.subr.mxu0 0.0
    %3242 = vmatpush1.msra.mxu0 0.0
    %3243 = vmatprep.subr.mxu0 0.0
    %3244 = vmatpush1.msra.mxu0 0.0
    %3245 = vmatprep.subr.mxu0 0.0
    %3246 = vmatpush1.msra.mxu0 0.0
    %3247 = vmatprep.mubr.f32.mxu0 0.0
    %3248 = vmatmul.mubr.f32.gmra.mrb[0].mxu0 %v3181
    %v3249 = vpop.f32.mrb[0].mxu0
    %v3250 = vadd.f32 0.0, %v3249
    %v3251 = vpop.f32.mrb[0].mxu0
    %3252 = vdwg.mxu0
    %3253 = vrot.lane.b32.xlu0 %v2312, 64
    %v3254 = vpop.permute.xlu0 %3253
    %v3257 = vsel %vm485, %v3020, 0
    %3259 = vmatprep.subr.mxu0 0.0
    %3260 = vmatpush1.msra.mxu0 %v3254
    %3261 = vmatprep.subr.mxu0 0.0
    %3262 = vmatpush1.msra.mxu0 0.0
    %3263 = vmatprep.subr.mxu0 0.0
    %3264 = vmatpush1.msra.mxu0 0.0
    %3265 = vmatprep.subr.mxu0 0.0
    %3266 = vmatpush1.msra.mxu0 0.0
    %3267 = vmatprep.subr.mxu0 0.0
    %3268 = vmatpush1.msra.mxu0 0.0
    %3269 = vmatprep.subr.mxu0 0.0
    %3270 = vmatpush1.msra.mxu0 0.0
    %3271 = vmatprep.subr.mxu0 0.0
    %3272 = vmatpush1.msra.mxu0 0.0
    %3273 = vmatprep.subr.mxu0 0.0
    %3274 = vmatpush1.msra.mxu0 0.0
    %3275 = vmatprep.subr.mxu0 0.0
    %3276 = vmatpush1.msra.mxu0 0.0
    %3277 = vmatprep.subr.mxu0 0.0
    %3278 = vmatpush1.msra.mxu0 0.0
    %3279 = vmatprep.subr.mxu0 0.0
    %3280 = vmatpush1.msra.mxu0 0.0
    %3281 = vmatprep.subr.mxu0 0.0
    %3282 = vmatpush1.msra.mxu0 0.0
    %3283 = vmatprep.subr.mxu0 0.0
    %3284 = vmatpush1.msra.mxu0 0.0
    %3285 = vmatprep.subr.mxu0 0.0
    %3286 = vmatpush1.msra.mxu0 0.0
    %3287 = vmatprep.subr.mxu0 0.0
    %3288 = vmatpush1.msra.mxu0 0.0
    %3289 = vmatprep.subr.mxu0 0.0
    %3290 = vmatpush1.msra.mxu0 0.0
    %3291 = vmatprep.subr.mxu0 0.0
    %3292 = vmatpush1.msra.mxu0 0.0
    %3293 = vmatprep.subr.mxu0 0.0
    %3294 = vmatpush1.msra.mxu0 0.0
    %3295 = vmatprep.subr.mxu0 0.0
    %3296 = vmatpush1.msra.mxu0 0.0
    %3297 = vmatprep.subr.mxu0 0.0
    %3298 = vmatpush1.msra.mxu0 0.0
    %3299 = vmatprep.subr.mxu0 0.0
    %3300 = vmatpush1.msra.mxu0 0.0
    %3301 = vmatprep.subr.mxu0 0.0
    %3302 = vmatpush1.msra.mxu0 0.0
    %3303 = vmatprep.subr.mxu0 0.0
    %3304 = vmatpush1.msra.mxu0 0.0
    %3305 = vmatprep.subr.mxu0 0.0
    %3306 = vmatpush1.msra.mxu0 0.0
    %3307 = vmatprep.subr.mxu0 0.0
    %3308 = vmatpush1.msra.mxu0 0.0
    %3309 = vmatprep.subr.mxu0 0.0
    %3310 = vmatpush1.msra.mxu0 0.0
    %3311 = vmatprep.subr.mxu0 0.0
    %3312 = vmatpush1.msra.mxu0 0.0
    %3313 = vmatprep.subr.mxu0 0.0
    %3314 = vmatpush1.msra.mxu0 0.0
    %3315 = vmatprep.subr.mxu0 0.0
    %3316 = vmatpush1.msra.mxu0 0.0
    %3317 = vmatprep.subr.mxu0 0.0
    %3318 = vmatpush1.msra.mxu0 0.0
    %3319 = vmatprep.subr.mxu0 0.0
    %3320 = vmatpush1.msra.mxu0 0.0
    %3321 = vmatprep.subr.mxu0 0.0
    %3322 = vmatpush1.msra.mxu0 0.0
    %3323 = vmatprep.mubr.f32.mxu0 0.0
    %3324 = vmatmul.mubr.f32.gmra.mrb[0].mxu0 %v3257
    %v3325 = vpop.f32.mrb[0].mxu0
    %v3326 = vadd.f32 0.0, %v3325
    %v3327 = vpop.f32.mrb[0].mxu0
    %3328 = vdwg.mxu0
    %3329 = vrot.lane.b32.xlu0 %v2314, 64
    %v3330 = vpop.permute.xlu0 %3329
    %v3333 = vsel %vm485, %v3021, 0
    %3335 = vmatprep.subr.mxu0 0.0
    %3336 = vmatpush1.msra.mxu0 %v3330
    %3337 = vmatprep.subr.mxu0 0.0
    %3338 = vmatpush1.msra.mxu0 0.0
    %3339 = vmatprep.subr.mxu0 0.0
    %3340 = vmatpush1.msra.mxu0 0.0
    %3341 = vmatprep.subr.mxu0 0.0
    %3342 = vmatpush1.msra.mxu0 0.0
    %3343 = vmatprep.subr.mxu0 0.0
    %3344 = vmatpush1.msra.mxu0 0.0
    %3345 = vmatprep.subr.mxu0 0.0
    %3346 = vmatpush1.msra.mxu0 0.0
    %3347 = vmatprep.subr.mxu0 0.0
    %3348 = vmatpush1.msra.mxu0 0.0
    %3349 = vmatprep.subr.mxu0 0.0
    %3350 = vmatpush1.msra.mxu0 0.0
    %3351 = vmatprep.subr.mxu0 0.0
    %3352 = vmatpush1.msra.mxu0 0.0
    %3353 = vmatprep.subr.mxu0 0.0
    %3354 = vmatpush1.msra.mxu0 0.0
    %3355 = vmatprep.subr.mxu0 0.0
    %3356 = vmatpush1.msra.mxu0 0.0
    %3357 = vmatprep.subr.mxu0 0.0
    %3358 = vmatpush1.msra.mxu0 0.0
    %3359 = vmatprep.subr.mxu0 0.0
    %3360 = vmatpush1.msra.mxu0 0.0
    %3361 = vmatprep.subr.mxu0 0.0
    %3362 = vmatpush1.msra.mxu0 0.0
    %3363 = vmatprep.subr.mxu0 0.0
    %3364 = vmatpush1.msra.mxu0 0.0
    %3365 = vmatprep.subr.mxu0 0.0
    %3366 = vmatpush1.msra.mxu0 0.0
    %3367 = vmatprep.subr.mxu0 0.0
    %3368 = vmatpush1.msra.mxu0 0.0
    %3369 = vmatprep.subr.mxu0 0.0
    %3370 = vmatpush1.msra.mxu0 0.0
    %3371 = vmatprep.subr.mxu0 0.0
    %3372 = vmatpush1.msra.mxu0 0.0
    %3373 = vmatprep.subr.mxu0 0.0
    %3374 = vmatpush1.msra.mxu0 0.0
    %3375 = vmatprep.subr.mxu0 0.0
    %3376 = vmatpush1.msra.mxu0 0.0
    %3377 = vmatprep.subr.mxu0 0.0
    %3378 = vmatpush1.msra.mxu0 0.0
    %3379 = vmatprep.subr.mxu0 0.0
    %3380 = vmatpush1.msra.mxu0 0.0
    %3381 = vmatprep.subr.mxu0 0.0
    %3382 = vmatpush1.msra.mxu0 0.0
    %3383 = vmatprep.subr.mxu0 0.0
    %3384 = vmatpush1.msra.mxu0 0.0
    %3385 = vmatprep.subr.mxu0 0.0
    %3386 = vmatpush1.msra.mxu0 0.0
    %3387 = vmatprep.subr.mxu0 0.0
    %3388 = vmatpush1.msra.mxu0 0.0
    %3389 = vmatprep.subr.mxu0 0.0
    %3390 = vmatpush1.msra.mxu0 0.0
    %3391 = vmatprep.subr.mxu0 0.0
    %3392 = vmatpush1.msra.mxu0 0.0
    %3393 = vmatprep.subr.mxu0 0.0
    %3394 = vmatpush1.msra.mxu0 0.0
    %3395 = vmatprep.subr.mxu0 0.0
    %3396 = vmatpush1.msra.mxu0 0.0
    %3397 = vmatprep.subr.mxu0 0.0
    %3398 = vmatpush1.msra.mxu0 0.0
    %3399 = vmatprep.mubr.f32.mxu0 0.0
    %3400 = vmatmul.mubr.f32.gmra.mrb[0].mxu0 %v3333
    %v3401 = vpop.f32.mrb[0].mxu0
    %v3402 = vadd.f32 0.0, %v3401
    %v3403 = vpop.f32.mrb[0].mxu0
    %3404 = vdwg.mxu0
    %3405 = vrot.lane.b32.xlu0 %v2316, 64
    %v3406 = vpop.permute.xlu0 %3405
    %v3409 = vsel %vm485, %v3022, 0
    %3411 = vmatprep.subr.mxu0 0.0
    %3412 = vmatpush1.msra.mxu0 %v3406
    %3413 = vmatprep.subr.mxu0 0.0
    %3414 = vmatpush1.msra.mxu0 0.0
    %3415 = vmatprep.subr.mxu0 0.0
    %3416 = vmatpush1.msra.mxu0 0.0
    %3417 = vmatprep.subr.mxu0 0.0
    %3418 = vmatpush1.msra.mxu0 0.0
    %3419 = vmatprep.subr.mxu0 0.0
    %3420 = vmatpush1.msra.mxu0 0.0
    %3421 = vmatprep.subr.mxu0 0.0
    %3422 = vmatpush1.msra.mxu0 0.0
    %3423 = vmatprep.subr.mxu0 0.0
    %3424 = vmatpush1.msra.mxu0 0.0
    %3425 = vmatprep.subr.mxu0 0.0
    %3426 = vmatpush1.msra.mxu0 0.0
    %3427 = vmatprep.subr.mxu0 0.0
    %3428 = vmatpush1.msra.mxu0 0.0
    %3429 = vmatprep.subr.mxu0 0.0
    %3430 = vmatpush1.msra.mxu0 0.0
    %3431 = vmatprep.subr.mxu0 0.0
    %3432 = vmatpush1.msra.mxu0 0.0
    %3433 = vmatprep.subr.mxu0 0.0
    %3434 = vmatpush1.msra.mxu0 0.0
    %3435 = vmatprep.subr.mxu0 0.0
    %3436 = vmatpush1.msra.mxu0 0.0
    %3437 = vmatprep.subr.mxu0 0.0
    %3438 = vmatpush1.msra.mxu0 0.0
    %3439 = vmatprep.subr.mxu0 0.0
    %3440 = vmatpush1.msra.mxu0 0.0
    %3441 = vmatprep.subr.mxu0 0.0
    %3442 = vmatpush1.msra.mxu0 0.0
    %3443 = vmatprep.subr.mxu0 0.0
    %3444 = vmatpush1.msra.mxu0 0.0
    %3445 = vmatprep.subr.mxu0 0.0
    %3446 = vmatpush1.msra.mxu0 0.0
    %3447 = vmatprep.subr.mxu0 0.0
    %3448 = vmatpush1.msra.mxu0 0.0
    %3449 = vmatprep.subr.mxu0 0.0
    %3450 = vmatpush1.msra.mxu0 0.0
    %3451 = vmatprep.subr.mxu0 0.0
    %3452 = vmatpush1.msra.mxu0 0.0
    %3453 = vmatprep.subr.mxu0 0.0
    %3454 = vmatpush1.msra.mxu0 0.0
    %3455 = vmatprep.subr.mxu0 0.0
    %3456 = vmatpush1.msra.mxu0 0.0
    %3457 = vmatprep.subr.mxu0 0.0
    %3458 = vmatpush1.msra.mxu0 0.0
    %3459 = vmatprep.subr.mxu0 0.0
    %3460 = vmatpush1.msra.mxu0 0.0
    %3461 = vmatprep.subr.mxu0 0.0
    %3462 = vmatpush1.msra.mxu0 0.0
    %3463 = vmatprep.subr.mxu0 0.0
    %3464 = vmatpush1.msra.mxu0 0.0
    %3465 = vmatprep.subr.mxu0 0.0
    %3466 = vmatpush1.msra.mxu0 0.0
    %3467 = vmatprep.subr.mxu0 0.0
    %3468 = vmatpush1.msra.mxu0 0.0
    %3469 = vmatprep.subr.mxu0 0.0
    %3470 = vmatpush1.msra.mxu0 0.0
    %3471 = vmatprep.subr.mxu0 0.0
    %3472 = vmatpush1.msra.mxu0 0.0
    %3473 = vmatprep.subr.mxu0 0.0
    %3474 = vmatpush1.msra.mxu0 0.0
    %3475 = vmatprep.mubr.f32.mxu0 0.0
    %3476 = vmatmul.mubr.f32.gmra.mrb[0].mxu0 %v3409
    %v3477 = vpop.f32.mrb[0].mxu0
    %v3478 = vadd.f32 0.0, %v3477
    %v3479 = vpop.f32.mrb[0].mxu0
    %3480 = vdwg.mxu0
    %3481 = vrot.lane.b32.xlu0 %v2318, 64
    %v3482 = vpop.permute.xlu0 %3481
    %v3485 = vsel %vm485, %v3023, 0
    %3487 = vmatprep.subr.mxu0 0.0
    %3488 = vmatpush1.msra.mxu0 %v3482
    %3489 = vmatprep.subr.mxu0 0.0
    %3490 = vmatpush1.msra.mxu0 0.0
    %3491 = vmatprep.subr.mxu0 0.0
    %3492 = vmatpush1.msra.mxu0 0.0
    %3493 = vmatprep.subr.mxu0 0.0
    %3494 = vmatpush1.msra.mxu0 0.0
    %3495 = vmatprep.subr.mxu0 0.0
    %3496 = vmatpush1.msra.mxu0 0.0
    %3497 = vmatprep.subr.mxu0 0.0
    %3498 = vmatpush1.msra.mxu0 0.0
    %3499 = vmatprep.subr.mxu0 0.0
    %3500 = vmatpush1.msra.mxu0 0.0
    %3501 = vmatprep.subr.mxu0 0.0
    %3502 = vmatpush1.msra.mxu0 0.0
    %3503 = vmatprep.subr.mxu0 0.0
    %3504 = vmatpush1.msra.mxu0 0.0
    %3505 = vmatprep.subr.mxu0 0.0
    %3506 = vmatpush1.msra.mxu0 0.0
    %3507 = vmatprep.subr.mxu0 0.0
    %3508 = vmatpush1.msra.mxu0 0.0
    %3509 = vmatprep.subr.mxu0 0.0
    %3510 = vmatpush1.msra.mxu0 0.0
    %3511 = vmatprep.subr.mxu0 0.0
    %3512 = vmatpush1.msra.mxu0 0.0
    %3513 = vmatprep.subr.mxu0 0.0
    %3514 = vmatpush1.msra.mxu0 0.0
    %3515 = vmatprep.subr.mxu0 0.0
    %3516 = vmatpush1.msra.mxu0 0.0
    %3517 = vmatprep.subr.mxu0 0.0
    %3518 = vmatpush1.msra.mxu0 0.0
    %3519 = vmatprep.subr.mxu0 0.0
    %3520 = vmatpush1.msra.mxu0 0.0
    %3521 = vmatprep.subr.mxu0 0.0
    %3522 = vmatpush1.msra.mxu0 0.0
    %3523 = vmatprep.subr.mxu0 0.0
    %3524 = vmatpush1.msra.mxu0 0.0
    %3525 = vmatprep.subr.mxu0 0.0
    %3526 = vmatpush1.msra.mxu0 0.0
    %3527 = vmatprep.subr.mxu0 0.0
    %3528 = vmatpush1.msra.mxu0 0.0
    %3529 = vmatprep.subr.mxu0 0.0
    %3530 = vmatpush1.msra.mxu0 0.0
    %3531 = vmatprep.subr.mxu0 0.0
    %3532 = vmatpush1.msra.mxu0 0.0
    %3533 = vmatprep.subr.mxu0 0.0
    %3534 = vmatpush1.msra.mxu0 0.0
    %3535 = vmatprep.subr.mxu0 0.0
    %3536 = vmatpush1.msra.mxu0 0.0
    %3537 = vmatprep.subr.mxu0 0.0
    %3538 = vmatpush1.msra.mxu0 0.0
    %3539 = vmatprep.subr.mxu0 0.0
    %3540 = vmatpush1.msra.mxu0 0.0
    %3541 = vmatprep.subr.mxu0 0.0
    %3542 = vmatpush1.msra.mxu0 0.0
    %3543 = vmatprep.subr.mxu0 0.0
    %3544 = vmatpush1.msra.mxu0 0.0
    %3545 = vmatprep.subr.mxu0 0.0
    %3546 = vmatpush1.msra.mxu0 0.0
    %3547 = vmatprep.subr.mxu0 0.0
    %3548 = vmatpush1.msra.mxu0 0.0
    %3549 = vmatprep.subr.mxu0 0.0
    %3550 = vmatpush1.msra.mxu0 0.0
    %3551 = vmatprep.mubr.f32.mxu0 0.0
    %3552 = vmatmul.mubr.f32.gmra.mrb[0].mxu0 %v3485
    %v3553 = vpop.f32.mrb[0].mxu0
    %v3554 = vadd.f32 0.0, %v3553
    %v3555 = vpop.f32.mrb[0].mxu0
    %3556 = vdwg.mxu0
    %3557 = vrot.lane.b32.xlu0 %v2320, 64
    %v3558 = vpop.permute.xlu0 %3557
    %v3561 = vsel %vm485, %v3024, 0
    %3563 = vmatprep.subr.mxu0 0.0
    %3564 = vmatpush1.msra.mxu0 %v3558
    %3565 = vmatprep.subr.mxu0 0.0
    %3566 = vmatpush1.msra.mxu0 0.0
    %3567 = vmatprep.subr.mxu0 0.0
    %3568 = vmatpush1.msra.mxu0 0.0
    %3569 = vmatprep.subr.mxu0 0.0
    %3570 = vmatpush1.msra.mxu0 0.0
    %3571 = vmatprep.subr.mxu0 0.0
    %3572 = vmatpush1.msra.mxu0 0.0
    %3573 = vmatprep.subr.mxu0 0.0
    %3574 = vmatpush1.msra.mxu0 0.0
    %3575 = vmatprep.subr.mxu0 0.0
    %3576 = vmatpush1.msra.mxu0 0.0
    %3577 = vmatprep.subr.mxu0 0.0
    %3578 = vmatpush1.msra.mxu0 0.0
    %3579 = vmatprep.subr.mxu0 0.0
    %3580 = vmatpush1.msra.mxu0 0.0
    %3581 = vmatprep.subr.mxu0 0.0
    %3582 = vmatpush1.msra.mxu0 0.0
    %3583 = vmatprep.subr.mxu0 0.0
    %3584 = vmatpush1.msra.mxu0 0.0
    %3585 = vmatprep.subr.mxu0 0.0
    %3586 = vmatpush1.msra.mxu0 0.0
    %3587 = vmatprep.subr.mxu0 0.0
    %3588 = vmatpush1.msra.mxu0 0.0
    %3589 = vmatprep.subr.mxu0 0.0
    %3590 = vmatpush1.msra.mxu0 0.0
    %3591 = vmatprep.subr.mxu0 0.0
    %3592 = vmatpush1.msra.mxu0 0.0
    %3593 = vmatprep.subr.mxu0 0.0
    %3594 = vmatpush1.msra.mxu0 0.0
    %3595 = vmatprep.subr.mxu0 0.0
    %3596 = vmatpush1.msra.mxu0 0.0
    %3597 = vmatprep.subr.mxu0 0.0
    %3598 = vmatpush1.msra.mxu0 0.0
    %3599 = vmatprep.subr.mxu0 0.0
    %3600 = vmatpush1.msra.mxu0 0.0
    %3601 = vmatprep.subr.mxu0 0.0
    %3602 = vmatpush1.msra.mxu0 0.0
    %3603 = vmatprep.subr.mxu0 0.0
    %3604 = vmatpush1.msra.mxu0 0.0
    %3605 = vmatprep.subr.mxu0 0.0
    %3606 = vmatpush1.msra.mxu0 0.0
    %3607 = vmatprep.subr.mxu0 0.0
    %3608 = vmatpush1.msra.mxu0 0.0
    %3609 = vmatprep.subr.mxu0 0.0
    %3610 = vmatpush1.msra.mxu0 0.0
    %3611 = vmatprep.subr.mxu0 0.0
    %3612 = vmatpush1.msra.mxu0 0.0
    %3613 = vmatprep.subr.mxu0 0.0
    %3614 = vmatpush1.msra.mxu0 0.0
    %3615 = vmatprep.subr.mxu0 0.0
    %3616 = vmatpush1.msra.mxu0 0.0
    %3617 = vmatprep.subr.mxu0 0.0
    %3618 = vmatpush1.msra.mxu0 0.0
    %3619 = vmatprep.subr.mxu0 0.0
    %3620 = vmatpush1.msra.mxu0 0.0
    %3621 = vmatprep.subr.mxu0 0.0
    %3622 = vmatpush1.msra.mxu0 0.0
    %3623 = vmatprep.subr.mxu0 0.0
    %3624 = vmatpush1.msra.mxu0 0.0
    %3625 = vmatprep.subr.mxu0 0.0
    %3626 = vmatpush1.msra.mxu0 0.0
    %3627 = vmatprep.mubr.f32.mxu0 0.0
    %3628 = vmatmul.mubr.f32.gmra.mrb[0].mxu0 %v3561
    %v3629 = vpop.f32.mrb[0].mxu0
    %v3630 = vadd.f32 0.0, %v3629
    %v3631 = vpop.f32.mrb[0].mxu0
    %3632 = vdwg.mxu0
    %3635 = vrot.lane.b32.xlu0 %v3250, 8
    %v3636 = vpop.permute.xlu0 %3635
    %3637 = vrot.lane.b32.xlu0 %v3326, 8
    %v3638 = vpop.permute.xlu0 %3637
    %3643 = vrot.lane.b32.xlu0 %v3402, 16
    %v3644 = vpop.permute.xlu0 %3643
    %3645 = vrot.lane.b32.xlu0 %v3478, 16
    %v3646 = vpop.permute.xlu0 %3645
    %3651 = vrot.lane.b32.xlu0 %v3554, 24
    %v3652 = vpop.permute.xlu0 %3651
    %3653 = vrot.lane.b32.xlu0 %v3630, 24
    %v3654 = vpop.permute.xlu0 %3653
    %v3657 = vsel %vm485, %v3098, %v3636
    %v3658 = vsel %vm485, %v3174, %v3638
    %v3659 = vsel %vm255, %v3657, %v3644
    %v3660 = vsel %vm255, %v3658, %v3646
    %v3661 = vsel %vm1824, %v3659, %v3652
    %v3662 = vsel %vm1824, %v3660, %v3654
    %v3664 = vlaneseq
    %v3665 = vshrl.u32 %v3664, 7
    %v3666 = vsub.s32 0, %v3665
    %v3667 = vrot.slane %v2193, %v3666
    %v3670 = vsel %vm387, %v3661, 0
    %v3673 = vsel %vm387, %v3662, 0
    %3675 = vmatprep.subr.mxu0 0.0
    %3676 = vmatpush1.msra.mxu0 %v2188
    %3677 = vmatprep.subr.mxu0 0.0
    %3678 = vmatpush1.msra.mxu0 %v2189
    %3679 = vmatprep.subr.mxu0 0.0
    %3680 = vmatpush1.msra.mxu0 %v2190
    %3681 = vmatprep.subr.mxu0 0.0
    %3682 = vmatpush1.msra.mxu0 %v2191
    %3683 = vmatprep.subr.mxu0 0.0
    %3684 = vmatpush1.msra.mxu0 0.0
    %3685 = vmatprep.subr.mxu0 0.0
    %3686 = vmatpush1.msra.mxu0 0.0
    %3687 = vmatprep.subr.mxu0 0.0
    %3688 = vmatpush1.msra.mxu0 0.0
    %3689 = vmatprep.subr.mxu0 0.0
    %3690 = vmatpush1.msra.mxu0 0.0
    %3691 = vmatprep.subr.mxu0 0.0
    %3692 = vmatpush1.msra.mxu0 0.0
    %3693 = vmatprep.subr.mxu0 0.0
    %3694 = vmatpush1.msra.mxu0 0.0
    %3695 = vmatprep.subr.mxu0 0.0
    %3696 = vmatpush1.msra.mxu0 0.0
    %3697 = vmatprep.subr.mxu0 0.0
    %3698 = vmatpush1.msra.mxu0 0.0
    %3699 = vmatprep.subr.mxu0 0.0
    %3700 = vmatpush1.msra.mxu0 0.0
    %3701 = vmatprep.subr.mxu0 0.0
    %3702 = vmatpush1.msra.mxu0 0.0
    %3703 = vmatprep.subr.mxu0 0.0
    %3704 = vmatpush1.msra.mxu0 0.0
    %3705 = vmatprep.subr.mxu0 0.0
    %3706 = vmatpush1.msra.mxu0 0.0
    %3707 = vmatprep.subr.mxu0 0.0
    %3708 = vmatpush1.msra.mxu0 0.0
    %3709 = vmatprep.subr.mxu0 0.0
    %3710 = vmatpush1.msra.mxu0 0.0
    %3711 = vmatprep.subr.mxu0 0.0
    %3712 = vmatpush1.msra.mxu0 0.0
    %3713 = vmatprep.subr.mxu0 0.0
    %3714 = vmatpush1.msra.mxu0 0.0
    %3715 = vmatprep.subr.mxu0 0.0
    %3716 = vmatpush1.msra.mxu0 0.0
    %3717 = vmatprep.subr.mxu0 0.0
    %3718 = vmatpush1.msra.mxu0 0.0
    %3719 = vmatprep.subr.mxu0 0.0
    %3720 = vmatpush1.msra.mxu0 0.0
    %3721 = vmatprep.subr.mxu0 0.0
    %3722 = vmatpush1.msra.mxu0 0.0
    %3723 = vmatprep.subr.mxu0 0.0
    %3724 = vmatpush1.msra.mxu0 0.0
    %3725 = vmatprep.subr.mxu0 0.0
    %3726 = vmatpush1.msra.mxu0 0.0
    %3727 = vmatprep.subr.mxu0 0.0
    %3728 = vmatpush1.msra.mxu0 0.0
    %3729 = vmatprep.subr.mxu0 0.0
    %3730 = vmatpush1.msra.mxu0 0.0
    %3731 = vmatprep.subr.mxu0 0.0
    %3732 = vmatpush1.msra.mxu0 0.0
    %3733 = vmatprep.subr.mxu0 0.0
    %3734 = vmatpush1.msra.mxu0 0.0
    %3735 = vmatprep.subr.mxu0 0.0
    %3736 = vmatpush1.msra.mxu0 0.0
    %3737 = vmatprep.subr.mxu0 0.0
    %3738 = vmatpush1.msra.mxu0 0.0
    %3739 = vmatprep.mubr.f32.mxu0 0.0
    %3740 = vmatmul.mubr.f32.gmra.mrb[0].mxu0 %v3670
    %v3741 = vpop.f32.mrb[0].mxu0
    %v3742 = vadd.f32 %v3667, %v3741
    %v3743 = vpop.f32.mrb[0].mxu0
    %3744 = vmatprep.mubr.f32.mxu0 0.0
    %3745 = vmatmul.mubr.f32.gmra.mrb[0].mxu0 %v3673
    %v3746 = vpop.f32.mrb[0].mxu0
    %v3747 = vadd.f32 %v3667, %v3746
    %v3748 = vpop.f32.mrb[0].mxu0
    %3749 = vdwg.mxu0
    %v3750 = vadd.f32 %v2178, %v3742
    %v3751 = vadd.f32 %v2179, %v3747
    %v3752 = vsel %vm387, %v3750, 0.0
    %3753 = vadd.xlane.f32.xlu0 %v3752
    %v3754 = vpop.xlane.xlu0 %3753
    %v3755 = vsel %vm387, %v3751, 0.0
    %3756 = vadd.xlane.f32.xlu0 %v3755
    %v3757 = vpop.xlane.xlu0 %3756
    %v3758 = vmul.f32 %v3754, %v1922
    %v3759 = vmul.f32 %v3757, %v1922
    %v3760 = vsub.f32 %v3750, %v3758
    %v3761 = vsub.f32 %v3751, %v3759
    %v3762 = vmul.f32 %v3760, %v3760
    %v3763 = vmul.f32 %v3761, %v3761
    %v3764 = vsel %vm387, %v3762, 0.0
    %3765 = vadd.xlane.f32.xlu0 %v3764
    %v3766 = vpop.xlane.xlu0 %3765
    %v3767 = vsel %vm387, %v3763, 0.0
    %3768 = vadd.xlane.f32.xlu0 %v3767
    %v3769 = vpop.xlane.xlu0 %3768
    %v3770 = vmul.f32 %v3766, %v1922
    %v3771 = vmul.f32 %v3769, %v1922
    %v3772 = vadd.f32 %v3770, 1e-05
    %v3773 = vadd.f32 %v3771, 1e-05
    %v3774 = vrsqrt.pop %v3772
    %v3775 = vrsqrt.pop %v3773
    %v3776 = vmul.f32 %v3760, %v3774
    %v3777 = vmul.f32 %v3761, %v3775
    %v3779 = vlaneseq
    %v3780 = vshrl.u32 %v3779, 7
    %v3781 = vsub.s32 0, %v3780
    %v3782 = vrot.slane %v2195, %v3781
    %v3784 = vmul.f32 %v3776, %v3782
    %v3785 = vmul.f32 %v3777, %v3782
    %v3787 = vlaneseq
    %v3788 = vshrl.u32 %v3787, 7
    %v3789 = vsub.s32 0, %v3788
    %v3790 = vrot.slane %v2197, %v3789
    %v3792 = vadd.f32 %v3784, %v3790
    %v3793 = vadd.f32 %v3785, %v3790
    %v3795 = vlaneseq
    %v3796 = vshrl.u32 %v3795, 7
    %v3797 = vsub.s32 0, %v3796
    %v3798 = vrot.slane %v2204, %v3797
    %v3801 = vsel %vm387, %v3792, 0
    %v3804 = vsel %vm387, %v3793, 0
    %3806 = vmatprep.subr.mxu0 0.0
    %3807 = vmatpush1.msra.mxu0 %v2199
    %3808 = vmatprep.subr.mxu0 0.0
    %3809 = vmatpush1.msra.mxu0 %v2200
    %3810 = vmatprep.subr.mxu0 0.0
    %3811 = vmatpush1.msra.mxu0 %v2201
    %3812 = vmatprep.subr.mxu0 0.0
    %3813 = vmatpush1.msra.mxu0 %v2202
    %3814 = vmatprep.subr.mxu0 0.0
    %3815 = vmatpush1.msra.mxu0 0.0
    %3816 = vmatprep.subr.mxu0 0.0
    %3817 = vmatpush1.msra.mxu0 0.0
    %3818 = vmatprep.subr.mxu0 0.0
    %3819 = vmatpush1.msra.mxu0 0.0
    %3820 = vmatprep.subr.mxu0 0.0
    %3821 = vmatpush1.msra.mxu0 0.0
    %3822 = vmatprep.subr.mxu0 0.0
    %3823 = vmatpush1.msra.mxu0 0.0
    %3824 = vmatprep.subr.mxu0 0.0
    %3825 = vmatpush1.msra.mxu0 0.0
    %3826 = vmatprep.subr.mxu0 0.0
    %3827 = vmatpush1.msra.mxu0 0.0
    %3828 = vmatprep.subr.mxu0 0.0
    %3829 = vmatpush1.msra.mxu0 0.0
    %3830 = vmatprep.subr.mxu0 0.0
    %3831 = vmatpush1.msra.mxu0 0.0
    %3832 = vmatprep.subr.mxu0 0.0
    %3833 = vmatpush1.msra.mxu0 0.0
    %3834 = vmatprep.subr.mxu0 0.0
    %3835 = vmatpush1.msra.mxu0 0.0
    %3836 = vmatprep.subr.mxu0 0.0
    %3837 = vmatpush1.msra.mxu0 0.0
    %3838 = vmatprep.subr.mxu0 0.0
    %3839 = vmatpush1.msra.mxu0 0.0
    %3840 = vmatprep.subr.mxu0 0.0
    %3841 = vmatpush1.msra.mxu0 0.0
    %3842 = vmatprep.subr.mxu0 0.0
    %3843 = vmatpush1.msra.mxu0 0.0
    %3844 = vmatprep.subr.mxu0 0.0
    %3845 = vmatpush1.msra.mxu0 0.0
    %3846 = vmatprep.subr.mxu0 0.0
    %3847 = vmatpush1.msra.mxu0 0.0
    %3848 = vmatprep.subr.mxu0 0.0
    %3849 = vmatpush1.msra.mxu0 0.0
    %3850 = vmatprep.subr.mxu0 0.0
    %3851 = vmatpush1.msra.mxu0 0.0
    %3852 = vmatprep.subr.mxu0 0.0
    %3853 = vmatpush1.msra.mxu0 0.0
    %3854 = vmatprep.subr.mxu0 0.0
    %3855 = vmatpush1.msra.mxu0 0.0
    %3856 = vmatprep.subr.mxu0 0.0
    %3857 = vmatpush1.msra.mxu0 0.0
    %3858 = vmatprep.subr.mxu0 0.0
    %3859 = vmatpush1.msra.mxu0 0.0
    %3860 = vmatprep.subr.mxu0 0.0
    %3861 = vmatpush1.msra.mxu0 0.0
    %3862 = vmatprep.subr.mxu0 0.0
    %3863 = vmatpush1.msra.mxu0 0.0
    %3864 = vmatprep.subr.mxu0 0.0
    %3865 = vmatpush1.msra.mxu0 0.0
    %3866 = vmatprep.subr.mxu0 0.0
    %3867 = vmatpush1.msra.mxu0 0.0
    %3868 = vmatprep.subr.mxu0 0.0
    %3869 = vmatpush1.msra.mxu0 0.0
    %3870 = vmatprep.mubr.f32.mxu0 0.0
    %3871 = vmatmul.mubr.f32.gmra.mrb[0].mxu0 %v3801
    %v3872 = vpop.f32.mrb[0].mxu0
    %v3873 = vadd.f32 %v3798, %v3872
    %v3874 = vpop.f32.mrb[0].mxu0
    %3875 = vmatprep.mubr.f32.mxu0 0.0
    %3876 = vmatmul.mubr.f32.gmra.mrb[0].mxu0 %v3804
    %v3877 = vpop.f32.mrb[0].mxu0
    %v3878 = vadd.f32 %v3798, %v3877
    %v3879 = vpop.f32.mrb[0].mxu0
    %3880 = vdwg.mxu0
    %v3881 = vmax.f32 %v3873, 0.0
    %v3882 = vmax.f32 %v3878, 0.0
    %v3884 = vlaneseq
    %v3885 = vshrl.u32 %v3884, 7
    %v3886 = vsub.s32 0, %v3885
    %v3887 = vrot.slane %v2215, %v3886
    %v3890 = vsel %vm2054, %v3881, 0
    %v3893 = vsel %vm2054, %v3882, 0
    %3895 = vmatprep.subr.mxu0 0.0
    %3896 = vmatpush1.msra.mxu0 %v2206
    %3897 = vmatprep.subr.mxu0 0.0
    %3898 = vmatpush1.msra.mxu0 %v2207
    %3899 = vmatprep.subr.mxu0 0.0
    %3900 = vmatpush1.msra.mxu0 %v2208
    %3901 = vmatprep.subr.mxu0 0.0
    %3902 = vmatpush1.msra.mxu0 %v2209
    %3903 = vmatprep.subr.mxu0 0.0
    %3904 = vmatpush1.msra.mxu0 %v2210
    %3905 = vmatprep.subr.mxu0 0.0
    %3906 = vmatpush1.msra.mxu0 %v2211
    %3907 = vmatprep.subr.mxu0 0.0
    %3908 = vmatpush1.msra.mxu0 %v2212
    %3909 = vmatprep.subr.mxu0 0.0
    %3910 = vmatpush1.msra.mxu0 %v2213
    %3911 = vmatprep.subr.mxu0 0.0
    %3912 = vmatpush1.msra.mxu0 0.0
    %3913 = vmatprep.subr.mxu0 0.0
    %3914 = vmatpush1.msra.mxu0 0.0
    %3915 = vmatprep.subr.mxu0 0.0
    %3916 = vmatpush1.msra.mxu0 0.0
    %3917 = vmatprep.subr.mxu0 0.0
    %3918 = vmatpush1.msra.mxu0 0.0
    %3919 = vmatprep.subr.mxu0 0.0
    %3920 = vmatpush1.msra.mxu0 0.0
    %3921 = vmatprep.subr.mxu0 0.0
    %3922 = vmatpush1.msra.mxu0 0.0
    %3923 = vmatprep.subr.mxu0 0.0
    %3924 = vmatpush1.msra.mxu0 0.0
    %3925 = vmatprep.subr.mxu0 0.0
    %3926 = vmatpush1.msra.mxu0 0.0
    %3927 = vmatprep.subr.mxu0 0.0
    %3928 = vmatpush1.msra.mxu0 0.0
    %3929 = vmatprep.subr.mxu0 0.0
    %3930 = vmatpush1.msra.mxu0 0.0
    %3931 = vmatprep.subr.mxu0 0.0
    %3932 = vmatpush1.msra.mxu0 0.0
    %3933 = vmatprep.subr.mxu0 0.0
    %3934 = vmatpush1.msra.mxu0 0.0
    %3935 = vmatprep.subr.mxu0 0.0
    %3936 = vmatpush1.msra.mxu0 0.0
    %3937 = vmatprep.subr.mxu0 0.0
    %3938 = vmatpush1.msra.mxu0 0.0
    %3939 = vmatprep.subr.mxu0 0.0
    %3940 = vmatpush1.msra.mxu0 0.0
    %3941 = vmatprep.subr.mxu0 0.0
    %3942 = vmatpush1.msra.mxu0 0.0
    %3943 = vmatprep.subr.mxu0 0.0
    %3944 = vmatpush1.msra.mxu0 0.0
    %3945 = vmatprep.subr.mxu0 0.0
    %3946 = vmatpush1.msra.mxu0 0.0
    %3947 = vmatprep.subr.mxu0 0.0
    %3948 = vmatpush1.msra.mxu0 0.0
    %3949 = vmatprep.subr.mxu0 0.0
    %3950 = vmatpush1.msra.mxu0 0.0
    %3951 = vmatprep.subr.mxu0 0.0
    %3952 = vmatpush1.msra.mxu0 0.0
    %3953 = vmatprep.subr.mxu0 0.0
    %3954 = vmatpush1.msra.mxu0 0.0
    %3955 = vmatprep.subr.mxu0 0.0
    %3956 = vmatpush1.msra.mxu0 0.0
    %3957 = vmatprep.subr.mxu0 0.0
    %3958 = vmatpush1.msra.mxu0 0.0
    %3959 = vmatprep.mubr.f32.mxu0 0.0
    %3960 = vmatmul.mubr.f32.gmra.mrb[0].mxu0 %v3890
    %v3961 = vpop.f32.mrb[0].mxu0
    %v3962 = vadd.f32 %v3887, %v3961
    %v3963 = vpop.f32.mrb[0].mxu0
    %3964 = vmatprep.mubr.f32.mxu0 0.0
    %3965 = vmatmul.mubr.f32.gmra.mrb[0].mxu0 %v3893
    %v3966 = vpop.f32.mrb[0].mxu0
    %v3967 = vadd.f32 %v3887, %v3966
    %v3968 = vpop.f32.mrb[0].mxu0
    %3969 = vdwg.mxu0
    %v3970 = vadd.f32 %v3792, %v3962
    %v3971 = vadd.f32 %v3793, %v3967
    %v3972 = vsel %vm387, %v3970, 0.0
    %3973 = vadd.xlane.f32.xlu0 %v3972
    %v3974 = vpop.xlane.xlu0 %3973
    %v3975 = vsel %vm387, %v3971, 0.0
    %3976 = vadd.xlane.f32.xlu0 %v3975
    %v3977 = vpop.xlane.xlu0 %3976
    %v3978 = vmul.f32 %v3974, %v1922
    %v3979 = vmul.f32 %v3977, %v1922
    %v3980 = vsub.f32 %v3970, %v3978
    %v3981 = vsub.f32 %v3971, %v3979
    %v3982 = vmul.f32 %v3980, %v3980
    %v3983 = vmul.f32 %v3981, %v3981
    %v3984 = vsel %vm387, %v3982, 0.0
    %3985 = vadd.xlane.f32.xlu0 %v3984
    %v3986 = vpop.xlane.xlu0 %3985
    %v3987 = vsel %vm387, %v3983, 0.0
    %3988 = vadd.xlane.f32.xlu0 %v3987
    %v3989 = vpop.xlane.xlu0 %3988
    %v3990 = vmul.f32 %v3986, %v1922
    %v3991 = vmul.f32 %v3989, %v1922
    %v3992 = vadd.f32 %v3990, 1e-05
    %v3993 = vadd.f32 %v3991, 1e-05
    %v3994 = vrsqrt.pop %v3992
    %v3995 = vrsqrt.pop %v3993
    %v3996 = vmul.f32 %v3980, %v3994
    %v3997 = vmul.f32 %v3981, %v3995
    %v3999 = vlaneseq
    %v4000 = vshrl.u32 %v3999, 7
    %v4001 = vsub.s32 0, %v4000
    %v4002 = vrot.slane %v2217, %v4001
    %v4004 = vmul.f32 %v3996, %v4002
    %v4005 = vmul.f32 %v3997, %v4002
    %v4007 = vlaneseq
    %v4008 = vshrl.u32 %v4007, 7
    %v4009 = vsub.s32 0, %v4008
    %v4010 = vrot.slane %v2219, %v4009
    %v4012 = vadd.f32 %v4004, %v4010
    %v4013 = vadd.f32 %v4005, %v4010
    %v4014 = vsel %vm387, %v4012, 0.0
    %v4015 = vrot.slane %v4014, 4
    %v4016 = vadd.f32 %v4014, %v4015
    %v4017 = vrot.slane %v4016, 2
    %v4018 = vadd.f32 %v4016, %v4017
    %v4019 = vrot.slane %v4018, 1
    %v4020 = vadd.f32 %v4018, %v4019
    %v4021 = vsel %vm387, %v4013, 0.0
    %v4022 = vrot.slane %v4021, 4
    %v4023 = vadd.f32 %v4021, %v4022
    %v4024 = vrot.slane %v4023, 2
    %v4025 = vadd.f32 %v4023, %v4024
    %v4026 = vrot.slane %v4025, 1
    %v4027 = vadd.f32 %v4025, %v4026
    %v4028 = vrcp.pop 8.0
    %v4029 = vmul.f32 %v4020, %v4028
    %v4030 = vmul.f32 %v4027, %v4028
    %v4031 = vld [vmem:[%s16] sm:$0xff]
    %v4032 = vld [vmem:[%s16 + $0x8] sm:$0xff]
    %v4033 = vld [vmem:[%s16 + $0x10] sm:$0xff]
    %v4034 = vld [vmem:[%s16 + $0x18] sm:$0xff]
    %v4035 = vld [vmem:[#allocation22] sm:$0x1]
    %v4037 = vlaneseq
    %v4038 = vshrl.u32 %v4037, 7
    %v4039 = vsub.s32 0, %v4038
    %v4040 = vrot.slane %v4035, %v4039
    %vm4044 = vcmask 1041409
    %v4045 = vsel %vm4044, %v4030, %v4029
    %v4046 = vsel %vm387, %v4045, 0
    %4048 = vmatprep.subr.mxu0 0.0
    %4049 = vmatpush1.msra.mxu0 %v4031
    %4050 = vmatprep.subr.mxu0 0.0
    %4051 = vmatpush1.msra.mxu0 %v4032
    %4052 = vmatprep.subr.mxu0 0.0
    %4053 = vmatpush1.msra.mxu0 %v4033
    %4054 = vmatprep.subr.mxu0 0.0
    %4055 = vmatpush1.msra.mxu0 %v4034
    %4056 = vmatprep.subr.mxu0 0.0
    %4057 = vmatpush1.msra.mxu0 0.0
    %4058 = vmatprep.subr.mxu0 0.0
    %4059 = vmatpush1.msra.mxu0 0.0
    %4060 = vmatprep.subr.mxu0 0.0
    %4061 = vmatpush1.msra.mxu0 0.0
    %4062 = vmatprep.subr.mxu0 0.0
    %4063 = vmatpush1.msra.mxu0 0.0
    %4064 = vmatprep.subr.mxu0 0.0
    %4065 = vmatpush1.msra.mxu0 0.0
    %4066 = vmatprep.subr.mxu0 0.0
    %4067 = vmatpush1.msra.mxu0 0.0
    %4068 = vmatprep.subr.mxu0 0.0
    %4069 = vmatpush1.msra.mxu0 0.0
    %4070 = vmatprep.subr.mxu0 0.0
    %4071 = vmatpush1.msra.mxu0 0.0
    %4072 = vmatprep.subr.mxu0 0.0
    %4073 = vmatpush1.msra.mxu0 0.0
    %4074 = vmatprep.subr.mxu0 0.0
    %4075 = vmatpush1.msra.mxu0 0.0
    %4076 = vmatprep.subr.mxu0 0.0
    %4077 = vmatpush1.msra.mxu0 0.0
    %4078 = vmatprep.subr.mxu0 0.0
    %4079 = vmatpush1.msra.mxu0 0.0
    %4080 = vmatprep.subr.mxu0 0.0
    %4081 = vmatpush1.msra.mxu0 0.0
    %4082 = vmatprep.subr.mxu0 0.0
    %4083 = vmatpush1.msra.mxu0 0.0
    %4084 = vmatprep.subr.mxu0 0.0
    %4085 = vmatpush1.msra.mxu0 0.0
    %4086 = vmatprep.subr.mxu0 0.0
    %4087 = vmatpush1.msra.mxu0 0.0
    %4088 = vmatprep.subr.mxu0 0.0
    %4089 = vmatpush1.msra.mxu0 0.0
    %4090 = vmatprep.subr.mxu0 0.0
    %4091 = vmatpush1.msra.mxu0 0.0
    %4092 = vmatprep.subr.mxu0 0.0
    %4093 = vmatpush1.msra.mxu0 0.0
    %4094 = vmatprep.subr.mxu0 0.0
    %4095 = vmatpush1.msra.mxu0 0.0
    %4096 = vmatprep.subr.mxu0 0.0
    %4097 = vmatpush1.msra.mxu0 0.0
    %4098 = vmatprep.subr.mxu0 0.0
    %4099 = vmatpush1.msra.mxu0 0.0
    %4100 = vmatprep.subr.mxu0 0.0
    %4101 = vmatpush1.msra.mxu0 0.0
    %4102 = vmatprep.subr.mxu0 0.0
    %4103 = vmatpush1.msra.mxu0 0.0
    %4104 = vmatprep.subr.mxu0 0.0
    %4105 = vmatpush1.msra.mxu0 0.0
    %4106 = vmatprep.subr.mxu0 0.0
    %4107 = vmatpush1.msra.mxu0 0.0
    %4108 = vmatprep.subr.mxu0 0.0
    %4109 = vmatpush1.msra.mxu0 0.0
    %4110 = vmatprep.subr.mxu0 0.0
    %4111 = vmatpush1.msra.mxu0 0.0
    %4112 = vmatprep.mubr.f32.mxu0 0.0
    %4113 = vmatmul.mubr.f32.gmra.mrb[0].mxu0 %v4046
    %v4114 = vpop.f32.mrb[0].mxu0
    %v4115 = vadd.f32 %v4040, %v4114
    %v4116 = vpop.f32.mrb[0].mxu0
    %4117 = vdwg.mxu0
    %v4118 = vld [vmem:[%s18] sm:$0x1]
    %v4119 = vld [vmem:[%s19] sm:$0x1]
    %vm4120 = vcmask 254976
    %v4121 = vsel %vm4120, %v4115, 0.0
    %4122 = vadd.xlane.f32.xlu0 %v4121
    %v4123 = vpop.xlane.xlu0 %4122
    %v4124 = vmul.f32 %v4123, %v1922
    %v4125 = vsub.f32 %v4115, %v4124
    %v4126 = vmul.f32 %v4125, %v4125
    %v4127 = vsel %vm4120, %v4126, 0.0
    %4128 = vadd.xlane.f32.xlu0 %v4127
    %v4129 = vpop.xlane.xlu0 %4128
    %v4130 = vmul.f32 %v4129, %v1922
    %v4131 = vadd.f32 %v4130, 1e-05
    %v4132 = vrsqrt.pop %v4131
    %v4133 = vmul.f32 %v4125, %v4132
    %v4135 = vlaneseq
    %v4136 = vshrl.u32 %v4135, 7
    %v4137 = vsub.s32 0, %v4136
    %v4138 = vrot.slane %v4118, %v4137
    %v4140 = vmul.f32 %v4133, %v4138
    %v4142 = vlaneseq
    %v4143 = vshrl.u32 %v4142, 7
    %v4144 = vsub.s32 0, %v4143
    %v4145 = vrot.slane %v4119, %v4144
    %v4147 = vadd.f32 %v4140, %v4145
    %v4148 = vmax.f32 %v4147, 0.0
    %v4149 = vld [vmem:[%s20] sm:$0xff]
    %v4150 = vld [vmem:[%s20 + $0x8] sm:$0xff]
    %v4151 = vld [vmem:[%s20 + $0x10] sm:$0xff]
    %v4152 = vld [vmem:[%s20 + $0x18] sm:$0xff]
    %v4153 = vld [vmem:[%s21] sm:$0x1]
    %v4155 = vlaneseq
    %v4156 = vshrl.u32 %v4155, 7
    %v4157 = vsub.s32 0, %v4156
    %v4158 = vrot.slane %v4153, %v4157
    %v4161 = vsel %vm387, %v4148, 0
    %4163 = vmatprep.subr.mxu0 0.0
    %4164 = vmatpush1.msra.mxu0 %v4149
    %4165 = vmatprep.subr.mxu0 0.0
    %4166 = vmatpush1.msra.mxu0 %v4150
    %4167 = vmatprep.subr.mxu0 0.0
    %4168 = vmatpush1.msra.mxu0 %v4151
    %4169 = vmatprep.subr.mxu0 0.0
    %4170 = vmatpush1.msra.mxu0 %v4152
    %4171 = vmatprep.subr.mxu0 0.0
    %4172 = vmatpush1.msra.mxu0 0.0
    %4173 = vmatprep.subr.mxu0 0.0
    %4174 = vmatpush1.msra.mxu0 0.0
    %4175 = vmatprep.subr.mxu0 0.0
    %4176 = vmatpush1.msra.mxu0 0.0
    %4177 = vmatprep.subr.mxu0 0.0
    %4178 = vmatpush1.msra.mxu0 0.0
    %4179 = vmatprep.subr.mxu0 0.0
    %4180 = vmatpush1.msra.mxu0 0.0
    %4181 = vmatprep.subr.mxu0 0.0
    %4182 = vmatpush1.msra.mxu0 0.0
    %4183 = vmatprep.subr.mxu0 0.0
    %4184 = vmatpush1.msra.mxu0 0.0
    %4185 = vmatprep.subr.mxu0 0.0
    %4186 = vmatpush1.msra.mxu0 0.0
    %4187 = vmatprep.subr.mxu0 0.0
    %4188 = vmatpush1.msra.mxu0 0.0
    %4189 = vmatprep.subr.mxu0 0.0
    %4190 = vmatpush1.msra.mxu0 0.0
    %4191 = vmatprep.subr.mxu0 0.0
    %4192 = vmatpush1.msra.mxu0 0.0
    %4193 = vmatprep.subr.mxu0 0.0
    %4194 = vmatpush1.msra.mxu0 0.0
    %4195 = vmatprep.subr.mxu0 0.0
    %4196 = vmatpush1.msra.mxu0 0.0
    %4197 = vmatprep.subr.mxu0 0.0
    %4198 = vmatpush1.msra.mxu0 0.0
    %4199 = vmatprep.subr.mxu0 0.0
    %4200 = vmatpush1.msra.mxu0 0.0
    %4201 = vmatprep.subr.mxu0 0.0
    %4202 = vmatpush1.msra.mxu0 0.0
    %4203 = vmatprep.subr.mxu0 0.0
    %4204 = vmatpush1.msra.mxu0 0.0
    %4205 = vmatprep.subr.mxu0 0.0
    %4206 = vmatpush1.msra.mxu0 0.0
    %4207 = vmatprep.subr.mxu0 0.0
    %4208 = vmatpush1.msra.mxu0 0.0
    %4209 = vmatprep.subr.mxu0 0.0
    %4210 = vmatpush1.msra.mxu0 0.0
    %4211 = vmatprep.subr.mxu0 0.0
    %4212 = vmatpush1.msra.mxu0 0.0
    %4213 = vmatprep.subr.mxu0 0.0
    %4214 = vmatpush1.msra.mxu0 0.0
    %4215 = vmatprep.subr.mxu0 0.0
    %4216 = vmatpush1.msra.mxu0 0.0
    %4217 = vmatprep.subr.mxu0 0.0
    %4218 = vmatpush1.msra.mxu0 0.0
    %4219 = vmatprep.subr.mxu0 0.0
    %4220 = vmatpush1.msra.mxu0 0.0
    %4221 = vmatprep.subr.mxu0 0.0
    %4222 = vmatpush1.msra.mxu0 0.0
    %4223 = vmatprep.subr.mxu0 0.0
    %4224 = vmatpush1.msra.mxu0 0.0
    %4225 = vmatprep.subr.mxu0 0.0
    %4226 = vmatpush1.msra.mxu0 0.0
    %4227 = vmatprep.mubr.f32.mxu0 0.0
    %4228 = vmatmul.mubr.f32.gmra.mrb[0].mxu0 %v4161
    %v4229 = vpop.f32.mrb[0].mxu0
    %v4230 = vadd.f32 %v4158, %v4229
    %v4231 = vpop.f32.mrb[0].mxu0
    %4232 = vdwg.mxu0
    %vm4233 = vcmask 25600
    %4234 = vst.msk [vmem:[#allocation23] sm:$0x3] %vm4233, %v4230
    // Predicated region
    $region142: #{tpu_custom_call.1} parent=1 // pred_check
      _
    $region143: #{tpu_custom_call.1} parent=1 // pred_check_branch
      %4236 = sbr.rel (0) target = $region145
    $region144: #{tpu_custom_call.1} parent=1 // pred_region
      %s4238 = ssub.s32 32, 32
      %4239 = vsyncadd [#allocation4], %s4238
      %s4241 = sshll.u32 [#allocation23], 4
      %s4242 = int_to_ptr.vmem [resolvable:$true] %s4241
      %4244 = dma.vmem_to_hbm [thread:$0]  %s4242, 32, %s22, [#allocation4]
    $region145: #{tpu_custom_call.1} parent=1 // pred_fallthru
      _
    // Predicated region
    $region146: #{tpu_custom_call.1} parent=1 // pred_check
      _
    $region147: #{tpu_custom_call.1} parent=1 // pred_check_branch
      %4246 = sbr.rel (0) target = $region149
    $region148: #{tpu_custom_call.1} parent=1 // pred_region
      %4247 = dma.done [#allocation4], 32
    $region149: #{tpu_custom_call.1} parent=1 // pred_fallthru
      _
    %4248 = vsyncpa [#allocation3], 1
    %4249 = vsyncpa [#allocation6], 1
    %4250 = vsyncpa [#allocation9], 1
    %4251 = vsyncpa [#allocation12], 1
    %4252 = vsyncpa [#allocation15], 1
    %4253 = vsyncpa [#allocation18], 1
    %4254 = vsyncpa [#allocation21], 1
    %4255 = vsyncpa [#allocation4], 1

</llo_original>
